<compile_context>
chip_gen: v6e
topology: v6e:2x2x1
jax: 0.10.0
libtpu: 0.0.40
codegen_flags: <defaults>
</compile_context>

<pallas_src>
import jax
import jax.numpy as jnp
import numpy as np
from jax import lax
from jax.experimental import pallas as pl
from jax.experimental.pallas import tpu as pltpu


def _round_up(x, m):
    return ((x + m - 1) // m) * m


def _prepare_wide_params(params, H, D, L, Lp):
    """Build fused, gate-major, layer-padded weights/biases.

    Column layout of every (.., 4*Gh) tensor (Gh = Lp*H):
        [ i-gates layers 0..Lp-1 | f-gates ... | g-gates ... | o-gates ... ]
    g-gate columns are pre-scaled by 2 so the kernel can use
    tanh(x) = 2*sigmoid(2x) - 1 with a single full-width sigmoid.
    """
    Gh = Lp * H

    def gate_block(w4h, gi):                       # torch gate order [i|f|g|o]
        blk = w4h[:, gi * H:(gi + 1) * H]
        return blk * 2.0 if gi == 2 else blk

    w_rec = jnp.zeros((Gh, 4 * Gh), jnp.float32)   # recurrent + inter-layer input
    b_all = jnp.zeros((1, 4 * Gh), jnp.float32)    # fused b_ih + b_hh, all layers
    w_ih0 = jnp.zeros((D, 4 * Gh), jnp.float32)    # layer-0 input projection

    for l in range(L):
        w_hh = params["w_hh0_t"] if l == 0 else params["w_hh_r_t"][l - 1]   # (H, 4H)
        b = params["b0"] if l == 0 else params["b_r"][l - 1]                # (1, 4H)
        for gi in range(4):
            c0 = gi * Gh + l * H
            w_rec = w_rec.at[l * H:(l + 1) * H, c0:c0 + H].set(gate_block(w_hh, gi))
            b_all = b_all.at[:, c0:c0 + H].set(gate_block(b, gi))
            if l >= 1:
                w_ih = params["w_ih_r_t"][l - 1]                            # (H, 4H)
                w_rec = w_rec.at[(l - 1) * H:l * H, c0:c0 + H].set(gate_block(w_ih, gi))
            else:
                w_ih0 = w_ih0.at[:, c0:c0 + H].set(gate_block(params["w_ih0_t"], gi))

    return w_ih0.astype(jnp.bfloat16), w_rec.astype(jnp.bfloat16), b_all


def decoder_forward(x, h0, c0, params):
    T, B, D = x.shape
    L, _, H = h0.shape
    Dout = params["w_out_t"].shape[1]          # head width from the head weight
    assert 128 % H == 0 or (L * H) % 128 == 0, "H must tile the 128-lane vreg"
    Lp = _round_up(L * H, 128) // H            # pad layer count so Lp*H is 128-aligned
    Gh = Lp * H
    Bp = max(8, _round_up(B, 8))               # pad batch to a full sublane group
    pad = Bp - B
    S = T + L - 1                              # wavefront step count

    w_ih0_w, w_rec_w, b_all = _prepare_wide_params(params, H, D, L, Lp)

    x_flat = jnp.pad(x, ((0, 0), (0, pad), (0, 0))).reshape(T * Bp, D).astype(jnp.bfloat16)

    def pack(s):                               # (L, B, H) -> lane-concatenated (Bp, Gh)
        s = jnp.pad(s, ((0, Lp - L), (0, pad), (0, 0)))
        return jnp.transpose(s, (1, 0, 2)).reshape(Bp, Gh)

    h0_w, c0_w = pack(h0), pack(c0)

    def kernel(x_ref, h0_ref, c0_ref, w_ih0_ref, w_rec_ref, b_all_ref,
               w_out_ref, b_out_ref, out_ref, hn_ref, cn_ref, xg_ref):
        # Hoisted layer-0 input projection + every layer's fused bias, whole sequence.
        xg_ref[...] = (jnp.dot(x_ref[...], w_ih0_ref[...],
                               preferred_element_type=jnp.float32)
                       + b_all_ref[...])

        lane = lax.broadcasted_iota(jnp.int32, (Bp, Gh), 1)
        h = h0_ref[...]                        # (Bp, Gh) f32 carry, all layers
        c = c0_ref[...]

        # Fully-unrolled wavefront: step s updates layer l at time t = s - l.
        for s in range(S):
            row = min(s, T - 1) * Bp           # static, sublane-aligned
            z = xg_ref[pl.ds(row, Bp), :] + jnp.dot(
                h.astype(jnp.bfloat16), w_rec_ref[...],
                preferred_element_type=jnp.float32)        # (Bp, 4*Gh)
            sg = jax.nn.sigmoid(z)             # single full-width EUP launch
            i_a = sg[:, 0 * Gh:1 * Gh]
            f_a = sg[:, 1 * Gh:2 * Gh]
            g_a = 2.0 * sg[:, 2 * Gh:3 * Gh] - 1.0   # tanh via pre-scaled sigmoid
            o_a = sg[:, 3 * Gh:4 * Gh]
            c_new = f_a * c + i_a * g_a
            h_new = o_a * jnp.tanh(c_new)
            # Layers max(0, s-T+1) .. min(L-1, s) are live at this wavefront step.
            lo = max(0, s - T + 1) * H
            hi = (min(L - 1, s) + 1) * H
            live = (lane >= lo) & (lane < hi)
            h = jnp.where(live, h_new, h)
            c = jnp.where(live, c_new, c)

        hn_ref[...] = h                        # lane-dense (Bp, Gh) slabs
        cn_ref[...] = c
        # Linear head straight off the final carry of the top layer.
        h_top = h[:, (L - 1) * H:L * H]        # (Bp, H), vreg-aligned start
        out_ref[...] = (jnp.dot(h_top, w_out_ref[...],
                                preferred_element_type=jnp.float32)
                        + b_out_ref[...])

    vmem = pl.BlockSpec(memory_space=pltpu.MemorySpace.VMEM)
    args = (x_flat, h0_w, c0_w, w_ih0_w, w_rec_w, b_all,
            params["w_out_t"], params["b_out"])

    # TODO(synk): for B > 8, split batch groups across TensorCores (v7x) with a
    # leading "parallel" grid axis; single invocation is optimal at B=2.
    out_p, hn_w, cn_w = pl.pallas_call(
        kernel,
        out_shape=(
            jax.ShapeDtypeStruct((Bp, Dout), jnp.float32),
            jax.ShapeDtypeStruct((Bp, Gh), jnp.float32),
            jax.ShapeDtypeStruct((Bp, Gh), jnp.float32),
        ),
        in_specs=[vmem] * len(args),
        out_specs=(vmem, vmem, vmem),
        scratch_shapes=[
            pltpu.VMEM((T * Bp, 4 * Gh), jnp.float32),   # hoisted gate pre-activations
        ],
    )(*args)

    hn = hn_w.reshape(Bp, Lp, H).transpose(1, 0, 2)[:L, :B]
    cn = cn_w.reshape(Bp, Lp, H).transpose(1, 0, 2)[:L, :B]
    return out_p[:B][None, :, :], hn, cn


def init_params(key, H, D, L):
    """Deterministic init matching PyTorch's LSTM/Linear shapes (stored transposed)."""
    k = 1.0 / np.sqrt(H)
    keys = jax.random.split(key, 10)
    u = lambda kk, shape, kk_scale=k: jax.random.uniform(
        kk, shape, jnp.float32, -kk_scale, kk_scale)
    return dict(
        w_ih0_t=u(keys[0], (D, 4 * H)),                      # torch (4H,D) transposed
        w_hh0_t=u(keys[1], (H, 4 * H)),
        b0=u(keys[2], (1, 4 * H)) + u(keys[3], (1, 4 * H)),  # b_ih + b_hh
        w_ih_r_t=u(keys[4], (L - 1, H, 4 * H)),
        w_hh_r_t=u(keys[5], (L - 1, H, 4 * H)),
        b_r=u(keys[6], (L - 1, 1, 4 * H)) + u(keys[7], (L - 1, 1, 4 * H)),
        w_out_t=u(keys[8], (H, D)),                          # Linear(H -> dict_size)
        b_out=u(keys[9], (1, D)),
    )


def ref_decoder(x, h0, c0, params):
    """Pure-jnp f32 reference with PyTorch nn.LSTM semantics."""
    T, B, D = x.shape
    L, _, H = h0.shape
    inp = x
    hs, cs = [], []
    for l in range(L):
        w_ih = params["w_ih0_t"] if l == 0 else params["w_ih_r_t"][l - 1]
        w_hh = params["w_hh0_t"] if l == 0 else params["w_hh_r_t"][l - 1]
        b = params["b0"] if l == 0 else params["b_r"][l - 1]
        h, c = h0[l], c0[l]
        outs = []
        for t in range(T):
            gates = inp[t] @ w_ih + h @ w_hh + b
            i_g = jax.nn.sigmoid(gates[:, 0 * H:1 * H])
            f_g = jax.nn.sigmoid(gates[:, 1 * H:2 * H])
            g_g = jnp.tanh(gates[:, 2 * H:3 * H])
            o_g = jax.nn.sigmoid(gates[:, 3 * H:4 * H])
            c = f_g * c + i_g * g_g
            h = o_g * jnp.tanh(c)
            outs.append(h)
        inp = jnp.stack(outs)
        hs.append(h)
        cs.append(c)
    out = inp[-1] @ params["w_out_t"] + params["b_out"]
    return out[None, :, :], jnp.stack(hs), jnp.stack(cs)


if __name__ == "__main__":
    T, B = 8, 2           # seq_len, batch
    H, D = 32, 16         # hidden_sz, dict_size
    L = 5                 # nn.LSTM(..., 5) -> 5 layers (fixed by the module)

    key = jax.random.PRNGKey(0)
    kx, kh, kc, kp = jax.random.split(key, 4)
    x = jax.random.normal(kx, (T, B, D), jnp.float32)
    h0 = jax.random.normal(kh, (L, B, H), jnp.float32)
    c0 = jax.random.normal(kc, (L, B, H), jnp.float32)
    params = init_params(kp, H, D, L)

    out, h_n, c_n = jax.block_until_ready(decoder_forward(x, h0, c0, params))
    r_out, r_hn, r_cn = ref_decoder(x, h0, c0, params)

    assert out.shape == (1, B, D) and h_n.shape == (L, B, H) and c_n.shape == (L, B, H)
    # Tolerances loosened vs. the pure-f32 reference because the MXU operands
    # (weights, h, x) are intentionally bf16 (f32 accumulation kept).
    np.testing.assert_allclose(np.asarray(out), np.asarray(r_out), rtol=5e-2, atol=5e-2)
    np.testing.assert_allclose(np.asarray(h_n), np.asarray(r_hn), rtol=5e-2, atol=5e-2)
    np.testing.assert_allclose(np.asarray(c_n), np.asarray(r_cn), rtol=5e-2, atol=5e-2)
    print("KERNEL_OK")
</pallas_src>

<mosaic_0001>
module attributes {stable_mosaic.version = 11 : i64} {
  func.func @kernel(%arg0: memref<64x16xbf16, #tpu.memory_space<vmem>>, %arg1: memref<8x256xf32, #tpu.memory_space<vmem>>, %arg2: memref<8x256xf32, #tpu.memory_space<vmem>>, %arg3: memref<16x1024xbf16, #tpu.memory_space<vmem>>, %arg4: memref<256x1024xbf16, #tpu.memory_space<vmem>>, %arg5: memref<1x1024xf32, #tpu.memory_space<vmem>>, %arg6: memref<32x16xf32, #tpu.memory_space<vmem>>, %arg7: memref<1x16xf32, #tpu.memory_space<vmem>>, %arg8: memref<8x16xf32, #tpu.memory_space<vmem>>, %arg9: memref<8x256xf32, #tpu.memory_space<vmem>>, %arg10: memref<8x256xf32, #tpu.memory_space<vmem>>, %arg11: memref<64x1024xf32, #tpu.memory_space<vmem>>) attributes {dimension_semantics = [], scalar_prefetch = 0 : i64, scratch_operands = 1 : i64, tpu.core_type = #tpu.core_type<tc>} {
    %c0 = arith.constant 0 : index
    %c0_0 = arith.constant 0 : index
    %0 = vector.load %arg0[%c0, %c0_0] : memref<64x16xbf16, #tpu.memory_space<vmem>>, vector<64x16xbf16>
    %c0_1 = arith.constant 0 : index
    %c0_2 = arith.constant 0 : index
    %1 = vector.load %arg3[%c0_1, %c0_2] : memref<16x1024xbf16, #tpu.memory_space<vmem>>, vector<16x1024xbf16>
    %cst = arith.constant dense<0.000000e+00> : vector<64x1024xf32>
    %2 = tpu.matmul %0, %1, %cst {dimension_numbers = #tpu.dot_dimension_numbers<[1], [0], [0], [1], [0, 0, 1, 1], [], []>} : vector<64x16xbf16>, vector<16x1024xbf16>, vector<64x1024xf32> -> vector<64x1024xf32>
    %c0_3 = arith.constant 0 : index
    %c0_4 = arith.constant 0 : index
    %3 = vector.load %arg5[%c0_3, %c0_4] : memref<1x1024xf32, #tpu.memory_space<vmem>>, vector<1x1024xf32>
    %4 = vector.broadcast %3 : vector<1x1024xf32> to vector<64x1024xf32>
    %5 = arith.addf %2, %4 : vector<64x1024xf32>
    %c0_5 = arith.constant 0 : index
    %c0_6 = arith.constant 0 : index
    %6 = vector.load %arg11[%c0_5, %c0_6] : memref<64x1024xf32, #tpu.memory_space<vmem>>, vector<64x1024xf32>
    tpu.vector_store %arg11[%c0_5, %c0_6], %5 {strides = array<i32>} : memref<64x1024xf32, #tpu.memory_space<vmem>>, vector<64x1024xf32>,
    %7 = tpu.iota {dimensions = array<i32: 1>} : vector<8x256xi32>
    %c0_7 = arith.constant 0 : index
    %c0_8 = arith.constant 0 : index
    %8 = vector.load %arg1[%c0_7, %c0_8] : memref<8x256xf32, #tpu.memory_space<vmem>>, vector<8x256xf32>
    %c0_9 = arith.constant 0 : index
    %c0_10 = arith.constant 0 : index
    %9 = vector.load %arg2[%c0_9, %c0_10] : memref<8x256xf32, #tpu.memory_space<vmem>>, vector<8x256xf32>
    %c0_11 = arith.constant 0 : index
    %c0_12 = arith.constant 0 : index
    %10 = vector.load %arg11[%c0_11, %c0_12] : memref<64x1024xf32, #tpu.memory_space<vmem>>, vector<8x1024xf32>
    %11 = arith.truncf %8 : vector<8x256xf32> to vector<8x256xbf16>
    %c0_13 = arith.constant 0 : index
    %c0_14 = arith.constant 0 : index
    %12 = vector.load %arg4[%c0_13, %c0_14] : memref<256x1024xbf16, #tpu.memory_space<vmem>>, vector<256x1024xbf16>
    %cst_15 = arith.constant dense<0.000000e+00> : vector<8x1024xf32>
    %13 = tpu.matmul %11, %12, %cst_15 {dimension_numbers = #tpu.dot_dimension_numbers<[1], [0], [0], [1], [0, 0, 1, 1], [], []>} : vector<8x256xbf16>, vector<256x1024xbf16>, vector<8x1024xf32> -> vector<8x1024xf32>
    %14 = arith.addf %10, %13 : vector<8x1024xf32>
    %15 = arith.negf %14 : vector<8x1024xf32>
    %16 = math.exp %15 : vector<8x1024xf32>
    %cst_16 = arith.constant 1.000000e+00 : f32
    %17 = vector.broadcast %cst_16 : f32 to vector<8x1024xf32>
    %18 = arith.addf %17, %16 : vector<8x1024xf32>
    %19 = arith.divf %17, %18 : vector<8x1024xf32>
    %20 = vector.extract_strided_slice %19 {offsets = [0, 0], sizes = [8, 256], strides = [1, 1]} : vector<8x1024xf32> to vector<8x256xf32>
    %21 = vector.extract_strided_slice %19 {offsets = [0, 256], sizes = [8, 256], strides = [1, 1]} : vector<8x1024xf32> to vector<8x256xf32>
    %22 = vector.extract_strided_slice %19 {offsets = [0, 512], sizes = [8, 256], strides = [1, 1]} : vector<8x1024xf32> to vector<8x256xf32>
    %cst_17 = arith.constant 2.000000e+00 : f32
    %23 = vector.broadcast %cst_17 : f32 to vector<8x256xf32>
    %24 = arith.mulf %23, %22 : vector<8x256xf32>
    %cst_18 = arith.constant 1.000000e+00 : f32
    %25 = vector.broadcast %cst_18 : f32 to vector<8x256xf32>
    %26 = arith.subf %24, %25 : vector<8x256xf32>
    %27 = vector.extract_strided_slice %19 {offsets = [0, 768], sizes = [8, 256], strides = [1, 1]} : vector<8x1024xf32> to vector<8x256xf32>
    %28 = arith.mulf %21, %9 : vector<8x256xf32>
    %29 = arith.mulf %20, %26 : vector<8x256xf32>
    %30 = arith.addf %28, %29 : vector<8x256xf32>
    %31 = math.tanh %30 : vector<8x256xf32>
    %32 = arith.mulf %27, %31 : vector<8x256xf32>
    %c0_i32 = arith.constant 0 : i32
    %33 = vector.broadcast %c0_i32 : i32 to vector<8x256xi32>
    %34 = arith.cmpi sge, %7, %33 : vector<8x256xi32>
    %c32_i32 = arith.constant 32 : i32
    %35 = vector.broadcast %c32_i32 : i32 to vector<8x256xi32>
    %36 = arith.cmpi slt, %7, %35 : vector<8x256xi32>
    %37 = arith.andi %34, %36 : vector<8x256xi1>
    %38 = arith.select %37, %32, %8 : vector<8x256xi1>, vector<8x256xf32>
    %39 = arith.select %37, %30, %9 : vector<8x256xi1>, vector<8x256xf32>
    %c8 = arith.constant 8 : index
    %c0_19 = arith.constant 0 : index
    %40 = vector.load %arg11[%c8, %c0_19] : memref<64x1024xf32, #tpu.memory_space<vmem>>, vector<8x1024xf32>
    %41 = arith.truncf %38 : vector<8x256xf32> to vector<8x256xbf16>
    %c0_20 = arith.constant 0 : index
    %c0_21 = arith.constant 0 : index
    %42 = vector.load %arg4[%c0_20, %c0_21] : memref<256x1024xbf16, #tpu.memory_space<vmem>>, vector<256x1024xbf16>
    %cst_22 = arith.constant dense<0.000000e+00> : vector<8x1024xf32>
    %43 = tpu.matmul %41, %42, %cst_22 {dimension_numbers = #tpu.dot_dimension_numbers<[1], [0], [0], [1], [0, 0, 1, 1], [], []>} : vector<8x256xbf16>, vector<256x1024xbf16>, vector<8x1024xf32> -> vector<8x1024xf32>
    %44 = arith.addf %40, %43 : vector<8x1024xf32>
    %45 = arith.negf %44 : vector<8x1024xf32>
    %46 = math.exp %45 : vector<8x1024xf32>
    %cst_23 = arith.constant 1.000000e+00 : f32
    %47 = vector.broadcast %cst_23 : f32 to vector<8x1024xf32>
    %48 = arith.addf %47, %46 : vector<8x1024xf32>
    %49 = arith.divf %47, %48 : vector<8x1024xf32>
    %50 = vector.extract_strided_slice %49 {offsets = [0, 0], sizes = [8, 256], strides = [1, 1]} : vector<8x1024xf32> to vector<8x256xf32>
    %51 = vector.extract_strided_slice %49 {offsets = [0, 256], sizes = [8, 256], strides = [1, 1]} : vector<8x1024xf32> to vector<8x256xf32>
    %52 = vector.extract_strided_slice %49 {offsets = [0, 512], sizes = [8, 256], strides = [1, 1]} : vector<8x1024xf32> to vector<8x256xf32>
    %cst_24 = arith.constant 2.000000e+00 : f32
    %53 = vector.broadcast %cst_24 : f32 to vector<8x256xf32>
    %54 = arith.mulf %53, %52 : vector<8x256xf32>
    %cst_25 = arith.constant 1.000000e+00 : f32
    %55 = vector.broadcast %cst_25 : f32 to vector<8x256xf32>
    %56 = arith.subf %54, %55 : vector<8x256xf32>
    %57 = vector.extract_strided_slice %49 {offsets = [0, 768], sizes = [8, 256], strides = [1, 1]} : vector<8x1024xf32> to vector<8x256xf32>
    %58 = arith.mulf %51, %39 : vector<8x256xf32>
    %59 = arith.mulf %50, %56 : vector<8x256xf32>
    %60 = arith.addf %58, %59 : vector<8x256xf32>
    %61 = math.tanh %60 : vector<8x256xf32>
    %62 = arith.mulf %57, %61 : vector<8x256xf32>
    %c0_i32_26 = arith.constant 0 : i32
    %63 = vector.broadcast %c0_i32_26 : i32 to vector<8x256xi32>
    %64 = arith.cmpi sge, %7, %63 : vector<8x256xi32>
    %c64_i32 = arith.constant 64 : i32
    %65 = vector.broadcast %c64_i32 : i32 to vector<8x256xi32>
    %66 = arith.cmpi slt, %7, %65 : vector<8x256xi32>
    %67 = arith.andi %64, %66 : vector<8x256xi1>
    %68 = arith.select %67, %62, %38 : vector<8x256xi1>, vector<8x256xf32>
    %69 = arith.select %67, %60, %39 : vector<8x256xi1>, vector<8x256xf32>
    %c16 = arith.constant 16 : index
    %c0_27 = arith.constant 0 : index
    %70 = vector.load %arg11[%c16, %c0_27] : memref<64x1024xf32, #tpu.memory_space<vmem>>, vector<8x1024xf32>
    %71 = arith.truncf %68 : vector<8x256xf32> to vector<8x256xbf16>
    %c0_28 = arith.constant 0 : index
    %c0_29 = arith.constant 0 : index
    %72 = vector.load %arg4[%c0_28, %c0_29] : memref<256x1024xbf16, #tpu.memory_space<vmem>>, vector<256x1024xbf16>
    %cst_30 = arith.constant dense<0.000000e+00> : vector<8x1024xf32>
    %73 = tpu.matmul %71, %72, %cst_30 {dimension_numbers = #tpu.dot_dimension_numbers<[1], [0], [0], [1], [0, 0, 1, 1], [], []>} : vector<8x256xbf16>, vector<256x1024xbf16>, vector<8x1024xf32> -> vector<8x1024xf32>
    %74 = arith.addf %70, %73 : vector<8x1024xf32>
    %75 = arith.negf %74 : vector<8x1024xf32>
    %76 = math.exp %75 : vector<8x1024xf32>
    %cst_31 = arith.constant 1.000000e+00 : f32
    %77 = vector.broadcast %cst_31 : f32 to vector<8x1024xf32>
    %78 = arith.addf %77, %76 : vector<8x1024xf32>
    %79 = arith.divf %77, %78 : vector<8x1024xf32>
    %80 = vector.extract_strided_slice %79 {offsets = [0, 0], sizes = [8, 256], strides = [1, 1]} : vector<8x1024xf32> to vector<8x256xf32>
    %81 = vector.extract_strided_slice %79 {offsets = [0, 256], sizes = [8, 256], strides = [1, 1]} : vector<8x1024xf32> to vector<8x256xf32>
    %82 = vector.extract_strided_slice %79 {offsets = [0, 512], sizes = [8, 256], strides = [1, 1]} : vector<8x1024xf32> to vector<8x256xf32>
    %cst_32 = arith.constant 2.000000e+00 : f32
    %83 = vector.broadcast %cst_32 : f32 to vector<8x256xf32>
    %84 = arith.mulf %83, %82 : vector<8x256xf32>
    %cst_33 = arith.constant 1.000000e+00 : f32
    %85 = vector.broadcast %cst_33 : f32 to vector<8x256xf32>
    %86 = arith.subf %84, %85 : vector<8x256xf32>
    %87 = vector.extract_strided_slice %79 {offsets = [0, 768], sizes = [8, 256], strides = [1, 1]} : vector<8x1024xf32> to vector<8x256xf32>
    %88 = arith.mulf %81, %69 : vector<8x256xf32>
    %89 = arith.mulf %80, %86 : vector<8x256xf32>
    %90 = arith.addf %88, %89 : vector<8x256xf32>
    %91 = math.tanh %90 : vector<8x256xf32>
    %92 = arith.mulf %87, %91 : vector<8x256xf32>
    %c0_i32_34 = arith.constant 0 : i32
    %93 = vector.broadcast %c0_i32_34 : i32 to vector<8x256xi32>
    %94 = arith.cmpi sge, %7, %93 : vector<8x256xi32>
    %c96_i32 = arith.constant 96 : i32
    %95 = vector.broadcast %c96_i32 : i32 to vector<8x256xi32>
    %96 = arith.cmpi slt, %7, %95 : vector<8x256xi32>
    %97 = arith.andi %94, %96 : vector<8x256xi1>
    %98 = arith.select %97, %92, %68 : vector<8x256xi1>, vector<8x256xf32>
    %99 = arith.select %97, %90, %69 : vector<8x256xi1>, vector<8x256xf32>
    %c24 = arith.constant 24 : index
    %c0_35 = arith.constant 0 : index
    %100 = vector.load %arg11[%c24, %c0_35] : memref<64x1024xf32, #tpu.memory_space<vmem>>, vector<8x1024xf32>
    %101 = arith.truncf %98 : vector<8x256xf32> to vector<8x256xbf16>
    %c0_36 = arith.constant 0 : index
    %c0_37 = arith.constant 0 : index
    %102 = vector.load %arg4[%c0_36, %c0_37] : memref<256x1024xbf16, #tpu.memory_space<vmem>>, vector<256x1024xbf16>
    %cst_38 = arith.constant dense<0.000000e+00> : vector<8x1024xf32>
    %103 = tpu.matmul %101, %102, %cst_38 {dimension_numbers = #tpu.dot_dimension_numbers<[1], [0], [0], [1], [0, 0, 1, 1], [], []>} : vector<8x256xbf16>, vector<256x1024xbf16>, vector<8x1024xf32> -> vector<8x1024xf32>
    %104 = arith.addf %100, %103 : vector<8x1024xf32>
    %105 = arith.negf %104 : vector<8x1024xf32>
    %106 = math.exp %105 : vector<8x1024xf32>
    %cst_39 = arith.constant 1.000000e+00 : f32
    %107 = vector.broadcast %cst_39 : f32 to vector<8x1024xf32>
    %108 = arith.addf %107, %106 : vector<8x1024xf32>
    %109 = arith.divf %107, %108 : vector<8x1024xf32>
    %110 = vector.extract_strided_slice %109 {offsets = [0, 0], sizes = [8, 256], strides = [1, 1]} : vector<8x1024xf32> to vector<8x256xf32>
    %111 = vector.extract_strided_slice %109 {offsets = [0, 256], sizes = [8, 256], strides = [1, 1]} : vector<8x1024xf32> to vector<8x256xf32>
    %112 = vector.extract_strided_slice %109 {offsets = [0, 512], sizes = [8, 256], strides = [1, 1]} : vector<8x1024xf32> to vector<8x256xf32>
    %cst_40 = arith.constant 2.000000e+00 : f32
    %113 = vector.broadcast %cst_40 : f32 to vector<8x256xf32>
    %114 = arith.mulf %113, %112 : vector<8x256xf32>
    %cst_41 = arith.constant 1.000000e+00 : f32
    %115 = vector.broadcast %cst_41 : f32 to vector<8x256xf32>
    %116 = arith.subf %114, %115 : vector<8x256xf32>
    %117 = vector.extract_strided_slice %109 {offsets = [0, 768], sizes = [8, 256], strides = [1, 1]} : vector<8x1024xf32> to vector<8x256xf32>
    %118 = arith.mulf %111, %99 : vector<8x256xf32>
    %119 = arith.mulf %110, %116 : vector<8x256xf32>
    %120 = arith.addf %118, %119 : vector<8x256xf32>
    %121 = math.tanh %120 : vector<8x256xf32>
    %122 = arith.mulf %117, %121 : vector<8x256xf32>
    %c0_i32_42 = arith.constant 0 : i32
    %123 = vector.broadcast %c0_i32_42 : i32 to vector<8x256xi32>
    %124 = arith.cmpi sge, %7, %123 : vector<8x256xi32>
    %c128_i32 = arith.constant 128 : i32
    %125 = vector.broadcast %c128_i32 : i32 to vector<8x256xi32>
    %126 = arith.cmpi slt, %7, %125 : vector<8x256xi32>
    %127 = arith.andi %124, %126 : vector<8x256xi1>
    %128 = arith.select %127, %122, %98 : vector<8x256xi1>, vector<8x256xf32>
    %129 = arith.select %127, %120, %99 : vector<8x256xi1>, vector<8x256xf32>
    %c32 = arith.constant 32 : index
    %c0_43 = arith.constant 0 : index
    %130 = vector.load %arg11[%c32, %c0_43] : memref<64x1024xf32, #tpu.memory_space<vmem>>, vector<8x1024xf32>
    %131 = arith.truncf %128 : vector<8x256xf32> to vector<8x256xbf16>
    %c0_44 = arith.constant 0 : index
    %c0_45 = arith.constant 0 : index
    %132 = vector.load %arg4[%c0_44, %c0_45] : memref<256x1024xbf16, #tpu.memory_space<vmem>>, vector<256x1024xbf16>
    %cst_46 = arith.constant dense<0.000000e+00> : vector<8x1024xf32>
    %133 = tpu.matmul %131, %132, %cst_46 {dimension_numbers = #tpu.dot_dimension_numbers<[1], [0], [0], [1], [0, 0, 1, 1], [], []>} : vector<8x256xbf16>, vector<256x1024xbf16>, vector<8x1024xf32> -> vector<8x1024xf32>
    %134 = arith.addf %130, %133 : vector<8x1024xf32>
    %135 = arith.negf %134 : vector<8x1024xf32>
    %136 = math.exp %135 : vector<8x1024xf32>
    %cst_47 = arith.constant 1.000000e+00 : f32
    %137 = vector.broadcast %cst_47 : f32 to vector<8x1024xf32>
    %138 = arith.addf %137, %136 : vector<8x1024xf32>
    %139 = arith.divf %137, %138 : vector<8x1024xf32>
    %140 = vector.extract_strided_slice %139 {offsets = [0, 0], sizes = [8, 256], strides = [1, 1]} : vector<8x1024xf32> to vector<8x256xf32>
    %141 = vector.extract_strided_slice %139 {offsets = [0, 256], sizes = [8, 256], strides = [1, 1]} : vector<8x1024xf32> to vector<8x256xf32>
    %142 = vector.extract_strided_slice %139 {offsets = [0, 512], sizes = [8, 256], strides = [1, 1]} : vector<8x1024xf32> to vector<8x256xf32>
    %cst_48 = arith.constant 2.000000e+00 : f32
    %143 = vector.broadcast %cst_48 : f32 to vector<8x256xf32>
    %144 = arith.mulf %143, %142 : vector<8x256xf32>
    %cst_49 = arith.constant 1.000000e+00 : f32
    %145 = vector.broadcast %cst_49 : f32 to vector<8x256xf32>
    %146 = arith.subf %144, %145 : vector<8x256xf32>
    %147 = vector.extract_strided_slice %139 {offsets = [0, 768], sizes = [8, 256], strides = [1, 1]} : vector<8x1024xf32> to vector<8x256xf32>
    %148 = arith.mulf %141, %129 : vector<8x256xf32>
    %149 = arith.mulf %140, %146 : vector<8x256xf32>
    %150 = arith.addf %148, %149 : vector<8x256xf32>
    %151 = math.tanh %150 : vector<8x256xf32>
    %152 = arith.mulf %147, %151 : vector<8x256xf32>
    %c0_i32_50 = arith.constant 0 : i32
    %153 = vector.broadcast %c0_i32_50 : i32 to vector<8x256xi32>
    %154 = arith.cmpi sge, %7, %153 : vector<8x256xi32>
    %c160_i32 = arith.constant 160 : i32
    %155 = vector.broadcast %c160_i32 : i32 to vector<8x256xi32>
    %156 = arith.cmpi slt, %7, %155 : vector<8x256xi32>
    %157 = arith.andi %154, %156 : vector<8x256xi1>
    %158 = arith.select %157, %152, %128 : vector<8x256xi1>, vector<8x256xf32>
    %159 = arith.select %157, %150, %129 : vector<8x256xi1>, vector<8x256xf32>
    %c40 = arith.constant 40 : index
    %c0_51 = arith.constant 0 : index
    %160 = vector.load %arg11[%c40, %c0_51] : memref<64x1024xf32, #tpu.memory_space<vmem>>, vector<8x1024xf32>
    %161 = arith.truncf %158 : vector<8x256xf32> to vector<8x256xbf16>
    %c0_52 = arith.constant 0 : index
    %c0_53 = arith.constant 0 : index
    %162 = vector.load %arg4[%c0_52, %c0_53] : memref<256x1024xbf16, #tpu.memory_space<vmem>>, vector<256x1024xbf16>
    %cst_54 = arith.constant dense<0.000000e+00> : vector<8x1024xf32>
    %163 = tpu.matmul %161, %162, %cst_54 {dimension_numbers = #tpu.dot_dimension_numbers<[1], [0], [0], [1], [0, 0, 1, 1], [], []>} : vector<8x256xbf16>, vector<256x1024xbf16>, vector<8x1024xf32> -> vector<8x1024xf32>
    %164 = arith.addf %160, %163 : vector<8x1024xf32>
    %165 = arith.negf %164 : vector<8x1024xf32>
    %166 = math.exp %165 : vector<8x1024xf32>
    %cst_55 = arith.constant 1.000000e+00 : f32
    %167 = vector.broadcast %cst_55 : f32 to vector<8x1024xf32>
    %168 = arith.addf %167, %166 : vector<8x1024xf32>
    %169 = arith.divf %167, %168 : vector<8x1024xf32>
    %170 = vector.extract_strided_slice %169 {offsets = [0, 0], sizes = [8, 256], strides = [1, 1]} : vector<8x1024xf32> to vector<8x256xf32>
    %171 = vector.extract_strided_slice %169 {offsets = [0, 256], sizes = [8, 256], strides = [1, 1]} : vector<8x1024xf32> to vector<8x256xf32>
    %172 = vector.extract_strided_slice %169 {offsets = [0, 512], sizes = [8, 256], strides = [1, 1]} : vector<8x1024xf32> to vector<8x256xf32>
    %cst_56 = arith.constant 2.000000e+00 : f32
    %173 = vector.broadcast %cst_56 : f32 to vector<8x256xf32>
    %174 = arith.mulf %173, %172 : vector<8x256xf32>
    %cst_57 = arith.constant 1.000000e+00 : f32
    %175 = vector.broadcast %cst_57 : f32 to vector<8x256xf32>
    %176 = arith.subf %174, %175 : vector<8x256xf32>
    %177 = vector.extract_strided_slice %169 {offsets = [0, 768], sizes = [8, 256], strides = [1, 1]} : vector<8x1024xf32> to vector<8x256xf32>
    %178 = arith.mulf %171, %159 : vector<8x256xf32>
    %179 = arith.mulf %170, %176 : vector<8x256xf32>
    %180 = arith.addf %178, %179 : vector<8x256xf32>
    %181 = math.tanh %180 : vector<8x256xf32>
    %182 = arith.mulf %177, %181 : vector<8x256xf32>
    %c0_i32_58 = arith.constant 0 : i32
    %183 = vector.broadcast %c0_i32_58 : i32 to vector<8x256xi32>
    %184 = arith.cmpi sge, %7, %183 : vector<8x256xi32>
    %c160_i32_59 = arith.constant 160 : i32
    %185 = vector.broadcast %c160_i32_59 : i32 to vector<8x256xi32>
    %186 = arith.cmpi slt, %7, %185 : vector<8x256xi32>
    %187 = arith.andi %184, %186 : vector<8x256xi1>
    %188 = arith.select %187, %182, %158 : vector<8x256xi1>, vector<8x256xf32>
    %189 = arith.select %187, %180, %159 : vector<8x256xi1>, vector<8x256xf32>
    %c48 = arith.constant 48 : index
    %c0_60 = arith.constant 0 : index
    %190 = vector.load %arg11[%c48, %c0_60] : memref<64x1024xf32, #tpu.memory_space<vmem>>, vector<8x1024xf32>
    %191 = arith.truncf %188 : vector<8x256xf32> to vector<8x256xbf16>
    %c0_61 = arith.constant 0 : index
    %c0_62 = arith.constant 0 : index
    %192 = vector.load %arg4[%c0_61, %c0_62] : memref<256x1024xbf16, #tpu.memory_space<vmem>>, vector<256x1024xbf16>
    %cst_63 = arith.constant dense<0.000000e+00> : vector<8x1024xf32>
    %193 = tpu.matmul %191, %192, %cst_63 {dimension_numbers = #tpu.dot_dimension_numbers<[1], [0], [0], [1], [0, 0, 1, 1], [], []>} : vector<8x256xbf16>, vector<256x1024xbf16>, vector<8x1024xf32> -> vector<8x1024xf32>
    %194 = arith.addf %190, %193 : vector<8x1024xf32>
    %195 = arith.negf %194 : vector<8x1024xf32>
    %196 = math.exp %195 : vector<8x1024xf32>
    %cst_64 = arith.constant 1.000000e+00 : f32
    %197 = vector.broadcast %cst_64 : f32 to vector<8x1024xf32>
    %198 = arith.addf %197, %196 : vector<8x1024xf32>
    %199 = arith.divf %197, %198 : vector<8x1024xf32>
    %200 = vector.extract_strided_slice %199 {offsets = [0, 0], sizes = [8, 256], strides = [1, 1]} : vector<8x1024xf32> to vector<8x256xf32>
    %201 = vector.extract_strided_slice %199 {offsets = [0, 256], sizes = [8, 256], strides = [1, 1]} : vector<8x1024xf32> to vector<8x256xf32>
    %202 = vector.extract_strided_slice %199 {offsets = [0, 512], sizes = [8, 256], strides = [1, 1]} : vector<8x1024xf32> to vector<8x256xf32>
    %cst_65 = arith.constant 2.000000e+00 : f32
    %203 = vector.broadcast %cst_65 : f32 to vector<8x256xf32>
    %204 = arith.mulf %203, %202 : vector<8x256xf32>
    %cst_66 = arith.constant 1.000000e+00 : f32
    %205 = vector.broadcast %cst_66 : f32 to vector<8x256xf32>
    %206 = arith.subf %204, %205 : vector<8x256xf32>
    %207 = vector.extract_strided_slice %199 {offsets = [0, 768], sizes = [8, 256], strides = [1, 1]} : vector<8x1024xf32> to vector<8x256xf32>
    %208 = arith.mulf %201, %189 : vector<8x256xf32>
    %209 = arith.mulf %200, %206 : vector<8x256xf32>
    %210 = arith.addf %208, %209 : vector<8x256xf32>
    %211 = math.tanh %210 : vector<8x256xf32>
    %212 = arith.mulf %207, %211 : vector<8x256xf32>
    %c0_i32_67 = arith.constant 0 : i32
    %213 = vector.broadcast %c0_i32_67 : i32 to vector<8x256xi32>
    %214 = arith.cmpi sge, %7, %213 : vector<8x256xi32>
    %c160_i32_68 = arith.constant 160 : i32
    %215 = vector.broadcast %c160_i32_68 : i32 to vector<8x256xi32>
    %216 = arith.cmpi slt, %7, %215 : vector<8x256xi32>
    %217 = arith.andi %214, %216 : vector<8x256xi1>
    %218 = arith.select %217, %212, %188 : vector<8x256xi1>, vector<8x256xf32>
    %219 = arith.select %217, %210, %189 : vector<8x256xi1>, vector<8x256xf32>
    %c56 = arith.constant 56 : index
    %c0_69 = arith.constant 0 : index
    %220 = vector.load %arg11[%c56, %c0_69] : memref<64x1024xf32, #tpu.memory_space<vmem>>, vector<8x1024xf32>
    %221 = arith.truncf %218 : vector<8x256xf32> to vector<8x256xbf16>
    %c0_70 = arith.constant 0 : index
    %c0_71 = arith.constant 0 : index
    %222 = vector.load %arg4[%c0_70, %c0_71] : memref<256x1024xbf16, #tpu.memory_space<vmem>>, vector<256x1024xbf16>
    %cst_72 = arith.constant dense<0.000000e+00> : vector<8x1024xf32>
    %223 = tpu.matmul %221, %222, %cst_72 {dimension_numbers = #tpu.dot_dimension_numbers<[1], [0], [0], [1], [0, 0, 1, 1], [], []>} : vector<8x256xbf16>, vector<256x1024xbf16>, vector<8x1024xf32> -> vector<8x1024xf32>
    %224 = arith.addf %220, %223 : vector<8x1024xf32>
    %225 = arith.negf %224 : vector<8x1024xf32>
    %226 = math.exp %225 : vector<8x1024xf32>
    %cst_73 = arith.constant 1.000000e+00 : f32
    %227 = vector.broadcast %cst_73 : f32 to vector<8x1024xf32>
    %228 = arith.addf %227, %226 : vector<8x1024xf32>
    %229 = arith.divf %227, %228 : vector<8x1024xf32>
    %230 = vector.extract_strided_slice %229 {offsets = [0, 0], sizes = [8, 256], strides = [1, 1]} : vector<8x1024xf32> to vector<8x256xf32>
    %231 = vector.extract_strided_slice %229 {offsets = [0, 256], sizes = [8, 256], strides = [1, 1]} : vector<8x1024xf32> to vector<8x256xf32>
    %232 = vector.extract_strided_slice %229 {offsets = [0, 512], sizes = [8, 256], strides = [1, 1]} : vector<8x1024xf32> to vector<8x256xf32>
    %cst_74 = arith.constant 2.000000e+00 : f32
    %233 = vector.broadcast %cst_74 : f32 to vector<8x256xf32>
    %234 = arith.mulf %233, %232 : vector<8x256xf32>
    %cst_75 = arith.constant 1.000000e+00 : f32
    %235 = vector.broadcast %cst_75 : f32 to vector<8x256xf32>
    %236 = arith.subf %234, %235 : vector<8x256xf32>
    %237 = vector.extract_strided_slice %229 {offsets = [0, 768], sizes = [8, 256], strides = [1, 1]} : vector<8x1024xf32> to vector<8x256xf32>
    %238 = arith.mulf %231, %219 : vector<8x256xf32>
    %239 = arith.mulf %230, %236 : vector<8x256xf32>
    %240 = arith.addf %238, %239 : vector<8x256xf32>
    %241 = math.tanh %240 : vector<8x256xf32>
    %242 = arith.mulf %237, %241 : vector<8x256xf32>
    %c0_i32_76 = arith.constant 0 : i32
    %243 = vector.broadcast %c0_i32_76 : i32 to vector<8x256xi32>
    %244 = arith.cmpi sge, %7, %243 : vector<8x256xi32>
    %c160_i32_77 = arith.constant 160 : i32
    %245 = vector.broadcast %c160_i32_77 : i32 to vector<8x256xi32>
    %246 = arith.cmpi slt, %7, %245 : vector<8x256xi32>
    %247 = arith.andi %244, %246 : vector<8x256xi1>
    %248 = arith.select %247, %242, %218 : vector<8x256xi1>, vector<8x256xf32>
    %249 = arith.select %247, %240, %219 : vector<8x256xi1>, vector<8x256xf32>
    %c56_78 = arith.constant 56 : index
    %c0_79 = arith.constant 0 : index
    %250 = vector.load %arg11[%c56_78, %c0_79] : memref<64x1024xf32, #tpu.memory_space<vmem>>, vector<8x1024xf32>
    %251 = arith.truncf %248 : vector<8x256xf32> to vector<8x256xbf16>
    %c0_80 = arith.constant 0 : index
    %c0_81 = arith.constant 0 : index
    %252 = vector.load %arg4[%c0_80, %c0_81] : memref<256x1024xbf16, #tpu.memory_space<vmem>>, vector<256x1024xbf16>
    %cst_82 = arith.constant dense<0.000000e+00> : vector<8x1024xf32>
    %253 = tpu.matmul %251, %252, %cst_82 {dimension_numbers = #tpu.dot_dimension_numbers<[1], [0], [0], [1], [0, 0, 1, 1], [], []>} : vector<8x256xbf16>, vector<256x1024xbf16>, vector<8x1024xf32> -> vector<8x1024xf32>
    %254 = arith.addf %250, %253 : vector<8x1024xf32>
    %255 = arith.negf %254 : vector<8x1024xf32>
    %256 = math.exp %255 : vector<8x1024xf32>
    %cst_83 = arith.constant 1.000000e+00 : f32
    %257 = vector.broadcast %cst_83 : f32 to vector<8x1024xf32>
    %258 = arith.addf %257, %256 : vector<8x1024xf32>
    %259 = arith.divf %257, %258 : vector<8x1024xf32>
    %260 = vector.extract_strided_slice %259 {offsets = [0, 0], sizes = [8, 256], strides = [1, 1]} : vector<8x1024xf32> to vector<8x256xf32>
    %261 = vector.extract_strided_slice %259 {offsets = [0, 256], sizes = [8, 256], strides = [1, 1]} : vector<8x1024xf32> to vector<8x256xf32>
    %262 = vector.extract_strided_slice %259 {offsets = [0, 512], sizes = [8, 256], strides = [1, 1]} : vector<8x1024xf32> to vector<8x256xf32>
    %cst_84 = arith.constant 2.000000e+00 : f32
    %263 = vector.broadcast %cst_84 : f32 to vector<8x256xf32>
    %264 = arith.mulf %263, %262 : vector<8x256xf32>
    %cst_85 = arith.constant 1.000000e+00 : f32
    %265 = vector.broadcast %cst_85 : f32 to vector<8x256xf32>
    %266 = arith.subf %264, %265 : vector<8x256xf32>
    %267 = vector.extract_strided_slice %259 {offsets = [0, 768], sizes = [8, 256], strides = [1, 1]} : vector<8x1024xf32> to vector<8x256xf32>
    %268 = arith.mulf %261, %249 : vector<8x256xf32>
    %269 = arith.mulf %260, %266 : vector<8x256xf32>
    %270 = arith.addf %268, %269 : vector<8x256xf32>
    %271 = math.tanh %270 : vector<8x256xf32>
    %272 = arith.mulf %267, %271 : vector<8x256xf32>
    %c32_i32_86 = arith.constant 32 : i32
    %273 = vector.broadcast %c32_i32_86 : i32 to vector<8x256xi32>
    %274 = arith.cmpi sge, %7, %273 : vector<8x256xi32>
    %c160_i32_87 = arith.constant 160 : i32
    %275 = vector.broadcast %c160_i32_87 : i32 to vector<8x256xi32>
    %276 = arith.cmpi slt, %7, %275 : vector<8x256xi32>
    %277 = arith.andi %274, %276 : vector<8x256xi1>
    %278 = arith.select %277, %272, %248 : vector<8x256xi1>, vector<8x256xf32>
    %279 = arith.select %277, %270, %249 : vector<8x256xi1>, vector<8x256xf32>
    %c56_88 = arith.constant 56 : index
    %c0_89 = arith.constant 0 : index
    %280 = vector.load %arg11[%c56_88, %c0_89] : memref<64x1024xf32, #tpu.memory_space<vmem>>, vector<8x1024xf32>
    %281 = arith.truncf %278 : vector<8x256xf32> to vector<8x256xbf16>
    %c0_90 = arith.constant 0 : index
    %c0_91 = arith.constant 0 : index
    %282 = vector.load %arg4[%c0_90, %c0_91] : memref<256x1024xbf16, #tpu.memory_space<vmem>>, vector<256x1024xbf16>
    %cst_92 = arith.constant dense<0.000000e+00> : vector<8x1024xf32>
    %283 = tpu.matmul %281, %282, %cst_92 {dimension_numbers = #tpu.dot_dimension_numbers<[1], [0], [0], [1], [0, 0, 1, 1], [], []>} : vector<8x256xbf16>, vector<256x1024xbf16>, vector<8x1024xf32> -> vector<8x1024xf32>
    %284 = arith.addf %280, %283 : vector<8x1024xf32>
    %285 = arith.negf %284 : vector<8x1024xf32>
    %286 = math.exp %285 : vector<8x1024xf32>
    %cst_93 = arith.constant 1.000000e+00 : f32
    %287 = vector.broadcast %cst_93 : f32 to vector<8x1024xf32>
    %288 = arith.addf %287, %286 : vector<8x1024xf32>
    %289 = arith.divf %287, %288 : vector<8x1024xf32>
    %290 = vector.extract_strided_slice %289 {offsets = [0, 0], sizes = [8, 256], strides = [1, 1]} : vector<8x1024xf32> to vector<8x256xf32>
    %291 = vector.extract_strided_slice %289 {offsets = [0, 256], sizes = [8, 256], strides = [1, 1]} : vector<8x1024xf32> to vector<8x256xf32>
    %292 = vector.extract_strided_slice %289 {offsets = [0, 512], sizes = [8, 256], strides = [1, 1]} : vector<8x1024xf32> to vector<8x256xf32>
    %cst_94 = arith.constant 2.000000e+00 : f32
    %293 = vector.broadcast %cst_94 : f32 to vector<8x256xf32>
    %294 = arith.mulf %293, %292 : vector<8x256xf32>
    %cst_95 = arith.constant 1.000000e+00 : f32
    %295 = vector.broadcast %cst_95 : f32 to vector<8x256xf32>
    %296 = arith.subf %294, %295 : vector<8x256xf32>
    %297 = vector.extract_strided_slice %289 {offsets = [0, 768], sizes = [8, 256], strides = [1, 1]} : vector<8x1024xf32> to vector<8x256xf32>
    %298 = arith.mulf %291, %279 : vector<8x256xf32>
    %299 = arith.mulf %290, %296 : vector<8x256xf32>
    %300 = arith.addf %298, %299 : vector<8x256xf32>
    %301 = math.tanh %300 : vector<8x256xf32>
    %302 = arith.mulf %297, %301 : vector<8x256xf32>
    %c64_i32_96 = arith.constant 64 : i32
    %303 = vector.broadcast %c64_i32_96 : i32 to vector<8x256xi32>
    %304 = arith.cmpi sge, %7, %303 : vector<8x256xi32>
    %c160_i32_97 = arith.constant 160 : i32
    %305 = vector.broadcast %c160_i32_97 : i32 to vector<8x256xi32>
    %306 = arith.cmpi slt, %7, %305 : vector<8x256xi32>
    %307 = arith.andi %304, %306 : vector<8x256xi1>
    %308 = arith.select %307, %302, %278 : vector<8x256xi1>, vector<8x256xf32>
    %309 = arith.select %307, %300, %279 : vector<8x256xi1>, vector<8x256xf32>
    %c56_98 = arith.constant 56 : index
    %c0_99 = arith.constant 0 : index
    %310 = vector.load %arg11[%c56_98, %c0_99] : memref<64x1024xf32, #tpu.memory_space<vmem>>, vector<8x1024xf32>
    %311 = arith.truncf %308 : vector<8x256xf32> to vector<8x256xbf16>
    %c0_100 = arith.constant 0 : index
    %c0_101 = arith.constant 0 : index
    %312 = vector.load %arg4[%c0_100, %c0_101] : memref<256x1024xbf16, #tpu.memory_space<vmem>>, vector<256x1024xbf16>
    %cst_102 = arith.constant dense<0.000000e+00> : vector<8x1024xf32>
    %313 = tpu.matmul %311, %312, %cst_102 {dimension_numbers = #tpu.dot_dimension_numbers<[1], [0], [0], [1], [0, 0, 1, 1], [], []>} : vector<8x256xbf16>, vector<256x1024xbf16>, vector<8x1024xf32> -> vector<8x1024xf32>
    %314 = arith.addf %310, %313 : vector<8x1024xf32>
    %315 = arith.negf %314 : vector<8x1024xf32>
    %316 = math.exp %315 : vector<8x1024xf32>
    %cst_103 = arith.constant 1.000000e+00 : f32
    %317 = vector.broadcast %cst_103 : f32 to vector<8x1024xf32>
    %318 = arith.addf %317, %316 : vector<8x1024xf32>
    %319 = arith.divf %317, %318 : vector<8x1024xf32>
    %320 = vector.extract_strided_slice %319 {offsets = [0, 0], sizes = [8, 256], strides = [1, 1]} : vector<8x1024xf32> to vector<8x256xf32>
    %321 = vector.extract_strided_slice %319 {offsets = [0, 256], sizes = [8, 256], strides = [1, 1]} : vector<8x1024xf32> to vector<8x256xf32>
    %322 = vector.extract_strided_slice %319 {offsets = [0, 512], sizes = [8, 256], strides = [1, 1]} : vector<8x1024xf32> to vector<8x256xf32>
    %cst_104 = arith.constant 2.000000e+00 : f32
    %323 = vector.broadcast %cst_104 : f32 to vector<8x256xf32>
    %324 = arith.mulf %323, %322 : vector<8x256xf32>
    %cst_105 = arith.constant 1.000000e+00 : f32
    %325 = vector.broadcast %cst_105 : f32 to vector<8x256xf32>
    %326 = arith.subf %324, %325 : vector<8x256xf32>
    %327 = vector.extract_strided_slice %319 {offsets = [0, 768], sizes = [8, 256], strides = [1, 1]} : vector<8x1024xf32> to vector<8x256xf32>
    %328 = arith.mulf %321, %309 : vector<8x256xf32>
    %329 = arith.mulf %320, %326 : vector<8x256xf32>
    %330 = arith.addf %328, %329 : vector<8x256xf32>
    %331 = math.tanh %330 : vector<8x256xf32>
    %332 = arith.mulf %327, %331 : vector<8x256xf32>
    %c96_i32_106 = arith.constant 96 : i32
    %333 = vector.broadcast %c96_i32_106 : i32 to vector<8x256xi32>
    %334 = arith.cmpi sge, %7, %333 : vector<8x256xi32>
    %c160_i32_107 = arith.constant 160 : i32
    %335 = vector.broadcast %c160_i32_107 : i32 to vector<8x256xi32>
    %336 = arith.cmpi slt, %7, %335 : vector<8x256xi32>
    %337 = arith.andi %334, %336 : vector<8x256xi1>
    %338 = arith.select %337, %332, %308 : vector<8x256xi1>, vector<8x256xf32>
    %339 = arith.select %337, %330, %309 : vector<8x256xi1>, vector<8x256xf32>
    %c56_108 = arith.constant 56 : index
    %c0_109 = arith.constant 0 : index
    %340 = vector.load %arg11[%c56_108, %c0_109] : memref<64x1024xf32, #tpu.memory_space<vmem>>, vector<8x1024xf32>
    %341 = arith.truncf %338 : vector<8x256xf32> to vector<8x256xbf16>
    %c0_110 = arith.constant 0 : index
    %c0_111 = arith.constant 0 : index
    %342 = vector.load %arg4[%c0_110, %c0_111] : memref<256x1024xbf16, #tpu.memory_space<vmem>>, vector<256x1024xbf16>
    %cst_112 = arith.constant dense<0.000000e+00> : vector<8x1024xf32>
    %343 = tpu.matmul %341, %342, %cst_112 {dimension_numbers = #tpu.dot_dimension_numbers<[1], [0], [0], [1], [0, 0, 1, 1], [], []>} : vector<8x256xbf16>, vector<256x1024xbf16>, vector<8x1024xf32> -> vector<8x1024xf32>
    %344 = arith.addf %340, %343 : vector<8x1024xf32>
    %345 = arith.negf %344 : vector<8x1024xf32>
    %346 = math.exp %345 : vector<8x1024xf32>
    %cst_113 = arith.constant 1.000000e+00 : f32
    %347 = vector.broadcast %cst_113 : f32 to vector<8x1024xf32>
    %348 = arith.addf %347, %346 : vector<8x1024xf32>
    %349 = arith.divf %347, %348 : vector<8x1024xf32>
    %350 = vector.extract_strided_slice %349 {offsets = [0, 0], sizes = [8, 256], strides = [1, 1]} : vector<8x1024xf32> to vector<8x256xf32>
    %351 = vector.extract_strided_slice %349 {offsets = [0, 256], sizes = [8, 256], strides = [1, 1]} : vector<8x1024xf32> to vector<8x256xf32>
    %352 = vector.extract_strided_slice %349 {offsets = [0, 512], sizes = [8, 256], strides = [1, 1]} : vector<8x1024xf32> to vector<8x256xf32>
    %cst_114 = arith.constant 2.000000e+00 : f32
    %353 = vector.broadcast %cst_114 : f32 to vector<8x256xf32>
    %354 = arith.mulf %353, %352 : vector<8x256xf32>
    %cst_115 = arith.constant 1.000000e+00 : f32
    %355 = vector.broadcast %cst_115 : f32 to vector<8x256xf32>
    %356 = arith.subf %354, %355 : vector<8x256xf32>
    %357 = vector.extract_strided_slice %349 {offsets = [0, 768], sizes = [8, 256], strides = [1, 1]} : vector<8x1024xf32> to vector<8x256xf32>
    %358 = arith.mulf %351, %339 : vector<8x256xf32>
    %359 = arith.mulf %350, %356 : vector<8x256xf32>
    %360 = arith.addf %358, %359 : vector<8x256xf32>
    %361 = math.tanh %360 : vector<8x256xf32>
    %362 = arith.mulf %357, %361 : vector<8x256xf32>
    %c128_i32_116 = arith.constant 128 : i32
    %363 = vector.broadcast %c128_i32_116 : i32 to vector<8x256xi32>
    %364 = arith.cmpi sge, %7, %363 : vector<8x256xi32>
    %c160_i32_117 = arith.constant 160 : i32
    %365 = vector.broadcast %c160_i32_117 : i32 to vector<8x256xi32>
    %366 = arith.cmpi slt, %7, %365 : vector<8x256xi32>
    %367 = arith.andi %364, %366 : vector<8x256xi1>
    %368 = arith.select %367, %362, %338 : vector<8x256xi1>, vector<8x256xf32>
    %369 = arith.select %367, %360, %339 : vector<8x256xi1>, vector<8x256xf32>
    %c0_118 = arith.constant 0 : index
    %c0_119 = arith.constant 0 : index
    %370 = vector.load %arg9[%c0_118, %c0_119] : memref<8x256xf32, #tpu.memory_space<vmem>>, vector<8x256xf32>
    tpu.vector_store %arg9[%c0_118, %c0_119], %368 {strides = array<i32>} : memref<8x256xf32, #tpu.memory_space<vmem>>, vector<8x256xf32>,
    %c0_120 = arith.constant 0 : index
    %c0_121 = arith.constant 0 : index
    %371 = vector.load %arg10[%c0_120, %c0_121] : memref<8x256xf32, #tpu.memory_space<vmem>>, vector<8x256xf32>
    tpu.vector_store %arg10[%c0_120, %c0_121], %369 {strides = array<i32>} : memref<8x256xf32, #tpu.memory_space<vmem>>, vector<8x256xf32>,
    %372 = vector.extract_strided_slice %368 {offsets = [0, 128], sizes = [8, 32], strides = [1, 1]} : vector<8x256xf32> to vector<8x32xf32>
    %c0_122 = arith.constant 0 : index
    %c0_123 = arith.constant 0 : index
    %373 = vector.load %arg6[%c0_122, %c0_123] : memref<32x16xf32, #tpu.memory_space<vmem>>, vector<32x16xf32>
    %cst_124 = arith.constant dense<0.000000e+00> : vector<8x16xf32>
    %374 = tpu.matmul %372, %373, %cst_124 {dimension_numbers = #tpu.dot_dimension_numbers<[1], [0], [0], [1], [0, 0, 1, 1], [], []>} : vector<8x32xf32>, vector<32x16xf32>, vector<8x16xf32> -> vector<8x16xf32>
    %c0_125 = arith.constant 0 : index
    %c0_126 = arith.constant 0 : index
    %375 = vector.load %arg7[%c0_125, %c0_126] : memref<1x16xf32, #tpu.memory_space<vmem>>, vector<1x16xf32>
    %376 = vector.broadcast %375 : vector<1x16xf32> to vector<8x16xf32>
    %377 = arith.addf %374, %376 : vector<8x16xf32>
    %c0_127 = arith.constant 0 : index
    %c0_128 = arith.constant 0 : index
    %378 = vector.load %arg8[%c0_127, %c0_128] : memref<8x16xf32, #tpu.memory_space<vmem>>, vector<8x16xf32>
    tpu.vector_store %arg8[%c0_127, %c0_128], %377 {strides = array<i32>} : memref<8x16xf32, #tpu.memory_space<vmem>>, vector<8x16xf32>,
    return
  }
}

</mosaic_0001>

<llo_original>
// kernel: tpu_custom_call.1
$region0: #{tpu_custom_call.1}
  #allocation0 [shape = 'u32[]', space=smem, size = 0x4, offset = 0x4, fixed_abs, tag = 'smem constant byte address 0x4 - core index']
  #allocation1 [shape = 'u32[144,128]{1,0:T(1,128)}', space=vmem, size = 0x12000, scoped, tag = 'internal scratch']
  #allocation2 [shape = 'f32[64,1024]{1,0:T(8,128)}', space=vmem, size = 0x40000, scoped, tag = 'scratch operand']
  %s0 = inlined_call_operand.vmem [shape: bf16[64,16], index: 0, kind: input, shape index: {}]
  %s1 = inlined_call_operand.hbm [shape: f32[8,256], index: 1, kind: input, shape index: {}]
  %s2 = inlined_call_operand.hbm [shape: f32[8,256], index: 2, kind: input, shape index: {}]
  %s3 = inlined_call_operand.vmem [shape: bf16[16,1024], index: 3, kind: input, shape index: {}]
  %s4 = inlined_call_operand.hbm [shape: bf16[256,1024], index: 4, kind: input, shape index: {}]
  %s5 = inlined_call_operand.vmem [shape: f32[1,1024], index: 5, kind: input, shape index: {}]
  %s6 = inlined_call_operand.vmem [shape: f32[32,16], index: 6, kind: input, shape index: {}]
  %s7 = inlined_call_operand.vmem [shape: f32[1,16], index: 7, kind: input, shape index: {}]
  %s8 = inlined_call_operand.hbm [shape: f32[8,16], index: 8, kind: output, shape index: {0}]
  %s9 = inlined_call_operand.hbm [shape: f32[8,256], index: 9, kind: output, shape index: {1}]
  %s10 = inlined_call_operand.hbm [shape: f32[8,256], index: 10, kind: output, shape index: {2}]
  %11 = xla_tuple %s8, %s9, %s10
  %s12 = sld [smem:[#allocation0]]
  $region70: #{tpu_custom_call.1} parent=0
    _
  %s14 = ssub.s32 1, %s12
  %s15 = scalar_select 0, %s14, %s12
  $region1: #{tpu_custom_call.1} parent=0
    #allocation3 [shape = 'u8[8192]{0}', space=vmem, size = 0x2000, scoped, tag = 'input window, operand 1, single buffered']
    #allocation4 [shape = 's32[1]{0}', space=sflag, size = 0x4, scoped, tag = 'scoped memory for tpu_custom_call.1']
    #allocation5 [shape = 's32[1]{0}', space=sflag, size = 0x4, scoped, tag = 'scoped memory for tpu_custom_call.1']
    #allocation6 [shape = 'u8[8192]{0}', space=vmem, size = 0x2000, scoped, tag = 'input window, operand 2, single buffered']
    #allocation7 [shape = 's32[1]{0}', space=sflag, size = 0x4, scoped, tag = 'scoped memory for tpu_custom_call.1']
    #allocation8 [shape = 'u8[524288]{0}', space=vmem, size = 0x80000, scoped, tag = 'input window, operand 4, single buffered']
    #allocation9 [shape = 'u8[4096]{0}', space=vmem, size = 0x1000, scoped, tag = 'output window, operand 0, single buffered']
    #allocation10 [shape = 'u8[8192]{0}', space=vmem, size = 0x2000, scoped, tag = 'output window, operand 1, single buffered']
    #allocation11 [shape = 's32[1]{0}', space=sflag, size = 0x4, scoped, tag = 'scoped memory for tpu_custom_call.1']
    #allocation12 [shape = 'u8[8192]{0}', space=vmem, size = 0x2000, scoped, tag = 'output window, operand 2, single buffered']
    %16 = vsyncpa [#allocation4], 0
    %17 = vsyncpa [#allocation7], 0
    %18 = vsyncpa [#allocation5], 0
    %19 = vsyncpa [#allocation11], 0
    // Predicated region
    $region2: #{tpu_custom_call.1} parent=1 // pred_check
      _
    $region3: #{tpu_custom_call.1} parent=1 // pred_check_branch
      %21 = sbr.rel (0) target = $region5
    $region4: #{tpu_custom_call.1} parent=1 // pred_region
      _
    $region5: #{tpu_custom_call.1} parent=1 // pred_fallthru
      _
    // Predicated region
    $region6: #{tpu_custom_call.1} parent=1 // pred_check
      _
    $region7: #{tpu_custom_call.1} parent=1 // pred_check_branch
      %23 = sbr.rel (0) target = $region9
    $region8: #{tpu_custom_call.1} parent=1 // pred_region
      %s25 = ssub.s32 256, 256
      %26 = vsyncadd [#allocation4], %s25
      %s28 = sshll.u32 [#allocation3], 4
      %s29 = int_to_ptr.vmem [resolvable:$true] %s28
      %31 = dma.hbm_to_vmem [thread:$0]  %s1, 256, %s29, [#allocation4]
    $region9: #{tpu_custom_call.1} parent=1 // pred_fallthru
      _
    // Predicated region
    $region10: #{tpu_custom_call.1} parent=1 // pred_check
      _
    $region11: #{tpu_custom_call.1} parent=1 // pred_check_branch
      %33 = sbr.rel (0) target = $region13
    $region12: #{tpu_custom_call.1} parent=1 // pred_region
      %s35 = ssub.s32 256, 256
      %36 = vsyncadd [#allocation7], %s35
      %s38 = sshll.u32 [#allocation6], 4
      %s39 = int_to_ptr.vmem [resolvable:$true] %s38
      %41 = dma.hbm_to_vmem [thread:$0]  %s2, 256, %s39, [#allocation7]
    $region13: #{tpu_custom_call.1} parent=1 // pred_fallthru
      _
    // Predicated region
    $region14: #{tpu_custom_call.1} parent=1 // pred_check
      _
    $region15: #{tpu_custom_call.1} parent=1 // pred_check_branch
      %43 = sbr.rel (0) target = $region17
    $region16: #{tpu_custom_call.1} parent=1 // pred_region
      _
    $region17: #{tpu_custom_call.1} parent=1 // pred_fallthru
      _
    // Predicated region
    $region18: #{tpu_custom_call.1} parent=1 // pred_check
      _
    $region19: #{tpu_custom_call.1} parent=1 // pred_check_branch
      %45 = sbr.rel (0) target = $region21
    $region20: #{tpu_custom_call.1} parent=1 // pred_region
      %s47 = ssub.s32 16384, 16384
      %48 = vsyncadd [#allocation7], %s47
      %s49 = sshll.u32 [#allocation8], 4
      %s50 = int_to_ptr.vmem [resolvable:$true] %s49
      %55 = dma.hbm_to_vmem [thread:$0]  %s4, 16384, %s50, [#allocation7], 512, 512, 32
    $region21: #{tpu_custom_call.1} parent=1 // pred_fallthru
      _
    // Predicated region
    $region22: #{tpu_custom_call.1} parent=1 // pred_check
      _
    $region23: #{tpu_custom_call.1} parent=1 // pred_check_branch
      %57 = sbr.rel (0) target = $region25
    $region24: #{tpu_custom_call.1} parent=1 // pred_region
      _
    $region25: #{tpu_custom_call.1} parent=1 // pred_fallthru
      _
    // Predicated region
    $region26: #{tpu_custom_call.1} parent=1 // pred_check
      _
    $region27: #{tpu_custom_call.1} parent=1 // pred_check_branch
      %59 = sbr.rel (0) target = $region29
    $region28: #{tpu_custom_call.1} parent=1 // pred_region
      _
    $region29: #{tpu_custom_call.1} parent=1 // pred_fallthru
      _
    // Predicated region
    $region30: #{tpu_custom_call.1} parent=1 // pred_check
      _
    $region31: #{tpu_custom_call.1} parent=1 // pred_check_branch
      %61 = sbr.rel (0) target = $region33
    $region32: #{tpu_custom_call.1} parent=1 // pred_region
      _
    $region33: #{tpu_custom_call.1} parent=1 // pred_fallthru
      _
    // Predicated region
    $region34: #{tpu_custom_call.1} parent=1 // pred_check
      _
    $region35: #{tpu_custom_call.1} parent=1 // pred_check_branch
      %63 = sbr.rel (0) target = $region37
    $region36: #{tpu_custom_call.1} parent=1 // pred_region
      %64 = dma.done [#allocation4], 256
    $region37: #{tpu_custom_call.1} parent=1 // pred_fallthru
      _
    // Predicated region
    $region38: #{tpu_custom_call.1} parent=1 // pred_check
      _
    $region39: #{tpu_custom_call.1} parent=1 // pred_check_branch
      %66 = sbr.rel (0) target = $region41
    $region40: #{tpu_custom_call.1} parent=1 // pred_region
      %67 = dma.done [#allocation7], 256
    $region41: #{tpu_custom_call.1} parent=1 // pred_fallthru
      _
    // Predicated region
    $region42: #{tpu_custom_call.1} parent=1 // pred_check
      _
    $region43: #{tpu_custom_call.1} parent=1 // pred_check_branch
      %69 = sbr.rel (0) target = $region45
    $region44: #{tpu_custom_call.1} parent=1 // pred_region
      %70 = dma.done [#allocation7], 16384
    $region45: #{tpu_custom_call.1} parent=1 // pred_fallthru
      _
    %v72 = vld [vmem:[%s0] sm:$0xf]
    %v73 = vld [vmem:[%s0 + $0x4] sm:$0xf]
    %v74 = vld [vmem:[%s0 + $0x8] sm:$0xf]
    %v75 = vld [vmem:[%s0 + $0xc] sm:$0xf]
    %v76 = vld [vmem:[%s0 + $0x10] sm:$0xf]
    %v77 = vld [vmem:[%s0 + $0x14] sm:$0xf]
    %v78 = vld [vmem:[%s0 + $0x18] sm:$0xf]
    %v79 = vld [vmem:[%s0 + $0x1c] sm:$0xf]
    %v80 = vld [vmem:[%s3] sm:$0xff]
    %v81 = vld [vmem:[%s3 + $0x8] sm:$0xff]
    %v82 = vld [vmem:[%s3 + $0x10] sm:$0xff]
    %v83 = vld [vmem:[%s3 + $0x18] sm:$0xff]
    %v84 = vld [vmem:[%s3 + $0x20] sm:$0xff]
    %v85 = vld [vmem:[%s3 + $0x28] sm:$0xff]
    %v86 = vld [vmem:[%s3 + $0x30] sm:$0xff]
    %v87 = vld [vmem:[%s3 + $0x38] sm:$0xff]
    %v88 = vld [vmem:[%s5] sm:$0xff]
    %v90 = vlaneseq
    %v91 = vshrl.u32 %v90, 7
    %v92 = vsub.s32 0, %v91
    %v93 = vrot.slane %v88, %v92
    %v94 = vlaneseq
    %v95 = vshrl.u32 %v94, 7
    %v96 = vsub.s32 1, %v95
    %v97 = vrot.slane %v88, %v96
    %v98 = vlaneseq
    %v99 = vshrl.u32 %v98, 7
    %v100 = vsub.s32 2, %v99
    %v101 = vrot.slane %v88, %v100
    %v102 = vlaneseq
    %v103 = vshrl.u32 %v102, 7
    %v104 = vsub.s32 3, %v103
    %v105 = vrot.slane %v88, %v104
    %v106 = vlaneseq
    %v107 = vshrl.u32 %v106, 7
    %v108 = vsub.s32 4, %v107
    %v109 = vrot.slane %v88, %v108
    %v110 = vlaneseq
    %v111 = vshrl.u32 %v110, 7
    %v112 = vsub.s32 5, %v111
    %v113 = vrot.slane %v88, %v112
    %v114 = vlaneseq
    %v115 = vshrl.u32 %v114, 7
    %v116 = vsub.s32 6, %v115
    %v117 = vrot.slane %v88, %v116
    %v118 = vlaneseq
    %v119 = vshrl.u32 %v118, 7
    %v120 = vsub.s32 7, %v119
    %v121 = vrot.slane %v88, %v120
    %v138 = vunpack.c.l.b16 %v72
    %v139 = vunpack.c.l.b16 %v73
    %v140 = vunpack.c.l.b16 %v74
    %v141 = vunpack.c.l.b16 %v75
    %v142 = vunpack.c.l.b16 %v76
    %v143 = vunpack.c.l.b16 %v77
    %v144 = vunpack.c.l.b16 %v78
    %v145 = vunpack.c.l.b16 %v79
    %v146 = vpack.c.b16 %v139, %v138
    %v147 = vpack.c.b16 %v141, %v140
    %v148 = vpack.c.b16 %v143, %v142
    %v149 = vpack.c.b16 %v145, %v144
    %v158 = vunpack.c.l.b16 %v80
    %v159 = vunpack.c.h.b16 %v80
    %v160 = vunpack.c.l.b16 %v81
    %v161 = vunpack.c.h.b16 %v81
    %v162 = vunpack.c.l.b16 %v82
    %v163 = vunpack.c.h.b16 %v82
    %v164 = vunpack.c.l.b16 %v83
    %v165 = vunpack.c.h.b16 %v83
    %v166 = vunpack.c.l.b16 %v84
    %v167 = vunpack.c.h.b16 %v84
    %v168 = vunpack.c.l.b16 %v85
    %v169 = vunpack.c.h.b16 %v85
    %v170 = vunpack.c.l.b16 %v86
    %v171 = vunpack.c.h.b16 %v86
    %v172 = vunpack.c.l.b16 %v87
    %v173 = vunpack.c.h.b16 %v87
    %v174 = vpack.c.b16 %v166, %v158
    %v175 = vpack.c.b16 %v167, %v159
    %v176 = vpack.c.b16 %v168, %v160
    %v177 = vpack.c.b16 %v169, %v161
    %v178 = vpack.c.b16 %v170, %v162
    %v179 = vpack.c.b16 %v171, %v163
    %v180 = vpack.c.b16 %v172, %v164
    %v181 = vpack.c.b16 %v173, %v165
    %vm190 = vcmask 130048
    %v192 = vsel %vm190, %v146, 0
    %v195 = vsel %vm190, %v147, 0
    %v198 = vsel %vm190, %v148, 0
    %v201 = vsel %vm190, %v149, 0
    %203 = vmatprep.subr.bf16.mxu0 0
    %204 = vmatpush1.bf16.msra.mxu0 0
    %205 = vmatprep.subr.bf16.mxu0 0
    %206 = vmatpush1.bf16.msra.mxu0 0
    %207 = vmatprep.subr.bf16.mxu0 0
    %208 = vmatpush1.bf16.msra.mxu0 0
    %209 = vmatprep.subr.bf16.mxu0 0
    %210 = vmatpush1.bf16.msra.mxu0 0
    %211 = vmatprep.subr.bf16.mxu0 0
    %212 = vmatpush1.bf16.msra.mxu0 0
    %213 = vmatprep.subr.bf16.mxu0 0
    %214 = vmatpush1.bf16.msra.mxu0 0
    %215 = vmatprep.subr.bf16.mxu0 0
    %216 = vmatpush1.bf16.msra.mxu0 0
    %217 = vmatprep.subr.bf16.mxu0 %v175
    %218 = vmatpush1.bf16.msra.mxu0 %v174
    %219 = vmatprep.subr.bf16.mxu0 0
    %220 = vmatpush2.bf16.msra.mxu0 0
    %221 = vmatprep.subr.bf16.mxu0 0
    %222 = vmatpush2.bf16.msra.mxu0 0
    %223 = vmatprep.subr.bf16.mxu0 0
    %224 = vmatpush2.bf16.msra.mxu0 0
    %225 = vmatprep.subr.bf16.mxu0 0
    %226 = vmatpush2.bf16.msra.mxu0 0
    %227 = vmatprep.subr.bf16.mxu0 0
    %228 = vmatpush2.bf16.msra.mxu0 0
    %229 = vmatprep.subr.bf16.mxu0 0
    %230 = vmatpush2.bf16.msra.mxu0 0
    %231 = vmatprep.subr.bf16.mxu0 0
    %232 = vmatpush2.bf16.msra.mxu0 0
    %233 = vmatprep.subr.bf16.mxu0 0
    %234 = vmatpush2.bf16.msra.mxu0 0
    %235 = vmatprep.mubr.bf16.mxu0 0
    %236 = vmatmul.mubr.bf16.gmra.mxu0 %v192
    %v237 = vpop.f32.mrf.mxu0
    %v238 = vadd.f32 %v93, %v237
    %v239 = vpop.f32.mrf.mxu0
    %v240 = vadd.f32 %v97, %v239
    %v241 = vpop.f32.mrf.mxu0
    %v242 = vadd.f32 %v93, %v241
    %v243 = vpop.f32.mrf.mxu0
    %v244 = vadd.f32 %v97, %v243
    %245 = vmatprep.mubr.bf16.mxu0 0
    %246 = vmatmul.mubr.bf16.gmra.mxu0 %v195
    %v247 = vpop.f32.mrf.mxu0
    %v248 = vadd.f32 %v93, %v247
    %v249 = vpop.f32.mrf.mxu0
    %v250 = vadd.f32 %v97, %v249
    %v251 = vpop.f32.mrf.mxu0
    %v252 = vadd.f32 %v93, %v251
    %v253 = vpop.f32.mrf.mxu0
    %v254 = vadd.f32 %v97, %v253
    %255 = vmatprep.mubr.bf16.mxu0 0
    %256 = vmatmul.mubr.bf16.gmra.mxu0 %v198
    %v257 = vpop.f32.mrf.mxu0
    %v258 = vadd.f32 %v93, %v257
    %v259 = vpop.f32.mrf.mxu0
    %v260 = vadd.f32 %v97, %v259
    %v261 = vpop.f32.mrf.mxu0
    %v262 = vadd.f32 %v93, %v261
    %v263 = vpop.f32.mrf.mxu0
    %v264 = vadd.f32 %v97, %v263
    %265 = vmatprep.mubr.bf16.mxu0 0
    %266 = vmatmul.mubr.bf16.gmra.mxu0 %v201
    %v267 = vpop.f32.mrf.mxu0
    %v268 = vadd.f32 %v93, %v267
    %v269 = vpop.f32.mrf.mxu0
    %v270 = vadd.f32 %v97, %v269
    %v271 = vpop.f32.mrf.mxu0
    %v272 = vadd.f32 %v93, %v271
    %v273 = vpop.f32.mrf.mxu0
    %v274 = vadd.f32 %v97, %v273
    %275 = vdwg.mxu0
    %276 = vmatprep.subr.bf16.mxu0 0
    %277 = vmatpush1.bf16.msra.mxu0 0
    %278 = vmatprep.subr.bf16.mxu0 0
    %279 = vmatpush1.bf16.msra.mxu0 0
    %280 = vmatprep.subr.bf16.mxu0 0
    %281 = vmatpush1.bf16.msra.mxu0 0
    %282 = vmatprep.subr.bf16.mxu0 0
    %283 = vmatpush1.bf16.msra.mxu0 0
    %284 = vmatprep.subr.bf16.mxu0 0
    %285 = vmatpush1.bf16.msra.mxu0 0
    %286 = vmatprep.subr.bf16.mxu0 0
    %287 = vmatpush1.bf16.msra.mxu0 0
    %288 = vmatprep.subr.bf16.mxu0 0
    %289 = vmatpush1.bf16.msra.mxu0 0
    %290 = vmatprep.subr.bf16.mxu0 %v177
    %291 = vmatpush1.bf16.msra.mxu0 %v176
    %292 = vmatprep.subr.bf16.mxu0 0
    %293 = vmatpush2.bf16.msra.mxu0 0
    %294 = vmatprep.subr.bf16.mxu0 0
    %295 = vmatpush2.bf16.msra.mxu0 0
    %296 = vmatprep.subr.bf16.mxu0 0
    %297 = vmatpush2.bf16.msra.mxu0 0
    %298 = vmatprep.subr.bf16.mxu0 0
    %299 = vmatpush2.bf16.msra.mxu0 0
    %300 = vmatprep.subr.bf16.mxu0 0
    %301 = vmatpush2.bf16.msra.mxu0 0
    %302 = vmatprep.subr.bf16.mxu0 0
    %303 = vmatpush2.bf16.msra.mxu0 0
    %304 = vmatprep.subr.bf16.mxu0 0
    %305 = vmatpush2.bf16.msra.mxu0 0
    %306 = vmatprep.subr.bf16.mxu0 0
    %307 = vmatpush2.bf16.msra.mxu0 0
    %308 = vmatprep.mubr.bf16.mxu0 0
    %309 = vmatmul.mubr.bf16.gmra.mxu0 %v192
    %v310 = vpop.f32.mrf.mxu0
    %v311 = vadd.f32 %v101, %v310
    %v312 = vpop.f32.mrf.mxu0
    %v313 = vadd.f32 %v105, %v312
    %v314 = vpop.f32.mrf.mxu0
    %v315 = vadd.f32 %v101, %v314
    %v316 = vpop.f32.mrf.mxu0
    %v317 = vadd.f32 %v105, %v316
    %318 = vmatprep.mubr.bf16.mxu0 0
    %319 = vmatmul.mubr.bf16.gmra.mxu0 %v195
    %v320 = vpop.f32.mrf.mxu0
    %v321 = vadd.f32 %v101, %v320
    %v322 = vpop.f32.mrf.mxu0
    %v323 = vadd.f32 %v105, %v322
    %v324 = vpop.f32.mrf.mxu0
    %v325 = vadd.f32 %v101, %v324
    %v326 = vpop.f32.mrf.mxu0
    %v327 = vadd.f32 %v105, %v326
    %328 = vmatprep.mubr.bf16.mxu0 0
    %329 = vmatmul.mubr.bf16.gmra.mxu0 %v198
    %v330 = vpop.f32.mrf.mxu0
    %v331 = vadd.f32 %v101, %v330
    %v332 = vpop.f32.mrf.mxu0
    %v333 = vadd.f32 %v105, %v332
    %v334 = vpop.f32.mrf.mxu0
    %v335 = vadd.f32 %v101, %v334
    %v336 = vpop.f32.mrf.mxu0
    %v337 = vadd.f32 %v105, %v336
    %338 = vmatprep.mubr.bf16.mxu0 0
    %339 = vmatmul.mubr.bf16.gmra.mxu0 %v201
    %v340 = vpop.f32.mrf.mxu0
    %v341 = vadd.f32 %v101, %v340
    %v342 = vpop.f32.mrf.mxu0
    %v343 = vadd.f32 %v105, %v342
    %v344 = vpop.f32.mrf.mxu0
    %v345 = vadd.f32 %v101, %v344
    %v346 = vpop.f32.mrf.mxu0
    %v347 = vadd.f32 %v105, %v346
    %348 = vdwg.mxu0
    %349 = vmatprep.subr.bf16.mxu0 0
    %350 = vmatpush1.bf16.msra.mxu0 0
    %351 = vmatprep.subr.bf16.mxu0 0
    %352 = vmatpush1.bf16.msra.mxu0 0
    %353 = vmatprep.subr.bf16.mxu0 0
    %354 = vmatpush1.bf16.msra.mxu0 0
    %355 = vmatprep.subr.bf16.mxu0 0
    %356 = vmatpush1.bf16.msra.mxu0 0
    %357 = vmatprep.subr.bf16.mxu0 0
    %358 = vmatpush1.bf16.msra.mxu0 0
    %359 = vmatprep.subr.bf16.mxu0 0
    %360 = vmatpush1.bf16.msra.mxu0 0
    %361 = vmatprep.subr.bf16.mxu0 0
    %362 = vmatpush1.bf16.msra.mxu0 0
    %363 = vmatprep.subr.bf16.mxu0 %v179
    %364 = vmatpush1.bf16.msra.mxu0 %v178
    %365 = vmatprep.subr.bf16.mxu0 0
    %366 = vmatpush2.bf16.msra.mxu0 0
    %367 = vmatprep.subr.bf16.mxu0 0
    %368 = vmatpush2.bf16.msra.mxu0 0
    %369 = vmatprep.subr.bf16.mxu0 0
    %370 = vmatpush2.bf16.msra.mxu0 0
    %371 = vmatprep.subr.bf16.mxu0 0
    %372 = vmatpush2.bf16.msra.mxu0 0
    %373 = vmatprep.subr.bf16.mxu0 0
    %374 = vmatpush2.bf16.msra.mxu0 0
    %375 = vmatprep.subr.bf16.mxu0 0
    %376 = vmatpush2.bf16.msra.mxu0 0
    %377 = vmatprep.subr.bf16.mxu0 0
    %378 = vmatpush2.bf16.msra.mxu0 0
    %379 = vmatprep.subr.bf16.mxu0 0
    %380 = vmatpush2.bf16.msra.mxu0 0
    %381 = vmatprep.mubr.bf16.mxu0 0
    %382 = vmatmul.mubr.bf16.gmra.mxu0 %v192
    %v383 = vpop.f32.mrf.mxu0
    %v384 = vadd.f32 %v109, %v383
    %v385 = vpop.f32.mrf.mxu0
    %v386 = vadd.f32 %v113, %v385
    %v387 = vpop.f32.mrf.mxu0
    %v388 = vadd.f32 %v109, %v387
    %v389 = vpop.f32.mrf.mxu0
    %v390 = vadd.f32 %v113, %v389
    %391 = vmatprep.mubr.bf16.mxu0 0
    %392 = vmatmul.mubr.bf16.gmra.mxu0 %v195
    %v393 = vpop.f32.mrf.mxu0
    %v394 = vadd.f32 %v109, %v393
    %v395 = vpop.f32.mrf.mxu0
    %v396 = vadd.f32 %v113, %v395
    %v397 = vpop.f32.mrf.mxu0
    %v398 = vadd.f32 %v109, %v397
    %v399 = vpop.f32.mrf.mxu0
    %v400 = vadd.f32 %v113, %v399
    %401 = vmatprep.mubr.bf16.mxu0 0
    %402 = vmatmul.mubr.bf16.gmra.mxu0 %v198
    %v403 = vpop.f32.mrf.mxu0
    %v404 = vadd.f32 %v109, %v403
    %v405 = vpop.f32.mrf.mxu0
    %v406 = vadd.f32 %v113, %v405
    %v407 = vpop.f32.mrf.mxu0
    %v408 = vadd.f32 %v109, %v407
    %v409 = vpop.f32.mrf.mxu0
    %v410 = vadd.f32 %v113, %v409
    %411 = vmatprep.mubr.bf16.mxu0 0
    %412 = vmatmul.mubr.bf16.gmra.mxu0 %v201
    %v413 = vpop.f32.mrf.mxu0
    %v414 = vadd.f32 %v109, %v413
    %v415 = vpop.f32.mrf.mxu0
    %v416 = vadd.f32 %v113, %v415
    %v417 = vpop.f32.mrf.mxu0
    %v418 = vadd.f32 %v109, %v417
    %v419 = vpop.f32.mrf.mxu0
    %v420 = vadd.f32 %v113, %v419
    %421 = vdwg.mxu0
    %422 = vmatprep.subr.bf16.mxu0 0
    %423 = vmatpush1.bf16.msra.mxu0 0
    %424 = vmatprep.subr.bf16.mxu0 0
    %425 = vmatpush1.bf16.msra.mxu0 0
    %426 = vmatprep.subr.bf16.mxu0 0
    %427 = vmatpush1.bf16.msra.mxu0 0
    %428 = vmatprep.subr.bf16.mxu0 0
    %429 = vmatpush1.bf16.msra.mxu0 0
    %430 = vmatprep.subr.bf16.mxu0 0
    %431 = vmatpush1.bf16.msra.mxu0 0
    %432 = vmatprep.subr.bf16.mxu0 0
    %433 = vmatpush1.bf16.msra.mxu0 0
    %434 = vmatprep.subr.bf16.mxu0 0
    %435 = vmatpush1.bf16.msra.mxu0 0
    %436 = vmatprep.subr.bf16.mxu0 %v181
    %437 = vmatpush1.bf16.msra.mxu0 %v180
    %438 = vmatprep.subr.bf16.mxu0 0
    %439 = vmatpush2.bf16.msra.mxu0 0
    %440 = vmatprep.subr.bf16.mxu0 0
    %441 = vmatpush2.bf16.msra.mxu0 0
    %442 = vmatprep.subr.bf16.mxu0 0
    %443 = vmatpush2.bf16.msra.mxu0 0
    %444 = vmatprep.subr.bf16.mxu0 0
    %445 = vmatpush2.bf16.msra.mxu0 0
    %446 = vmatprep.subr.bf16.mxu0 0
    %447 = vmatpush2.bf16.msra.mxu0 0
    %448 = vmatprep.subr.bf16.mxu0 0
    %449 = vmatpush2.bf16.msra.mxu0 0
    %450 = vmatprep.subr.bf16.mxu0 0
    %451 = vmatpush2.bf16.msra.mxu0 0
    %452 = vmatprep.subr.bf16.mxu0 0
    %453 = vmatpush2.bf16.msra.mxu0 0
    %454 = vmatprep.mubr.bf16.mxu0 0
    %455 = vmatmul.mubr.bf16.gmra.mxu0 %v192
    %v456 = vpop.f32.mrf.mxu0
    %v457 = vadd.f32 %v117, %v456
    %v458 = vpop.f32.mrf.mxu0
    %v459 = vadd.f32 %v121, %v458
    %v460 = vpop.f32.mrf.mxu0
    %v461 = vadd.f32 %v117, %v460
    %v462 = vpop.f32.mrf.mxu0
    %v463 = vadd.f32 %v121, %v462
    %464 = vmatprep.mubr.bf16.mxu0 0
    %465 = vmatmul.mubr.bf16.gmra.mxu0 %v195
    %v466 = vpop.f32.mrf.mxu0
    %v467 = vadd.f32 %v117, %v466
    %v468 = vpop.f32.mrf.mxu0
    %v469 = vadd.f32 %v121, %v468
    %v470 = vpop.f32.mrf.mxu0
    %v471 = vadd.f32 %v117, %v470
    %v472 = vpop.f32.mrf.mxu0
    %v473 = vadd.f32 %v121, %v472
    %474 = vmatprep.mubr.bf16.mxu0 0
    %475 = vmatmul.mubr.bf16.gmra.mxu0 %v198
    %v476 = vpop.f32.mrf.mxu0
    %v477 = vadd.f32 %v117, %v476
    %v478 = vpop.f32.mrf.mxu0
    %v479 = vadd.f32 %v121, %v478
    %v480 = vpop.f32.mrf.mxu0
    %v481 = vadd.f32 %v117, %v480
    %v482 = vpop.f32.mrf.mxu0
    %v483 = vadd.f32 %v121, %v482
    %484 = vmatprep.mubr.bf16.mxu0 0
    %485 = vmatmul.mubr.bf16.gmra.mxu0 %v201
    %v486 = vpop.f32.mrf.mxu0
    %v487 = vadd.f32 %v117, %v486
    %v488 = vpop.f32.mrf.mxu0
    %v489 = vadd.f32 %v121, %v488
    %v490 = vpop.f32.mrf.mxu0
    %v491 = vadd.f32 %v117, %v490
    %v492 = vpop.f32.mrf.mxu0
    %v493 = vadd.f32 %v121, %v492
    %494 = vdwg.mxu0
    %495 = vst [vmem:[#allocation2] sm:$0xff] %v238
    %496 = vst [vmem:[#allocation2 + $0x8] sm:$0xff] %v240
    %497 = vst [vmem:[#allocation2 + $0x10] sm:$0xff] %v311
    %498 = vst [vmem:[#allocation2 + $0x18] sm:$0xff] %v313
    %499 = vst [vmem:[#allocation2 + $0x20] sm:$0xff] %v384
    %500 = vst [vmem:[#allocation2 + $0x28] sm:$0xff] %v386
    %501 = vst [vmem:[#allocation2 + $0x30] sm:$0xff] %v457
    %502 = vst [vmem:[#allocation2 + $0x38] sm:$0xff] %v459
    %503 = vst [vmem:[#allocation2 + $0x40] sm:$0xff] %v242
    %504 = vst [vmem:[#allocation2 + $0x48] sm:$0xff] %v244
    %505 = vst [vmem:[#allocation2 + $0x50] sm:$0xff] %v315
    %506 = vst [vmem:[#allocation2 + $0x58] sm:$0xff] %v317
    %507 = vst [vmem:[#allocation2 + $0x60] sm:$0xff] %v388
    %508 = vst [vmem:[#allocation2 + $0x68] sm:$0xff] %v390
    %509 = vst [vmem:[#allocation2 + $0x70] sm:$0xff] %v461
    %510 = vst [vmem:[#allocation2 + $0x78] sm:$0xff] %v463
    %511 = vst [vmem:[#allocation2 + $0x80] sm:$0xff] %v248
    %512 = vst [vmem:[#allocation2 + $0x88] sm:$0xff] %v250
    %513 = vst [vmem:[#allocation2 + $0x90] sm:$0xff] %v321
    %514 = vst [vmem:[#allocation2 + $0x98] sm:$0xff] %v323
    %515 = vst [vmem:[#allocation2 + $0xa0] sm:$0xff] %v394
    %516 = vst [vmem:[#allocation2 + $0xa8] sm:$0xff] %v396
    %517 = vst [vmem:[#allocation2 + $0xb0] sm:$0xff] %v467
    %518 = vst [vmem:[#allocation2 + $0xb8] sm:$0xff] %v469
    %519 = vst [vmem:[#allocation2 + $0xc0] sm:$0xff] %v252
    %520 = vst [vmem:[#allocation2 + $0xc8] sm:$0xff] %v254
    %521 = vst [vmem:[#allocation2 + $0xd0] sm:$0xff] %v325
    %522 = vst [vmem:[#allocation2 + $0xd8] sm:$0xff] %v327
    %523 = vst [vmem:[#allocation2 + $0xe0] sm:$0xff] %v398
    %524 = vst [vmem:[#allocation2 + $0xe8] sm:$0xff] %v400
    %525 = vst [vmem:[#allocation2 + $0xf0] sm:$0xff] %v471
    %526 = vst [vmem:[#allocation2 + $0xf8] sm:$0xff] %v473
    %527 = vst [vmem:[#allocation2 + $0x100] sm:$0xff] %v258
    %528 = vst [vmem:[#allocation2 + $0x108] sm:$0xff] %v260
    %529 = vst [vmem:[#allocation2 + $0x110] sm:$0xff] %v331
    %530 = vst [vmem:[#allocation2 + $0x118] sm:$0xff] %v333
    %531 = vst [vmem:[#allocation2 + $0x120] sm:$0xff] %v404
    %532 = vst [vmem:[#allocation2 + $0x128] sm:$0xff] %v406
    %533 = vst [vmem:[#allocation2 + $0x130] sm:$0xff] %v477
    %534 = vst [vmem:[#allocation2 + $0x138] sm:$0xff] %v479
    %535 = vst [vmem:[#allocation2 + $0x140] sm:$0xff] %v262
    %536 = vst [vmem:[#allocation2 + $0x148] sm:$0xff] %v264
    %537 = vst [vmem:[#allocation2 + $0x150] sm:$0xff] %v335
    %538 = vst [vmem:[#allocation2 + $0x158] sm:$0xff] %v337
    %539 = vst [vmem:[#allocation2 + $0x160] sm:$0xff] %v408
    %540 = vst [vmem:[#allocation2 + $0x168] sm:$0xff] %v410
    %541 = vst [vmem:[#allocation2 + $0x170] sm:$0xff] %v481
    %542 = vst [vmem:[#allocation2 + $0x178] sm:$0xff] %v483
    %543 = vst [vmem:[#allocation2 + $0x180] sm:$0xff] %v268
    %544 = vst [vmem:[#allocation2 + $0x188] sm:$0xff] %v270
    %545 = vst [vmem:[#allocation2 + $0x190] sm:$0xff] %v341
    %546 = vst [vmem:[#allocation2 + $0x198] sm:$0xff] %v343
    %547 = vst [vmem:[#allocation2 + $0x1a0] sm:$0xff] %v414
    %548 = vst [vmem:[#allocation2 + $0x1a8] sm:$0xff] %v416
    %549 = vst [vmem:[#allocation2 + $0x1b0] sm:$0xff] %v487
    %550 = vst [vmem:[#allocation2 + $0x1b8] sm:$0xff] %v489
    %551 = vst [vmem:[#allocation2 + $0x1c0] sm:$0xff] %v272
    %552 = vst [vmem:[#allocation2 + $0x1c8] sm:$0xff] %v274
    %553 = vst [vmem:[#allocation2 + $0x1d0] sm:$0xff] %v345
    %554 = vst [vmem:[#allocation2 + $0x1d8] sm:$0xff] %v347
    %555 = vst [vmem:[#allocation2 + $0x1e0] sm:$0xff] %v418
    %556 = vst [vmem:[#allocation2 + $0x1e8] sm:$0xff] %v420
    %557 = vst [vmem:[#allocation2 + $0x1f0] sm:$0xff] %v491
    %558 = vst [vmem:[#allocation2 + $0x1f8] sm:$0xff] %v493
    %v559 = vlaneseq
    %v560 = vand.u32 %v559, 127
    %v561 = vadd.s32 %v560, 128
    %v562 = vld [vmem:[#allocation3] sm:$0xff]
    %v563 = vld [vmem:[#allocation3 + $0x8] sm:$0xff]
    %v564 = vld [vmem:[#allocation6] sm:$0xff]
    %v565 = vld [vmem:[#allocation6 + $0x8] sm:$0xff]
    %v566 = vld [vmem:[#allocation2] sm:$0xff]
    %v567 = vld [vmem:[#allocation2 + $0x8] sm:$0xff]
    %v568 = vld [vmem:[#allocation2 + $0x10] sm:$0xff]
    %v569 = vld [vmem:[#allocation2 + $0x18] sm:$0xff]
    %v570 = vld [vmem:[#allocation2 + $0x20] sm:$0xff]
    %v571 = vld [vmem:[#allocation2 + $0x28] sm:$0xff]
    %v572 = vld [vmem:[#allocation2 + $0x30] sm:$0xff]
    %v573 = vld [vmem:[#allocation2 + $0x38] sm:$0xff]
    %v574 = vpack.c.bf16 %v562, %v562
    %v575 = vpack.c.bf16 %v563, %v563
    %v576 = vld [vmem:[#allocation8] sm:$0xff]
    %v577 = vld [vmem:[#allocation8 + $0x8] sm:$0xff]
    %v578 = vld [vmem:[#allocation8 + $0x10] sm:$0xff]
    %v579 = vld [vmem:[#allocation8 + $0x18] sm:$0xff]
    %v580 = vld [vmem:[#allocation8 + $0x20] sm:$0xff]
    %v581 = vld [vmem:[#allocation8 + $0x28] sm:$0xff]
    %v582 = vld [vmem:[#allocation8 + $0x30] sm:$0xff]
    %v583 = vld [vmem:[#allocation8 + $0x38] sm:$0xff]
    %v584 = vld [vmem:[#allocation8 + $0x40] sm:$0xff]
    %v585 = vld [vmem:[#allocation8 + $0x48] sm:$0xff]
    %v586 = vld [vmem:[#allocation8 + $0x50] sm:$0xff]
    %v587 = vld [vmem:[#allocation8 + $0x58] sm:$0xff]
    %v588 = vld [vmem:[#allocation8 + $0x60] sm:$0xff]
    %v589 = vld [vmem:[#allocation8 + $0x68] sm:$0xff]
    %v590 = vld [vmem:[#allocation8 + $0x70] sm:$0xff]
    %v591 = vld [vmem:[#allocation8 + $0x78] sm:$0xff]
    %v592 = vld [vmem:[#allocation8 + $0x80] sm:$0xff]
    %v593 = vld [vmem:[#allocation8 + $0x88] sm:$0xff]
    %v594 = vld [vmem:[#allocation8 + $0x90] sm:$0xff]
    %v595 = vld [vmem:[#allocation8 + $0x98] sm:$0xff]
    %v596 = vld [vmem:[#allocation8 + $0xa0] sm:$0xff]
    %v597 = vld [vmem:[#allocation8 + $0xa8] sm:$0xff]
    %v598 = vld [vmem:[#allocation8 + $0xb0] sm:$0xff]
    %v599 = vld [vmem:[#allocation8 + $0xb8] sm:$0xff]
    %v600 = vld [vmem:[#allocation8 + $0xc0] sm:$0xff]
    %v601 = vld [vmem:[#allocation8 + $0xc8] sm:$0xff]
    %v602 = vld [vmem:[#allocation8 + $0xd0] sm:$0xff]
    %v603 = vld [vmem:[#allocation8 + $0xd8] sm:$0xff]
    %v604 = vld [vmem:[#allocation8 + $0xe0] sm:$0xff]
    %v605 = vld [vmem:[#allocation8 + $0xe8] sm:$0xff]
    %v606 = vld [vmem:[#allocation8 + $0xf0] sm:$0xff]
    %v607 = vld [vmem:[#allocation8 + $0xf8] sm:$0xff]
    %v608 = vld [vmem:[#allocation8 + $0x100] sm:$0xff]
    %v609 = vld [vmem:[#allocation8 + $0x108] sm:$0xff]
    %v610 = vld [vmem:[#allocation8 + $0x110] sm:$0xff]
    %v611 = vld [vmem:[#allocation8 + $0x118] sm:$0xff]
    %v612 = vld [vmem:[#allocation8 + $0x120] sm:$0xff]
    %v613 = vld [vmem:[#allocation8 + $0x128] sm:$0xff]
    %v614 = vld [vmem:[#allocation8 + $0x130] sm:$0xff]
    %v615 = vld [vmem:[#allocation8 + $0x138] sm:$0xff]
    %v616 = vld [vmem:[#allocation8 + $0x140] sm:$0xff]
    %v617 = vld [vmem:[#allocation8 + $0x148] sm:$0xff]
    %v618 = vld [vmem:[#allocation8 + $0x150] sm:$0xff]
    %v619 = vld [vmem:[#allocation8 + $0x158] sm:$0xff]
    %v620 = vld [vmem:[#allocation8 + $0x160] sm:$0xff]
    %v621 = vld [vmem:[#allocation8 + $0x168] sm:$0xff]
    %v622 = vld [vmem:[#allocation8 + $0x170] sm:$0xff]
    %v623 = vld [vmem:[#allocation8 + $0x178] sm:$0xff]
    %v624 = vld [vmem:[#allocation8 + $0x180] sm:$0xff]
    %v625 = vld [vmem:[#allocation8 + $0x188] sm:$0xff]
    %v626 = vld [vmem:[#allocation8 + $0x190] sm:$0xff]
    %v627 = vld [vmem:[#allocation8 + $0x198] sm:$0xff]
    %v628 = vld [vmem:[#allocation8 + $0x1a0] sm:$0xff]
    %v629 = vld [vmem:[#allocation8 + $0x1a8] sm:$0xff]
    %v630 = vld [vmem:[#allocation8 + $0x1b0] sm:$0xff]
    %v631 = vld [vmem:[#allocation8 + $0x1b8] sm:$0xff]
    %v632 = vld [vmem:[#allocation8 + $0x1c0] sm:$0xff]
    %v633 = vld [vmem:[#allocation8 + $0x1c8] sm:$0xff]
    %v634 = vld [vmem:[#allocation8 + $0x1d0] sm:$0xff]
    %v635 = vld [vmem:[#allocation8 + $0x1d8] sm:$0xff]
    %v636 = vld [vmem:[#allocation8 + $0x1e0] sm:$0xff]
    %v637 = vld [vmem:[#allocation8 + $0x1e8] sm:$0xff]
    %v638 = vld [vmem:[#allocation8 + $0x1f0] sm:$0xff]
    %v639 = vld [vmem:[#allocation8 + $0x1f8] sm:$0xff]
    %v640 = vld [vmem:[#allocation8 + $0x200] sm:$0xff]
    %v641 = vld [vmem:[#allocation8 + $0x208] sm:$0xff]
    %v642 = vld [vmem:[#allocation8 + $0x210] sm:$0xff]
    %v643 = vld [vmem:[#allocation8 + $0x218] sm:$0xff]
    %v644 = vld [vmem:[#allocation8 + $0x220] sm:$0xff]
    %v645 = vld [vmem:[#allocation8 + $0x228] sm:$0xff]
    %v646 = vld [vmem:[#allocation8 + $0x230] sm:$0xff]
    %v647 = vld [vmem:[#allocation8 + $0x238] sm:$0xff]
    %v648 = vld [vmem:[#allocation8 + $0x240] sm:$0xff]
    %v649 = vld [vmem:[#allocation8 + $0x248] sm:$0xff]
    %v650 = vld [vmem:[#allocation8 + $0x250] sm:$0xff]
    %v651 = vld [vmem:[#allocation8 + $0x258] sm:$0xff]
    %v652 = vld [vmem:[#allocation8 + $0x260] sm:$0xff]
    %v653 = vld [vmem:[#allocation8 + $0x268] sm:$0xff]
    %v654 = vld [vmem:[#allocation8 + $0x270] sm:$0xff]
    %v655 = vld [vmem:[#allocation8 + $0x278] sm:$0xff]
    %v656 = vld [vmem:[#allocation8 + $0x280] sm:$0xff]
    %v657 = vld [vmem:[#allocation8 + $0x288] sm:$0xff]
    %v658 = vld [vmem:[#allocation8 + $0x290] sm:$0xff]
    %v659 = vld [vmem:[#allocation8 + $0x298] sm:$0xff]
    %v660 = vld [vmem:[#allocation8 + $0x2a0] sm:$0xff]
    %v661 = vld [vmem:[#allocation8 + $0x2a8] sm:$0xff]
    %v662 = vld [vmem:[#allocation8 + $0x2b0] sm:$0xff]
    %v663 = vld [vmem:[#allocation8 + $0x2b8] sm:$0xff]
    %v664 = vld [vmem:[#allocation8 + $0x2c0] sm:$0xff]
    %v665 = vld [vmem:[#allocation8 + $0x2c8] sm:$0xff]
    %v666 = vld [vmem:[#allocation8 + $0x2d0] sm:$0xff]
    %v667 = vld [vmem:[#allocation8 + $0x2d8] sm:$0xff]
    %v668 = vld [vmem:[#allocation8 + $0x2e0] sm:$0xff]
    %v669 = vld [vmem:[#allocation8 + $0x2e8] sm:$0xff]
    %v670 = vld [vmem:[#allocation8 + $0x2f0] sm:$0xff]
    %v671 = vld [vmem:[#allocation8 + $0x2f8] sm:$0xff]
    %v672 = vld [vmem:[#allocation8 + $0x300] sm:$0xff]
    %v673 = vld [vmem:[#allocation8 + $0x308] sm:$0xff]
    %v674 = vld [vmem:[#allocation8 + $0x310] sm:$0xff]
    %v675 = vld [vmem:[#allocation8 + $0x318] sm:$0xff]
    %v676 = vld [vmem:[#allocation8 + $0x320] sm:$0xff]
    %v677 = vld [vmem:[#allocation8 + $0x328] sm:$0xff]
    %v678 = vld [vmem:[#allocation8 + $0x330] sm:$0xff]
    %v679 = vld [vmem:[#allocation8 + $0x338] sm:$0xff]
    %v680 = vld [vmem:[#allocation8 + $0x340] sm:$0xff]
    %v681 = vld [vmem:[#allocation8 + $0x348] sm:$0xff]
    %v682 = vld [vmem:[#allocation8 + $0x350] sm:$0xff]
    %v683 = vld [vmem:[#allocation8 + $0x358] sm:$0xff]
    %v684 = vld [vmem:[#allocation8 + $0x360] sm:$0xff]
    %v685 = vld [vmem:[#allocation8 + $0x368] sm:$0xff]
    %v686 = vld [vmem:[#allocation8 + $0x370] sm:$0xff]
    %v687 = vld [vmem:[#allocation8 + $0x378] sm:$0xff]
    %v688 = vld [vmem:[#allocation8 + $0x380] sm:$0xff]
    %v689 = vld [vmem:[#allocation8 + $0x388] sm:$0xff]
    %v690 = vld [vmem:[#allocation8 + $0x390] sm:$0xff]
    %v691 = vld [vmem:[#allocation8 + $0x398] sm:$0xff]
    %v692 = vld [vmem:[#allocation8 + $0x3a0] sm:$0xff]
    %v693 = vld [vmem:[#allocation8 + $0x3a8] sm:$0xff]
    %v694 = vld [vmem:[#allocation8 + $0x3b0] sm:$0xff]
    %v695 = vld [vmem:[#allocation8 + $0x3b8] sm:$0xff]
    %v696 = vld [vmem:[#allocation8 + $0x3c0] sm:$0xff]
    %v697 = vld [vmem:[#allocation8 + $0x3c8] sm:$0xff]
    %v698 = vld [vmem:[#allocation8 + $0x3d0] sm:$0xff]
    %v699 = vld [vmem:[#allocation8 + $0x3d8] sm:$0xff]
    %v700 = vld [vmem:[#allocation8 + $0x3e0] sm:$0xff]
    %v701 = vld [vmem:[#allocation8 + $0x3e8] sm:$0xff]
    %v702 = vld [vmem:[#allocation8 + $0x3f0] sm:$0xff]
    %v703 = vld [vmem:[#allocation8 + $0x3f8] sm:$0xff]
    %v832 = vunpack.c.l.b16 %v576
    %v833 = vunpack.c.h.b16 %v576
    %v834 = vunpack.c.l.b16 %v577
    %v835 = vunpack.c.h.b16 %v577
    %v836 = vunpack.c.l.b16 %v578
    %v837 = vunpack.c.h.b16 %v578
    %v838 = vunpack.c.l.b16 %v579
    %v839 = vunpack.c.h.b16 %v579
    %v840 = vunpack.c.l.b16 %v580
    %v841 = vunpack.c.h.b16 %v580
    %v842 = vunpack.c.l.b16 %v581
    %v843 = vunpack.c.h.b16 %v581
    %v844 = vunpack.c.l.b16 %v582
    %v845 = vunpack.c.h.b16 %v582
    %v846 = vunpack.c.l.b16 %v583
    %v847 = vunpack.c.h.b16 %v583
    %v848 = vunpack.c.l.b16 %v584
    %v849 = vunpack.c.h.b16 %v584
    %v850 = vunpack.c.l.b16 %v585
    %v851 = vunpack.c.h.b16 %v585
    %v852 = vunpack.c.l.b16 %v586
    %v853 = vunpack.c.h.b16 %v586
    %v854 = vunpack.c.l.b16 %v587
    %v855 = vunpack.c.h.b16 %v587
    %v856 = vunpack.c.l.b16 %v588
    %v857 = vunpack.c.h.b16 %v588
    %v858 = vunpack.c.l.b16 %v589
    %v859 = vunpack.c.h.b16 %v589
    %v860 = vunpack.c.l.b16 %v590
    %v861 = vunpack.c.h.b16 %v590
    %v862 = vunpack.c.l.b16 %v591
    %v863 = vunpack.c.h.b16 %v591
    %v864 = vunpack.c.l.b16 %v592
    %v865 = vunpack.c.h.b16 %v592
    %v866 = vunpack.c.l.b16 %v593
    %v867 = vunpack.c.h.b16 %v593
    %v868 = vunpack.c.l.b16 %v594
    %v869 = vunpack.c.h.b16 %v594
    %v870 = vunpack.c.l.b16 %v595
    %v871 = vunpack.c.h.b16 %v595
    %v872 = vunpack.c.l.b16 %v596
    %v873 = vunpack.c.h.b16 %v596
    %v874 = vunpack.c.l.b16 %v597
    %v875 = vunpack.c.h.b16 %v597
    %v876 = vunpack.c.l.b16 %v598
    %v877 = vunpack.c.h.b16 %v598
    %v878 = vunpack.c.l.b16 %v599
    %v879 = vunpack.c.h.b16 %v599
    %v880 = vunpack.c.l.b16 %v600
    %v881 = vunpack.c.h.b16 %v600
    %v882 = vunpack.c.l.b16 %v601
    %v883 = vunpack.c.h.b16 %v601
    %v884 = vunpack.c.l.b16 %v602
    %v885 = vunpack.c.h.b16 %v602
    %v886 = vunpack.c.l.b16 %v603
    %v887 = vunpack.c.h.b16 %v603
    %v888 = vunpack.c.l.b16 %v604
    %v889 = vunpack.c.h.b16 %v604
    %v890 = vunpack.c.l.b16 %v605
    %v891 = vunpack.c.h.b16 %v605
    %v892 = vunpack.c.l.b16 %v606
    %v893 = vunpack.c.h.b16 %v606
    %v894 = vunpack.c.l.b16 %v607
    %v895 = vunpack.c.h.b16 %v607
    %v896 = vunpack.c.l.b16 %v608
    %v897 = vunpack.c.h.b16 %v608
    %v898 = vunpack.c.l.b16 %v609
    %v899 = vunpack.c.h.b16 %v609
    %v900 = vunpack.c.l.b16 %v610
    %v901 = vunpack.c.h.b16 %v610
    %v902 = vunpack.c.l.b16 %v611
    %v903 = vunpack.c.h.b16 %v611
    %v904 = vunpack.c.l.b16 %v612
    %v905 = vunpack.c.h.b16 %v612
    %v906 = vunpack.c.l.b16 %v613
    %v907 = vunpack.c.h.b16 %v613
    %v908 = vunpack.c.l.b16 %v614
    %v909 = vunpack.c.h.b16 %v614
    %v910 = vunpack.c.l.b16 %v615
    %v911 = vunpack.c.h.b16 %v615
    %v912 = vunpack.c.l.b16 %v616
    %v913 = vunpack.c.h.b16 %v616
    %v914 = vunpack.c.l.b16 %v617
    %v915 = vunpack.c.h.b16 %v617
    %v916 = vunpack.c.l.b16 %v618
    %v917 = vunpack.c.h.b16 %v618
    %v918 = vunpack.c.l.b16 %v619
    %v919 = vunpack.c.h.b16 %v619
    %v920 = vunpack.c.l.b16 %v620
    %v921 = vunpack.c.h.b16 %v620
    %v922 = vunpack.c.l.b16 %v621
    %v923 = vunpack.c.h.b16 %v621
    %v924 = vunpack.c.l.b16 %v622
    %v925 = vunpack.c.h.b16 %v622
    %v926 = vunpack.c.l.b16 %v623
    %v927 = vunpack.c.h.b16 %v623
    %v928 = vunpack.c.l.b16 %v624
    %v929 = vunpack.c.h.b16 %v624
    %v930 = vunpack.c.l.b16 %v625
    %v931 = vunpack.c.h.b16 %v625
    %v932 = vunpack.c.l.b16 %v626
    %v933 = vunpack.c.h.b16 %v626
    %v934 = vunpack.c.l.b16 %v627
    %v935 = vunpack.c.h.b16 %v627
    %v936 = vunpack.c.l.b16 %v628
    %v937 = vunpack.c.h.b16 %v628
    %v938 = vunpack.c.l.b16 %v629
    %v939 = vunpack.c.h.b16 %v629
    %v940 = vunpack.c.l.b16 %v630
    %v941 = vunpack.c.h.b16 %v630
    %v942 = vunpack.c.l.b16 %v631
    %v943 = vunpack.c.h.b16 %v631
    %v944 = vunpack.c.l.b16 %v632
    %v945 = vunpack.c.h.b16 %v632
    %v946 = vunpack.c.l.b16 %v633
    %v947 = vunpack.c.h.b16 %v633
    %v948 = vunpack.c.l.b16 %v634
    %v949 = vunpack.c.h.b16 %v634
    %v950 = vunpack.c.l.b16 %v635
    %v951 = vunpack.c.h.b16 %v635
    %v952 = vunpack.c.l.b16 %v636
    %v953 = vunpack.c.h.b16 %v636
    %v954 = vunpack.c.l.b16 %v637
    %v955 = vunpack.c.h.b16 %v637
    %v956 = vunpack.c.l.b16 %v638
    %v957 = vunpack.c.h.b16 %v638
    %v958 = vunpack.c.l.b16 %v639
    %v959 = vunpack.c.h.b16 %v639
    %v960 = vunpack.c.l.b16 %v640
    %v961 = vunpack.c.h.b16 %v640
    %v962 = vunpack.c.l.b16 %v641
    %v963 = vunpack.c.h.b16 %v641
    %v964 = vunpack.c.l.b16 %v642
    %v965 = vunpack.c.h.b16 %v642
    %v966 = vunpack.c.l.b16 %v643
    %v967 = vunpack.c.h.b16 %v643
    %v968 = vunpack.c.l.b16 %v644
    %v969 = vunpack.c.h.b16 %v644
    %v970 = vunpack.c.l.b16 %v645
    %v971 = vunpack.c.h.b16 %v645
    %v972 = vunpack.c.l.b16 %v646
    %v973 = vunpack.c.h.b16 %v646
    %v974 = vunpack.c.l.b16 %v647
    %v975 = vunpack.c.h.b16 %v647
    %v976 = vunpack.c.l.b16 %v648
    %v977 = vunpack.c.h.b16 %v648
    %v978 = vunpack.c.l.b16 %v649
    %v979 = vunpack.c.h.b16 %v649
    %v980 = vunpack.c.l.b16 %v650
    %v981 = vunpack.c.h.b16 %v650
    %v982 = vunpack.c.l.b16 %v651
    %v983 = vunpack.c.h.b16 %v651
    %v984 = vunpack.c.l.b16 %v652
    %v985 = vunpack.c.h.b16 %v652
    %v986 = vunpack.c.l.b16 %v653
    %v987 = vunpack.c.h.b16 %v653
    %v988 = vunpack.c.l.b16 %v654
    %v989 = vunpack.c.h.b16 %v654
    %v990 = vunpack.c.l.b16 %v655
    %v991 = vunpack.c.h.b16 %v655
    %v992 = vunpack.c.l.b16 %v656
    %v993 = vunpack.c.h.b16 %v656
    %v994 = vunpack.c.l.b16 %v657
    %v995 = vunpack.c.h.b16 %v657
    %v996 = vunpack.c.l.b16 %v658
    %v997 = vunpack.c.h.b16 %v658
    %v998 = vunpack.c.l.b16 %v659
    %v999 = vunpack.c.h.b16 %v659
    %v1000 = vunpack.c.l.b16 %v660
    %v1001 = vunpack.c.h.b16 %v660
    %v1002 = vunpack.c.l.b16 %v661
    %v1003 = vunpack.c.h.b16 %v661
    %v1004 = vunpack.c.l.b16 %v662
    %v1005 = vunpack.c.h.b16 %v662
    %v1006 = vunpack.c.l.b16 %v663
    %v1007 = vunpack.c.h.b16 %v663
    %v1008 = vunpack.c.l.b16 %v664
    %v1009 = vunpack.c.h.b16 %v664
    %v1010 = vunpack.c.l.b16 %v665
    %v1011 = vunpack.c.h.b16 %v665
    %v1012 = vunpack.c.l.b16 %v666
    %v1013 = vunpack.c.h.b16 %v666
    %v1014 = vunpack.c.l.b16 %v667
    %v1015 = vunpack.c.h.b16 %v667
    %v1016 = vunpack.c.l.b16 %v668
    %v1017 = vunpack.c.h.b16 %v668
    %v1018 = vunpack.c.l.b16 %v669
    %v1019 = vunpack.c.h.b16 %v669
    %v1020 = vunpack.c.l.b16 %v670
    %v1021 = vunpack.c.h.b16 %v670
    %v1022 = vunpack.c.l.b16 %v671
    %v1023 = vunpack.c.h.b16 %v671
    %v1024 = vunpack.c.l.b16 %v672
    %v1025 = vunpack.c.h.b16 %v672
    %v1026 = vunpack.c.l.b16 %v673
    %v1027 = vunpack.c.h.b16 %v673
    %v1028 = vunpack.c.l.b16 %v674
    %v1029 = vunpack.c.h.b16 %v674
    %v1030 = vunpack.c.l.b16 %v675
    %v1031 = vunpack.c.h.b16 %v675
    %v1032 = vunpack.c.l.b16 %v676
    %v1033 = vunpack.c.h.b16 %v676
    %v1034 = vunpack.c.l.b16 %v677
    %v1035 = vunpack.c.h.b16 %v677
    %v1036 = vunpack.c.l.b16 %v678
    %v1037 = vunpack.c.h.b16 %v678
    %v1038 = vunpack.c.l.b16 %v679
    %v1039 = vunpack.c.h.b16 %v679
    %v1040 = vunpack.c.l.b16 %v680
    %v1041 = vunpack.c.h.b16 %v680
    %v1042 = vunpack.c.l.b16 %v681
    %v1043 = vunpack.c.h.b16 %v681
    %v1044 = vunpack.c.l.b16 %v682
    %v1045 = vunpack.c.h.b16 %v682
    %v1046 = vunpack.c.l.b16 %v683
    %v1047 = vunpack.c.h.b16 %v683
    %v1048 = vunpack.c.l.b16 %v684
    %v1049 = vunpack.c.h.b16 %v684
    %v1050 = vunpack.c.l.b16 %v685
    %v1051 = vunpack.c.h.b16 %v685
    %v1052 = vunpack.c.l.b16 %v686
    %v1053 = vunpack.c.h.b16 %v686
    %v1054 = vunpack.c.l.b16 %v687
    %v1055 = vunpack.c.h.b16 %v687
    %v1056 = vunpack.c.l.b16 %v688
    %v1057 = vunpack.c.h.b16 %v688
    %v1058 = vunpack.c.l.b16 %v689
    %v1059 = vunpack.c.h.b16 %v689
    %v1060 = vunpack.c.l.b16 %v690
    %v1061 = vunpack.c.h.b16 %v690
    %v1062 = vunpack.c.l.b16 %v691
    %v1063 = vunpack.c.h.b16 %v691
    %v1064 = vunpack.c.l.b16 %v692
    %v1065 = vunpack.c.h.b16 %v692
    %v1066 = vunpack.c.l.b16 %v693
    %v1067 = vunpack.c.h.b16 %v693
    %v1068 = vunpack.c.l.b16 %v694
    %v1069 = vunpack.c.h.b16 %v694
    %v1070 = vunpack.c.l.b16 %v695
    %v1071 = vunpack.c.h.b16 %v695
    %v1072 = vunpack.c.l.b16 %v696
    %v1073 = vunpack.c.h.b16 %v696
    %v1074 = vunpack.c.l.b16 %v697
    %v1075 = vunpack.c.h.b16 %v697
    %v1076 = vunpack.c.l.b16 %v698
    %v1077 = vunpack.c.h.b16 %v698
    %v1078 = vunpack.c.l.b16 %v699
    %v1079 = vunpack.c.h.b16 %v699
    %v1080 = vunpack.c.l.b16 %v700
    %v1081 = vunpack.c.h.b16 %v700
    %v1082 = vunpack.c.l.b16 %v701
    %v1083 = vunpack.c.h.b16 %v701
    %v1084 = vunpack.c.l.b16 %v702
    %v1085 = vunpack.c.h.b16 %v702
    %v1086 = vunpack.c.l.b16 %v703
    %v1087 = vunpack.c.h.b16 %v703
    %v1088 = vpack.c.b16 %v840, %v832
    %v1089 = vpack.c.b16 %v841, %v833
    %v1090 = vpack.c.b16 %v842, %v834
    %v1091 = vpack.c.b16 %v843, %v835
    %v1092 = vpack.c.b16 %v844, %v836
    %v1093 = vpack.c.b16 %v845, %v837
    %v1094 = vpack.c.b16 %v846, %v838
    %v1095 = vpack.c.b16 %v847, %v839
    %v1096 = vpack.c.b16 %v856, %v848
    %v1097 = vpack.c.b16 %v857, %v849
    %v1098 = vpack.c.b16 %v858, %v850
    %v1099 = vpack.c.b16 %v859, %v851
    %v1100 = vpack.c.b16 %v860, %v852
    %v1101 = vpack.c.b16 %v861, %v853
    %v1102 = vpack.c.b16 %v862, %v854
    %v1103 = vpack.c.b16 %v863, %v855
    %v1104 = vpack.c.b16 %v872, %v864
    %v1105 = vpack.c.b16 %v873, %v865
    %v1106 = vpack.c.b16 %v874, %v866
    %v1107 = vpack.c.b16 %v875, %v867
    %v1108 = vpack.c.b16 %v876, %v868
    %v1109 = vpack.c.b16 %v877, %v869
    %v1110 = vpack.c.b16 %v878, %v870
    %v1111 = vpack.c.b16 %v879, %v871
    %v1112 = vpack.c.b16 %v888, %v880
    %v1113 = vpack.c.b16 %v889, %v881
    %v1114 = vpack.c.b16 %v890, %v882
    %v1115 = vpack.c.b16 %v891, %v883
    %v1116 = vpack.c.b16 %v892, %v884
    %v1117 = vpack.c.b16 %v893, %v885
    %v1118 = vpack.c.b16 %v894, %v886
    %v1119 = vpack.c.b16 %v895, %v887
    %v1120 = vpack.c.b16 %v904, %v896
    %v1121 = vpack.c.b16 %v905, %v897
    %v1122 = vpack.c.b16 %v906, %v898
    %v1123 = vpack.c.b16 %v907, %v899
    %v1124 = vpack.c.b16 %v908, %v900
    %v1125 = vpack.c.b16 %v909, %v901
    %v1126 = vpack.c.b16 %v910, %v902
    %v1127 = vpack.c.b16 %v911, %v903
    %v1128 = vpack.c.b16 %v920, %v912
    %v1129 = vpack.c.b16 %v921, %v913
    %v1130 = vpack.c.b16 %v922, %v914
    %v1131 = vpack.c.b16 %v923, %v915
    %v1132 = vpack.c.b16 %v924, %v916
    %v1133 = vpack.c.b16 %v925, %v917
    %v1134 = vpack.c.b16 %v926, %v918
    %v1135 = vpack.c.b16 %v927, %v919
    %v1136 = vpack.c.b16 %v936, %v928
    %v1137 = vpack.c.b16 %v937, %v929
    %v1138 = vpack.c.b16 %v938, %v930
    %v1139 = vpack.c.b16 %v939, %v931
    %v1140 = vpack.c.b16 %v940, %v932
    %v1141 = vpack.c.b16 %v941, %v933
    %v1142 = vpack.c.b16 %v942, %v934
    %v1143 = vpack.c.b16 %v943, %v935
    %v1144 = vpack.c.b16 %v952, %v944
    %v1145 = vpack.c.b16 %v953, %v945
    %v1146 = vpack.c.b16 %v954, %v946
    %v1147 = vpack.c.b16 %v955, %v947
    %v1148 = vpack.c.b16 %v956, %v948
    %v1149 = vpack.c.b16 %v957, %v949
    %v1150 = vpack.c.b16 %v958, %v950
    %v1151 = vpack.c.b16 %v959, %v951
    %v1152 = vpack.c.b16 %v968, %v960
    %v1153 = vpack.c.b16 %v969, %v961
    %v1154 = vpack.c.b16 %v970, %v962
    %v1155 = vpack.c.b16 %v971, %v963
    %v1156 = vpack.c.b16 %v972, %v964
    %v1157 = vpack.c.b16 %v973, %v965
    %v1158 = vpack.c.b16 %v974, %v966
    %v1159 = vpack.c.b16 %v975, %v967
    %v1160 = vpack.c.b16 %v984, %v976
    %v1161 = vpack.c.b16 %v985, %v977
    %v1162 = vpack.c.b16 %v986, %v978
    %v1163 = vpack.c.b16 %v987, %v979
    %v1164 = vpack.c.b16 %v988, %v980
    %v1165 = vpack.c.b16 %v989, %v981
    %v1166 = vpack.c.b16 %v990, %v982
    %v1167 = vpack.c.b16 %v991, %v983
    %v1168 = vpack.c.b16 %v1000, %v992
    %v1169 = vpack.c.b16 %v1001, %v993
    %v1170 = vpack.c.b16 %v1002, %v994
    %v1171 = vpack.c.b16 %v1003, %v995
    %v1172 = vpack.c.b16 %v1004, %v996
    %v1173 = vpack.c.b16 %v1005, %v997
    %v1174 = vpack.c.b16 %v1006, %v998
    %v1175 = vpack.c.b16 %v1007, %v999
    %v1176 = vpack.c.b16 %v1016, %v1008
    %v1177 = vpack.c.b16 %v1017, %v1009
    %v1178 = vpack.c.b16 %v1018, %v1010
    %v1179 = vpack.c.b16 %v1019, %v1011
    %v1180 = vpack.c.b16 %v1020, %v1012
    %v1181 = vpack.c.b16 %v1021, %v1013
    %v1182 = vpack.c.b16 %v1022, %v1014
    %v1183 = vpack.c.b16 %v1023, %v1015
    %v1184 = vpack.c.b16 %v1032, %v1024
    %v1185 = vpack.c.b16 %v1033, %v1025
    %v1186 = vpack.c.b16 %v1034, %v1026
    %v1187 = vpack.c.b16 %v1035, %v1027
    %v1188 = vpack.c.b16 %v1036, %v1028
    %v1189 = vpack.c.b16 %v1037, %v1029
    %v1190 = vpack.c.b16 %v1038, %v1030
    %v1191 = vpack.c.b16 %v1039, %v1031
    %v1192 = vpack.c.b16 %v1048, %v1040
    %v1193 = vpack.c.b16 %v1049, %v1041
    %v1194 = vpack.c.b16 %v1050, %v1042
    %v1195 = vpack.c.b16 %v1051, %v1043
    %v1196 = vpack.c.b16 %v1052, %v1044
    %v1197 = vpack.c.b16 %v1053, %v1045
    %v1198 = vpack.c.b16 %v1054, %v1046
    %v1199 = vpack.c.b16 %v1055, %v1047
    %v1200 = vpack.c.b16 %v1064, %v1056
    %v1201 = vpack.c.b16 %v1065, %v1057
    %v1202 = vpack.c.b16 %v1066, %v1058
    %v1203 = vpack.c.b16 %v1067, %v1059
    %v1204 = vpack.c.b16 %v1068, %v1060
    %v1205 = vpack.c.b16 %v1069, %v1061
    %v1206 = vpack.c.b16 %v1070, %v1062
    %v1207 = vpack.c.b16 %v1071, %v1063
    %v1208 = vpack.c.b16 %v1080, %v1072
    %v1209 = vpack.c.b16 %v1081, %v1073
    %v1210 = vpack.c.b16 %v1082, %v1074
    %v1211 = vpack.c.b16 %v1083, %v1075
    %v1212 = vpack.c.b16 %v1084, %v1076
    %v1213 = vpack.c.b16 %v1085, %v1077
    %v1214 = vpack.c.b16 %v1086, %v1078
    %v1215 = vpack.c.b16 %v1087, %v1079
    %1344 = vmatprep.subr.bf16.mxu0 %v1145
    %1345 = vmatpush1.bf16.msra.mxu0 %v1144
    %1346 = vmatprep.subr.bf16.mxu0 %v1137
    %1347 = vmatpush1.bf16.msra.mxu0 %v1136
    %1348 = vmatprep.subr.bf16.mxu0 %v1129
    %1349 = vmatpush1.bf16.msra.mxu0 %v1128
    %1350 = vmatprep.subr.bf16.mxu0 %v1121
    %1351 = vmatpush1.bf16.msra.mxu0 %v1120
    %1352 = vmatprep.subr.bf16.mxu0 %v1113
    %1353 = vmatpush1.bf16.msra.mxu0 %v1112
    %1354 = vmatprep.subr.bf16.mxu0 %v1105
    %1355 = vmatpush1.bf16.msra.mxu0 %v1104
    %1356 = vmatprep.subr.bf16.mxu0 %v1097
    %1357 = vmatpush1.bf16.msra.mxu0 %v1096
    %1358 = vmatprep.subr.bf16.mxu0 %v1089
    %1359 = vmatpush1.bf16.msra.mxu0 %v1088
    %1360 = vmatprep.subr.bf16.mxu0 %v1209
    %1361 = vmatpush2.bf16.msra.mxu0 %v1208
    %1362 = vmatprep.subr.bf16.mxu0 %v1201
    %1363 = vmatpush2.bf16.msra.mxu0 %v1200
    %1364 = vmatprep.subr.bf16.mxu0 %v1193
    %1365 = vmatpush2.bf16.msra.mxu0 %v1192
    %1366 = vmatprep.subr.bf16.mxu0 %v1185
    %1367 = vmatpush2.bf16.msra.mxu0 %v1184
    %1368 = vmatprep.subr.bf16.mxu0 %v1177
    %1369 = vmatpush2.bf16.msra.mxu0 %v1176
    %1370 = vmatprep.subr.bf16.mxu0 %v1169
    %1371 = vmatpush2.bf16.msra.mxu0 %v1168
    %1372 = vmatprep.subr.bf16.mxu0 %v1161
    %1373 = vmatpush2.bf16.msra.mxu0 %v1160
    %1374 = vmatprep.subr.bf16.mxu0 %v1153
    %1375 = vmatpush2.bf16.msra.mxu0 %v1152
    %1376 = vmatprep.mubr.bf16.mxu0 %v575
    %1377 = vmatmul.mubr.bf16.gmra.mxu0 %v574
    %v1378 = vpop.f32.mrf.mxu0
    %v1379 = vadd.f32 0.0, %v1378
    %v1380 = vpop.f32.mrf.mxu0
    %v1381 = vadd.f32 0.0, %v1380
    %v1382 = vpop.f32.mrf.mxu0
    %v1383 = vpop.f32.mrf.mxu0
    %1384 = vdwg.mxu0
    %1385 = vmatprep.subr.bf16.mxu0 %v1147
    %1386 = vmatpush1.bf16.msra.mxu0 %v1146
    %1387 = vmatprep.subr.bf16.mxu0 %v1139
    %1388 = vmatpush1.bf16.msra.mxu0 %v1138
    %1389 = vmatprep.subr.bf16.mxu0 %v1131
    %1390 = vmatpush1.bf16.msra.mxu0 %v1130
    %1391 = vmatprep.subr.bf16.mxu0 %v1123
    %1392 = vmatpush1.bf16.msra.mxu0 %v1122
    %1393 = vmatprep.subr.bf16.mxu0 %v1115
    %1394 = vmatpush1.bf16.msra.mxu0 %v1114
    %1395 = vmatprep.subr.bf16.mxu0 %v1107
    %1396 = vmatpush1.bf16.msra.mxu0 %v1106
    %1397 = vmatprep.subr.bf16.mxu0 %v1099
    %1398 = vmatpush1.bf16.msra.mxu0 %v1098
    %1399 = vmatprep.subr.bf16.mxu0 %v1091
    %1400 = vmatpush1.bf16.msra.mxu0 %v1090
    %1401 = vmatprep.subr.bf16.mxu0 %v1211
    %1402 = vmatpush2.bf16.msra.mxu0 %v1210
    %1403 = vmatprep.subr.bf16.mxu0 %v1203
    %1404 = vmatpush2.bf16.msra.mxu0 %v1202
    %1405 = vmatprep.subr.bf16.mxu0 %v1195
    %1406 = vmatpush2.bf16.msra.mxu0 %v1194
    %1407 = vmatprep.subr.bf16.mxu0 %v1187
    %1408 = vmatpush2.bf16.msra.mxu0 %v1186
    %1409 = vmatprep.subr.bf16.mxu0 %v1179
    %1410 = vmatpush2.bf16.msra.mxu0 %v1178
    %1411 = vmatprep.subr.bf16.mxu0 %v1171
    %1412 = vmatpush2.bf16.msra.mxu0 %v1170
    %1413 = vmatprep.subr.bf16.mxu0 %v1163
    %1414 = vmatpush2.bf16.msra.mxu0 %v1162
    %1415 = vmatprep.subr.bf16.mxu0 %v1155
    %1416 = vmatpush2.bf16.msra.mxu0 %v1154
    %1417 = vmatprep.mubr.bf16.mxu0 %v575
    %1418 = vmatmul.mubr.bf16.gmra.mxu0 %v574
    %v1419 = vpop.f32.mrf.mxu0
    %v1420 = vadd.f32 0.0, %v1419
    %v1421 = vpop.f32.mrf.mxu0
    %v1422 = vadd.f32 0.0, %v1421
    %v1423 = vpop.f32.mrf.mxu0
    %v1424 = vpop.f32.mrf.mxu0
    %1425 = vdwg.mxu0
    %1426 = vmatprep.subr.bf16.mxu0 %v1149
    %1427 = vmatpush1.bf16.msra.mxu0 %v1148
    %1428 = vmatprep.subr.bf16.mxu0 %v1141
    %1429 = vmatpush1.bf16.msra.mxu0 %v1140
    %1430 = vmatprep.subr.bf16.mxu0 %v1133
    %1431 = vmatpush1.bf16.msra.mxu0 %v1132
    %1432 = vmatprep.subr.bf16.mxu0 %v1125
    %1433 = vmatpush1.bf16.msra.mxu0 %v1124
    %1434 = vmatprep.subr.bf16.mxu0 %v1117
    %1435 = vmatpush1.bf16.msra.mxu0 %v1116
    %1436 = vmatprep.subr.bf16.mxu0 %v1109
    %1437 = vmatpush1.bf16.msra.mxu0 %v1108
    %1438 = vmatprep.subr.bf16.mxu0 %v1101
    %1439 = vmatpush1.bf16.msra.mxu0 %v1100
    %1440 = vmatprep.subr.bf16.mxu0 %v1093
    %1441 = vmatpush1.bf16.msra.mxu0 %v1092
    %1442 = vmatprep.subr.bf16.mxu0 %v1213
    %1443 = vmatpush2.bf16.msra.mxu0 %v1212
    %1444 = vmatprep.subr.bf16.mxu0 %v1205
    %1445 = vmatpush2.bf16.msra.mxu0 %v1204
    %1446 = vmatprep.subr.bf16.mxu0 %v1197
    %1447 = vmatpush2.bf16.msra.mxu0 %v1196
    %1448 = vmatprep.subr.bf16.mxu0 %v1189
    %1449 = vmatpush2.bf16.msra.mxu0 %v1188
    %1450 = vmatprep.subr.bf16.mxu0 %v1181
    %1451 = vmatpush2.bf16.msra.mxu0 %v1180
    %1452 = vmatprep.subr.bf16.mxu0 %v1173
    %1453 = vmatpush2.bf16.msra.mxu0 %v1172
    %1454 = vmatprep.subr.bf16.mxu0 %v1165
    %1455 = vmatpush2.bf16.msra.mxu0 %v1164
    %1456 = vmatprep.subr.bf16.mxu0 %v1157
    %1457 = vmatpush2.bf16.msra.mxu0 %v1156
    %1458 = vmatprep.mubr.bf16.mxu0 %v575
    %1459 = vmatmul.mubr.bf16.gmra.mxu0 %v574
    %v1460 = vpop.f32.mrf.mxu0
    %v1461 = vadd.f32 0.0, %v1460
    %v1462 = vpop.f32.mrf.mxu0
    %v1463 = vadd.f32 0.0, %v1462
    %v1464 = vpop.f32.mrf.mxu0
    %v1465 = vpop.f32.mrf.mxu0
    %1466 = vdwg.mxu0
    %1467 = vmatprep.subr.bf16.mxu0 %v1151
    %1468 = vmatpush1.bf16.msra.mxu0 %v1150
    %1469 = vmatprep.subr.bf16.mxu0 %v1143
    %1470 = vmatpush1.bf16.msra.mxu0 %v1142
    %1471 = vmatprep.subr.bf16.mxu0 %v1135
    %1472 = vmatpush1.bf16.msra.mxu0 %v1134
    %1473 = vmatprep.subr.bf16.mxu0 %v1127
    %1474 = vmatpush1.bf16.msra.mxu0 %v1126
    %1475 = vmatprep.subr.bf16.mxu0 %v1119
    %1476 = vmatpush1.bf16.msra.mxu0 %v1118
    %1477 = vmatprep.subr.bf16.mxu0 %v1111
    %1478 = vmatpush1.bf16.msra.mxu0 %v1110
    %1479 = vmatprep.subr.bf16.mxu0 %v1103
    %1480 = vmatpush1.bf16.msra.mxu0 %v1102
    %1481 = vmatprep.subr.bf16.mxu0 %v1095
    %1482 = vmatpush1.bf16.msra.mxu0 %v1094
    %1483 = vmatprep.subr.bf16.mxu0 %v1215
    %1484 = vmatpush2.bf16.msra.mxu0 %v1214
    %1485 = vmatprep.subr.bf16.mxu0 %v1207
    %1486 = vmatpush2.bf16.msra.mxu0 %v1206
    %1487 = vmatprep.subr.bf16.mxu0 %v1199
    %1488 = vmatpush2.bf16.msra.mxu0 %v1198
    %1489 = vmatprep.subr.bf16.mxu0 %v1191
    %1490 = vmatpush2.bf16.msra.mxu0 %v1190
    %1491 = vmatprep.subr.bf16.mxu0 %v1183
    %1492 = vmatpush2.bf16.msra.mxu0 %v1182
    %1493 = vmatprep.subr.bf16.mxu0 %v1175
    %1494 = vmatpush2.bf16.msra.mxu0 %v1174
    %1495 = vmatprep.subr.bf16.mxu0 %v1167
    %1496 = vmatpush2.bf16.msra.mxu0 %v1166
    %1497 = vmatprep.subr.bf16.mxu0 %v1159
    %1498 = vmatpush2.bf16.msra.mxu0 %v1158
    %1499 = vmatprep.mubr.bf16.mxu0 %v575
    %1500 = vmatmul.mubr.bf16.gmra.mxu0 %v574
    %v1501 = vpop.f32.mrf.mxu0
    %v1502 = vadd.f32 0.0, %v1501
    %v1503 = vpop.f32.mrf.mxu0
    %v1504 = vadd.f32 0.0, %v1503
    %v1505 = vpop.f32.mrf.mxu0
    %v1506 = vpop.f32.mrf.mxu0
    %1507 = vdwg.mxu0
    %v1508 = vadd.f32 %v566, %v1379
    %v1509 = vadd.f32 %v567, %v1381
    %v1510 = vadd.f32 %v568, %v1420
    %v1511 = vadd.f32 %v569, %v1422
    %v1512 = vadd.f32 %v570, %v1461
    %v1513 = vadd.f32 %v571, %v1463
    %v1514 = vadd.f32 %v572, %v1502
    %v1515 = vadd.f32 %v573, %v1504
    %v1516 = vxor.u32 %v1508, 2147483648
    %v1517 = vxor.u32 %v1509, 2147483648
    %v1518 = vxor.u32 %v1510, 2147483648
    %v1519 = vxor.u32 %v1511, 2147483648
    %v1520 = vxor.u32 %v1512, 2147483648
    %v1521 = vxor.u32 %v1513, 2147483648
    %v1522 = vxor.u32 %v1514, 2147483648
    %v1523 = vxor.u32 %v1515, 2147483648
    %v1524 = vmul.f32 %v1516, 1.442695
    %v1525 = vpow.pop %v1524
    %v1526 = vmul.f32 %v1517, 1.442695
    %v1527 = vpow.pop %v1526
    %v1528 = vmul.f32 %v1518, 1.442695
    %v1529 = vpow.pop %v1528
    %v1530 = vmul.f32 %v1519, 1.442695
    %v1531 = vpow.pop %v1530
    %v1532 = vmul.f32 %v1520, 1.442695
    %v1533 = vpow.pop %v1532
    %v1534 = vmul.f32 %v1521, 1.442695
    %v1535 = vpow.pop %v1534
    %v1536 = vmul.f32 %v1522, 1.442695
    %v1537 = vpow.pop %v1536
    %v1538 = vmul.f32 %v1523, 1.442695
    %v1539 = vpow.pop %v1538
    %v1540 = vadd.f32 %v1525, 1.0
    %v1541 = vadd.f32 %v1527, 1.0
    %v1542 = vadd.f32 %v1529, 1.0
    %v1543 = vadd.f32 %v1531, 1.0
    %v1544 = vadd.f32 %v1533, 1.0
    %v1545 = vadd.f32 %v1535, 1.0
    %v1546 = vadd.f32 %v1537, 1.0
    %v1547 = vadd.f32 %v1539, 1.0
    %v1548 = vrcp.pop %v1540
    %v1549 = vmul.f32 1.0, %v1548
    %v1550 = vrcp.pop %v1541
    %v1551 = vmul.f32 1.0, %v1550
    %v1552 = vrcp.pop %v1542
    %v1553 = vmul.f32 1.0, %v1552
    %v1554 = vrcp.pop %v1543
    %v1555 = vmul.f32 1.0, %v1554
    %v1556 = vrcp.pop %v1544
    %v1557 = vmul.f32 1.0, %v1556
    %v1558 = vrcp.pop %v1545
    %v1559 = vmul.f32 1.0, %v1558
    %v1560 = vrcp.pop %v1546
    %v1561 = vmul.f32 1.0, %v1560
    %v1562 = vrcp.pop %v1547
    %v1563 = vmul.f32 1.0, %v1562
    %v1564 = vmul.f32 %v1557, 2.0
    %v1565 = vmul.f32 %v1559, 2.0
    %v1566 = vsub.f32 %v1564, 1.0
    %v1567 = vsub.f32 %v1565, 1.0
    %v1568 = vmul.f32 %v1553, %v564
    %v1569 = vmul.f32 %v1555, %v565
    %v1570 = vmul.f32 %v1549, %v1566
    %v1571 = vmul.f32 %v1551, %v1567
    %v1572 = vadd.f32 %v1568, %v1570
    %v1573 = vadd.f32 %v1569, %v1571
    %v1574 = vtanh.pop %v1572
    %v1575 = vtanh.pop %v1573
    %v1576 = vmul.f32 %v1561, %v1574
    %v1577 = vmul.f32 %v1563, %v1575
    %vm1578 = vcmp.ge.s32.totalorder %v560, 0
    %vm1579 = vcmp.ge.s32.totalorder %v561, 0
    %vm1580 = vcmp.lt.s32.totalorder %v560, 32
    %vm1581 = vcmp.lt.s32.totalorder %v561, 32
    %vm1582 = vmand %vm1578, %vm1580
    %vm1583 = vmand %vm1579, %vm1581
    %v1584 = vsel %vm1582, %v1576, %v562
    %v1585 = vsel %vm1583, %v1577, %v563
    %v1586 = vsel %vm1582, %v1572, %v564
    %v1587 = vsel %vm1583, %v1573, %v565
    %v1588 = vld [vmem:[#allocation2 + $0x40] sm:$0xff]
    %v1589 = vld [vmem:[#allocation2 + $0x48] sm:$0xff]
    %v1590 = vld [vmem:[#allocation2 + $0x50] sm:$0xff]
    %v1591 = vld [vmem:[#allocation2 + $0x58] sm:$0xff]
    %v1592 = vld [vmem:[#allocation2 + $0x60] sm:$0xff]
    %v1593 = vld [vmem:[#allocation2 + $0x68] sm:$0xff]
    %v1594 = vld [vmem:[#allocation2 + $0x70] sm:$0xff]
    %v1595 = vld [vmem:[#allocation2 + $0x78] sm:$0xff]
    %v1596 = vpack.c.bf16 %v1584, %v1584
    %v1597 = vpack.c.bf16 %v1585, %v1585
    %1598 = vmatprep.subr.bf16.mxu0 %v1145
    %1599 = vmatpush1.bf16.msra.mxu0 %v1144
    %1600 = vmatprep.subr.bf16.mxu0 %v1137
    %1601 = vmatpush1.bf16.msra.mxu0 %v1136
    %1602 = vmatprep.subr.bf16.mxu0 %v1129
    %1603 = vmatpush1.bf16.msra.mxu0 %v1128
    %1604 = vmatprep.subr.bf16.mxu0 %v1121
    %1605 = vmatpush1.bf16.msra.mxu0 %v1120
    %1606 = vmatprep.subr.bf16.mxu0 %v1113
    %1607 = vmatpush1.bf16.msra.mxu0 %v1112
    %1608 = vmatprep.subr.bf16.mxu0 %v1105
    %1609 = vmatpush1.bf16.msra.mxu0 %v1104
    %1610 = vmatprep.subr.bf16.mxu0 %v1097
    %1611 = vmatpush1.bf16.msra.mxu0 %v1096
    %1612 = vmatprep.subr.bf16.mxu0 %v1089
    %1613 = vmatpush1.bf16.msra.mxu0 %v1088
    %1614 = vmatprep.subr.bf16.mxu0 %v1209
    %1615 = vmatpush2.bf16.msra.mxu0 %v1208
    %1616 = vmatprep.subr.bf16.mxu0 %v1201
    %1617 = vmatpush2.bf16.msra.mxu0 %v1200
    %1618 = vmatprep.subr.bf16.mxu0 %v1193
    %1619 = vmatpush2.bf16.msra.mxu0 %v1192
    %1620 = vmatprep.subr.bf16.mxu0 %v1185
    %1621 = vmatpush2.bf16.msra.mxu0 %v1184
    %1622 = vmatprep.subr.bf16.mxu0 %v1177
    %1623 = vmatpush2.bf16.msra.mxu0 %v1176
    %1624 = vmatprep.subr.bf16.mxu0 %v1169
    %1625 = vmatpush2.bf16.msra.mxu0 %v1168
    %1626 = vmatprep.subr.bf16.mxu0 %v1161
    %1627 = vmatpush2.bf16.msra.mxu0 %v1160
    %1628 = vmatprep.subr.bf16.mxu0 %v1153
    %1629 = vmatpush2.bf16.msra.mxu0 %v1152
    %1630 = vmatprep.mubr.bf16.mxu0 %v1597
    %1631 = vmatmul.mubr.bf16.gmra.mxu0 %v1596
    %v1632 = vpop.f32.mrf.mxu0
    %v1633 = vadd.f32 0.0, %v1632
    %v1634 = vpop.f32.mrf.mxu0
    %v1635 = vadd.f32 0.0, %v1634
    %v1636 = vpop.f32.mrf.mxu0
    %v1637 = vpop.f32.mrf.mxu0
    %1638 = vdwg.mxu0
    %1639 = vmatprep.subr.bf16.mxu0 %v1147
    %1640 = vmatpush1.bf16.msra.mxu0 %v1146
    %1641 = vmatprep.subr.bf16.mxu0 %v1139
    %1642 = vmatpush1.bf16.msra.mxu0 %v1138
    %1643 = vmatprep.subr.bf16.mxu0 %v1131
    %1644 = vmatpush1.bf16.msra.mxu0 %v1130
    %1645 = vmatprep.subr.bf16.mxu0 %v1123
    %1646 = vmatpush1.bf16.msra.mxu0 %v1122
    %1647 = vmatprep.subr.bf16.mxu0 %v1115
    %1648 = vmatpush1.bf16.msra.mxu0 %v1114
    %1649 = vmatprep.subr.bf16.mxu0 %v1107
    %1650 = vmatpush1.bf16.msra.mxu0 %v1106
    %1651 = vmatprep.subr.bf16.mxu0 %v1099
    %1652 = vmatpush1.bf16.msra.mxu0 %v1098
    %1653 = vmatprep.subr.bf16.mxu0 %v1091
    %1654 = vmatpush1.bf16.msra.mxu0 %v1090
    %1655 = vmatprep.subr.bf16.mxu0 %v1211
    %1656 = vmatpush2.bf16.msra.mxu0 %v1210
    %1657 = vmatprep.subr.bf16.mxu0 %v1203
    %1658 = vmatpush2.bf16.msra.mxu0 %v1202
    %1659 = vmatprep.subr.bf16.mxu0 %v1195
    %1660 = vmatpush2.bf16.msra.mxu0 %v1194
    %1661 = vmatprep.subr.bf16.mxu0 %v1187
    %1662 = vmatpush2.bf16.msra.mxu0 %v1186
    %1663 = vmatprep.subr.bf16.mxu0 %v1179
    %1664 = vmatpush2.bf16.msra.mxu0 %v1178
    %1665 = vmatprep.subr.bf16.mxu0 %v1171
    %1666 = vmatpush2.bf16.msra.mxu0 %v1170
    %1667 = vmatprep.subr.bf16.mxu0 %v1163
    %1668 = vmatpush2.bf16.msra.mxu0 %v1162
    %1669 = vmatprep.subr.bf16.mxu0 %v1155
    %1670 = vmatpush2.bf16.msra.mxu0 %v1154
    %1671 = vmatprep.mubr.bf16.mxu0 %v1597
    %1672 = vmatmul.mubr.bf16.gmra.mxu0 %v1596
    %v1673 = vpop.f32.mrf.mxu0
    %v1674 = vadd.f32 0.0, %v1673
    %v1675 = vpop.f32.mrf.mxu0
    %v1676 = vadd.f32 0.0, %v1675
    %v1677 = vpop.f32.mrf.mxu0
    %v1678 = vpop.f32.mrf.mxu0
    %1679 = vdwg.mxu0
    %1680 = vmatprep.subr.bf16.mxu0 %v1149
    %1681 = vmatpush1.bf16.msra.mxu0 %v1148
    %1682 = vmatprep.subr.bf16.mxu0 %v1141
    %1683 = vmatpush1.bf16.msra.mxu0 %v1140
    %1684 = vmatprep.subr.bf16.mxu0 %v1133
    %1685 = vmatpush1.bf16.msra.mxu0 %v1132
    %1686 = vmatprep.subr.bf16.mxu0 %v1125
    %1687 = vmatpush1.bf16.msra.mxu0 %v1124
    %1688 = vmatprep.subr.bf16.mxu0 %v1117
    %1689 = vmatpush1.bf16.msra.mxu0 %v1116
    %1690 = vmatprep.subr.bf16.mxu0 %v1109
    %1691 = vmatpush1.bf16.msra.mxu0 %v1108
    %1692 = vmatprep.subr.bf16.mxu0 %v1101
    %1693 = vmatpush1.bf16.msra.mxu0 %v1100
    %1694 = vmatprep.subr.bf16.mxu0 %v1093
    %1695 = vmatpush1.bf16.msra.mxu0 %v1092
    %1696 = vmatprep.subr.bf16.mxu0 %v1213
    %1697 = vmatpush2.bf16.msra.mxu0 %v1212
    %1698 = vmatprep.subr.bf16.mxu0 %v1205
    %1699 = vmatpush2.bf16.msra.mxu0 %v1204
    %1700 = vmatprep.subr.bf16.mxu0 %v1197
    %1701 = vmatpush2.bf16.msra.mxu0 %v1196
    %1702 = vmatprep.subr.bf16.mxu0 %v1189
    %1703 = vmatpush2.bf16.msra.mxu0 %v1188
    %1704 = vmatprep.subr.bf16.mxu0 %v1181
    %1705 = vmatpush2.bf16.msra.mxu0 %v1180
    %1706 = vmatprep.subr.bf16.mxu0 %v1173
    %1707 = vmatpush2.bf16.msra.mxu0 %v1172
    %1708 = vmatprep.subr.bf16.mxu0 %v1165
    %1709 = vmatpush2.bf16.msra.mxu0 %v1164
    %1710 = vmatprep.subr.bf16.mxu0 %v1157
    %1711 = vmatpush2.bf16.msra.mxu0 %v1156
    %1712 = vmatprep.mubr.bf16.mxu0 %v1597
    %1713 = vmatmul.mubr.bf16.gmra.mxu0 %v1596
    %v1714 = vpop.f32.mrf.mxu0
    %v1715 = vadd.f32 0.0, %v1714
    %v1716 = vpop.f32.mrf.mxu0
    %v1717 = vadd.f32 0.0, %v1716
    %v1718 = vpop.f32.mrf.mxu0
    %v1719 = vpop.f32.mrf.mxu0
    %1720 = vdwg.mxu0
    %1721 = vmatprep.subr.bf16.mxu0 %v1151
    %1722 = vmatpush1.bf16.msra.mxu0 %v1150
    %1723 = vmatprep.subr.bf16.mxu0 %v1143
    %1724 = vmatpush1.bf16.msra.mxu0 %v1142
    %1725 = vmatprep.subr.bf16.mxu0 %v1135
    %1726 = vmatpush1.bf16.msra.mxu0 %v1134
    %1727 = vmatprep.subr.bf16.mxu0 %v1127
    %1728 = vmatpush1.bf16.msra.mxu0 %v1126
    %1729 = vmatprep.subr.bf16.mxu0 %v1119
    %1730 = vmatpush1.bf16.msra.mxu0 %v1118
    %1731 = vmatprep.subr.bf16.mxu0 %v1111
    %1732 = vmatpush1.bf16.msra.mxu0 %v1110
    %1733 = vmatprep.subr.bf16.mxu0 %v1103
    %1734 = vmatpush1.bf16.msra.mxu0 %v1102
    %1735 = vmatprep.subr.bf16.mxu0 %v1095
    %1736 = vmatpush1.bf16.msra.mxu0 %v1094
    %1737 = vmatprep.subr.bf16.mxu0 %v1215
    %1738 = vmatpush2.bf16.msra.mxu0 %v1214
    %1739 = vmatprep.subr.bf16.mxu0 %v1207
    %1740 = vmatpush2.bf16.msra.mxu0 %v1206
    %1741 = vmatprep.subr.bf16.mxu0 %v1199
    %1742 = vmatpush2.bf16.msra.mxu0 %v1198
    %1743 = vmatprep.subr.bf16.mxu0 %v1191
    %1744 = vmatpush2.bf16.msra.mxu0 %v1190
    %1745 = vmatprep.subr.bf16.mxu0 %v1183
    %1746 = vmatpush2.bf16.msra.mxu0 %v1182
    %1747 = vmatprep.subr.bf16.mxu0 %v1175
    %1748 = vmatpush2.bf16.msra.mxu0 %v1174
    %1749 = vmatprep.subr.bf16.mxu0 %v1167
    %1750 = vmatpush2.bf16.msra.mxu0 %v1166
    %1751 = vmatprep.subr.bf16.mxu0 %v1159
    %1752 = vmatpush2.bf16.msra.mxu0 %v1158
    %1753 = vmatprep.mubr.bf16.mxu0 %v1597
    %1754 = vmatmul.mubr.bf16.gmra.mxu0 %v1596
    %v1755 = vpop.f32.mrf.mxu0
    %v1756 = vadd.f32 0.0, %v1755
    %v1757 = vpop.f32.mrf.mxu0
    %v1758 = vadd.f32 0.0, %v1757
    %v1759 = vpop.f32.mrf.mxu0
    %v1760 = vpop.f32.mrf.mxu0
    %1761 = vdwg.mxu0
    %v1762 = vadd.f32 %v1588, %v1633
    %v1763 = vadd.f32 %v1589, %v1635
    %v1764 = vadd.f32 %v1590, %v1674
    %v1765 = vadd.f32 %v1591, %v1676
    %v1766 = vadd.f32 %v1592, %v1715
    %v1767 = vadd.f32 %v1593, %v1717
    %v1768 = vadd.f32 %v1594, %v1756
    %v1769 = vadd.f32 %v1595, %v1758
    %v1770 = vxor.u32 %v1762, 2147483648
    %v1771 = vxor.u32 %v1763, 2147483648
    %v1772 = vxor.u32 %v1764, 2147483648
    %v1773 = vxor.u32 %v1765, 2147483648
    %v1774 = vxor.u32 %v1766, 2147483648
    %v1775 = vxor.u32 %v1767, 2147483648
    %v1776 = vxor.u32 %v1768, 2147483648
    %v1777 = vxor.u32 %v1769, 2147483648
    %v1778 = vmul.f32 %v1770, 1.442695
    %v1779 = vpow.pop %v1778
    %v1780 = vmul.f32 %v1771, 1.442695
    %v1781 = vpow.pop %v1780
    %v1782 = vmul.f32 %v1772, 1.442695
    %v1783 = vpow.pop %v1782
    %v1784 = vmul.f32 %v1773, 1.442695
    %v1785 = vpow.pop %v1784
    %v1786 = vmul.f32 %v1774, 1.442695
    %v1787 = vpow.pop %v1786
    %v1788 = vmul.f32 %v1775, 1.442695
    %v1789 = vpow.pop %v1788
    %v1790 = vmul.f32 %v1776, 1.442695
    %v1791 = vpow.pop %v1790
    %v1792 = vmul.f32 %v1777, 1.442695
    %v1793 = vpow.pop %v1792
    %v1794 = vadd.f32 %v1779, 1.0
    %v1795 = vadd.f32 %v1781, 1.0
    %v1796 = vadd.f32 %v1783, 1.0
    %v1797 = vadd.f32 %v1785, 1.0
    %v1798 = vadd.f32 %v1787, 1.0
    %v1799 = vadd.f32 %v1789, 1.0
    %v1800 = vadd.f32 %v1791, 1.0
    %v1801 = vadd.f32 %v1793, 1.0
    %v1802 = vrcp.pop %v1794
    %v1803 = vmul.f32 1.0, %v1802
    %v1804 = vrcp.pop %v1795
    %v1805 = vmul.f32 1.0, %v1804
    %v1806 = vrcp.pop %v1796
    %v1807 = vmul.f32 1.0, %v1806
    %v1808 = vrcp.pop %v1797
    %v1809 = vmul.f32 1.0, %v1808
    %v1810 = vrcp.pop %v1798
    %v1811 = vmul.f32 1.0, %v1810
    %v1812 = vrcp.pop %v1799
    %v1813 = vmul.f32 1.0, %v1812
    %v1814 = vrcp.pop %v1800
    %v1815 = vmul.f32 1.0, %v1814
    %v1816 = vrcp.pop %v1801
    %v1817 = vmul.f32 1.0, %v1816
    %v1818 = vmul.f32 %v1811, 2.0
    %v1819 = vmul.f32 %v1813, 2.0
    %v1820 = vsub.f32 %v1818, 1.0
    %v1821 = vsub.f32 %v1819, 1.0
    %v1822 = vmul.f32 %v1807, %v1586
    %v1823 = vmul.f32 %v1809, %v1587
    %v1824 = vmul.f32 %v1803, %v1820
    %v1825 = vmul.f32 %v1805, %v1821
    %v1826 = vadd.f32 %v1822, %v1824
    %v1827 = vadd.f32 %v1823, %v1825
    %v1828 = vtanh.pop %v1826
    %v1829 = vtanh.pop %v1827
    %v1830 = vmul.f32 %v1815, %v1828
    %v1831 = vmul.f32 %v1817, %v1829
    %vm1832 = vcmp.lt.s32.totalorder %v560, 64
    %vm1833 = vcmp.lt.s32.totalorder %v561, 64
    %vm1834 = vmand %vm1578, %vm1832
    %vm1835 = vmand %vm1579, %vm1833
    %v1836 = vsel %vm1834, %v1830, %v1584
    %v1837 = vsel %vm1835, %v1831, %v1585
    %v1838 = vsel %vm1834, %v1826, %v1586
    %v1839 = vsel %vm1835, %v1827, %v1587
    %v1840 = vld [vmem:[#allocation2 + $0x80] sm:$0xff]
    %v1841 = vld [vmem:[#allocation2 + $0x88] sm:$0xff]
    %v1842 = vld [vmem:[#allocation2 + $0x90] sm:$0xff]
    %v1843 = vld [vmem:[#allocation2 + $0x98] sm:$0xff]
    %v1844 = vld [vmem:[#allocation2 + $0xa0] sm:$0xff]
    %v1845 = vld [vmem:[#allocation2 + $0xa8] sm:$0xff]
    %v1846 = vld [vmem:[#allocation2 + $0xb0] sm:$0xff]
    %v1847 = vld [vmem:[#allocation2 + $0xb8] sm:$0xff]
    %v1848 = vpack.c.bf16 %v1836, %v1836
    %v1849 = vpack.c.bf16 %v1837, %v1837
    %1850 = vmatprep.subr.bf16.mxu0 %v1145
    %1851 = vmatpush1.bf16.msra.mxu0 %v1144
    %1852 = vmatprep.subr.bf16.mxu0 %v1137
    %1853 = vmatpush1.bf16.msra.mxu0 %v1136
    %1854 = vmatprep.subr.bf16.mxu0 %v1129
    %1855 = vmatpush1.bf16.msra.mxu0 %v1128
    %1856 = vmatprep.subr.bf16.mxu0 %v1121
    %1857 = vmatpush1.bf16.msra.mxu0 %v1120
    %1858 = vmatprep.subr.bf16.mxu0 %v1113
    %1859 = vmatpush1.bf16.msra.mxu0 %v1112
    %1860 = vmatprep.subr.bf16.mxu0 %v1105
    %1861 = vmatpush1.bf16.msra.mxu0 %v1104
    %1862 = vmatprep.subr.bf16.mxu0 %v1097
    %1863 = vmatpush1.bf16.msra.mxu0 %v1096
    %1864 = vmatprep.subr.bf16.mxu0 %v1089
    %1865 = vmatpush1.bf16.msra.mxu0 %v1088
    %1866 = vmatprep.subr.bf16.mxu0 %v1209
    %1867 = vmatpush2.bf16.msra.mxu0 %v1208
    %1868 = vmatprep.subr.bf16.mxu0 %v1201
    %1869 = vmatpush2.bf16.msra.mxu0 %v1200
    %1870 = vmatprep.subr.bf16.mxu0 %v1193
    %1871 = vmatpush2.bf16.msra.mxu0 %v1192
    %1872 = vmatprep.subr.bf16.mxu0 %v1185
    %1873 = vmatpush2.bf16.msra.mxu0 %v1184
    %1874 = vmatprep.subr.bf16.mxu0 %v1177
    %1875 = vmatpush2.bf16.msra.mxu0 %v1176
    %1876 = vmatprep.subr.bf16.mxu0 %v1169
    %1877 = vmatpush2.bf16.msra.mxu0 %v1168
    %1878 = vmatprep.subr.bf16.mxu0 %v1161
    %1879 = vmatpush2.bf16.msra.mxu0 %v1160
    %1880 = vmatprep.subr.bf16.mxu0 %v1153
    %1881 = vmatpush2.bf16.msra.mxu0 %v1152
    %1882 = vmatprep.mubr.bf16.mxu0 %v1849
    %1883 = vmatmul.mubr.bf16.gmra.mxu0 %v1848
    %v1884 = vpop.f32.mrf.mxu0
    %v1885 = vadd.f32 0.0, %v1884
    %v1886 = vpop.f32.mrf.mxu0
    %v1887 = vadd.f32 0.0, %v1886
    %v1888 = vpop.f32.mrf.mxu0
    %v1889 = vpop.f32.mrf.mxu0
    %1890 = vdwg.mxu0
    %1891 = vmatprep.subr.bf16.mxu0 %v1147
    %1892 = vmatpush1.bf16.msra.mxu0 %v1146
    %1893 = vmatprep.subr.bf16.mxu0 %v1139
    %1894 = vmatpush1.bf16.msra.mxu0 %v1138
    %1895 = vmatprep.subr.bf16.mxu0 %v1131
    %1896 = vmatpush1.bf16.msra.mxu0 %v1130
    %1897 = vmatprep.subr.bf16.mxu0 %v1123
    %1898 = vmatpush1.bf16.msra.mxu0 %v1122
    %1899 = vmatprep.subr.bf16.mxu0 %v1115
    %1900 = vmatpush1.bf16.msra.mxu0 %v1114
    %1901 = vmatprep.subr.bf16.mxu0 %v1107
    %1902 = vmatpush1.bf16.msra.mxu0 %v1106
    %1903 = vmatprep.subr.bf16.mxu0 %v1099
    %1904 = vmatpush1.bf16.msra.mxu0 %v1098
    %1905 = vmatprep.subr.bf16.mxu0 %v1091
    %1906 = vmatpush1.bf16.msra.mxu0 %v1090
    %1907 = vmatprep.subr.bf16.mxu0 %v1211
    %1908 = vmatpush2.bf16.msra.mxu0 %v1210
    %1909 = vmatprep.subr.bf16.mxu0 %v1203
    %1910 = vmatpush2.bf16.msra.mxu0 %v1202
    %1911 = vmatprep.subr.bf16.mxu0 %v1195
    %1912 = vmatpush2.bf16.msra.mxu0 %v1194
    %1913 = vmatprep.subr.bf16.mxu0 %v1187
    %1914 = vmatpush2.bf16.msra.mxu0 %v1186
    %1915 = vmatprep.subr.bf16.mxu0 %v1179
    %1916 = vmatpush2.bf16.msra.mxu0 %v1178
    %1917 = vmatprep.subr.bf16.mxu0 %v1171
    %1918 = vmatpush2.bf16.msra.mxu0 %v1170
    %1919 = vmatprep.subr.bf16.mxu0 %v1163
    %1920 = vmatpush2.bf16.msra.mxu0 %v1162
    %1921 = vmatprep.subr.bf16.mxu0 %v1155
    %1922 = vmatpush2.bf16.msra.mxu0 %v1154
    %1923 = vmatprep.mubr.bf16.mxu0 %v1849
    %1924 = vmatmul.mubr.bf16.gmra.mxu0 %v1848
    %v1925 = vpop.f32.mrf.mxu0
    %v1926 = vadd.f32 0.0, %v1925
    %v1927 = vpop.f32.mrf.mxu0
    %v1928 = vadd.f32 0.0, %v1927
    %v1929 = vpop.f32.mrf.mxu0
    %v1930 = vpop.f32.mrf.mxu0
    %1931 = vdwg.mxu0
    %1932 = vmatprep.subr.bf16.mxu0 %v1149
    %1933 = vmatpush1.bf16.msra.mxu0 %v1148
    %1934 = vmatprep.subr.bf16.mxu0 %v1141
    %1935 = vmatpush1.bf16.msra.mxu0 %v1140
    %1936 = vmatprep.subr.bf16.mxu0 %v1133
    %1937 = vmatpush1.bf16.msra.mxu0 %v1132
    %1938 = vmatprep.subr.bf16.mxu0 %v1125
    %1939 = vmatpush1.bf16.msra.mxu0 %v1124
    %1940 = vmatprep.subr.bf16.mxu0 %v1117
    %1941 = vmatpush1.bf16.msra.mxu0 %v1116
    %1942 = vmatprep.subr.bf16.mxu0 %v1109
    %1943 = vmatpush1.bf16.msra.mxu0 %v1108
    %1944 = vmatprep.subr.bf16.mxu0 %v1101
    %1945 = vmatpush1.bf16.msra.mxu0 %v1100
    %1946 = vmatprep.subr.bf16.mxu0 %v1093
    %1947 = vmatpush1.bf16.msra.mxu0 %v1092
    %1948 = vmatprep.subr.bf16.mxu0 %v1213
    %1949 = vmatpush2.bf16.msra.mxu0 %v1212
    %1950 = vmatprep.subr.bf16.mxu0 %v1205
    %1951 = vmatpush2.bf16.msra.mxu0 %v1204
    %1952 = vmatprep.subr.bf16.mxu0 %v1197
    %1953 = vmatpush2.bf16.msra.mxu0 %v1196
    %1954 = vmatprep.subr.bf16.mxu0 %v1189
    %1955 = vmatpush2.bf16.msra.mxu0 %v1188
    %1956 = vmatprep.subr.bf16.mxu0 %v1181
    %1957 = vmatpush2.bf16.msra.mxu0 %v1180
    %1958 = vmatprep.subr.bf16.mxu0 %v1173
    %1959 = vmatpush2.bf16.msra.mxu0 %v1172
    %1960 = vmatprep.subr.bf16.mxu0 %v1165
    %1961 = vmatpush2.bf16.msra.mxu0 %v1164
    %1962 = vmatprep.subr.bf16.mxu0 %v1157
    %1963 = vmatpush2.bf16.msra.mxu0 %v1156
    %1964 = vmatprep.mubr.bf16.mxu0 %v1849
    %1965 = vmatmul.mubr.bf16.gmra.mxu0 %v1848
    %v1966 = vpop.f32.mrf.mxu0
    %v1967 = vadd.f32 0.0, %v1966
    %v1968 = vpop.f32.mrf.mxu0
    %v1969 = vadd.f32 0.0, %v1968
    %v1970 = vpop.f32.mrf.mxu0
    %v1971 = vpop.f32.mrf.mxu0
    %1972 = vdwg.mxu0
    %1973 = vmatprep.subr.bf16.mxu0 %v1151
    %1974 = vmatpush1.bf16.msra.mxu0 %v1150
    %1975 = vmatprep.subr.bf16.mxu0 %v1143
    %1976 = vmatpush1.bf16.msra.mxu0 %v1142
    %1977 = vmatprep.subr.bf16.mxu0 %v1135
    %1978 = vmatpush1.bf16.msra.mxu0 %v1134
    %1979 = vmatprep.subr.bf16.mxu0 %v1127
    %1980 = vmatpush1.bf16.msra.mxu0 %v1126
    %1981 = vmatprep.subr.bf16.mxu0 %v1119
    %1982 = vmatpush1.bf16.msra.mxu0 %v1118
    %1983 = vmatprep.subr.bf16.mxu0 %v1111
    %1984 = vmatpush1.bf16.msra.mxu0 %v1110
    %1985 = vmatprep.subr.bf16.mxu0 %v1103
    %1986 = vmatpush1.bf16.msra.mxu0 %v1102
    %1987 = vmatprep.subr.bf16.mxu0 %v1095
    %1988 = vmatpush1.bf16.msra.mxu0 %v1094
    %1989 = vmatprep.subr.bf16.mxu0 %v1215
    %1990 = vmatpush2.bf16.msra.mxu0 %v1214
    %1991 = vmatprep.subr.bf16.mxu0 %v1207
    %1992 = vmatpush2.bf16.msra.mxu0 %v1206
    %1993 = vmatprep.subr.bf16.mxu0 %v1199
    %1994 = vmatpush2.bf16.msra.mxu0 %v1198
    %1995 = vmatprep.subr.bf16.mxu0 %v1191
    %1996 = vmatpush2.bf16.msra.mxu0 %v1190
    %1997 = vmatprep.subr.bf16.mxu0 %v1183
    %1998 = vmatpush2.bf16.msra.mxu0 %v1182
    %1999 = vmatprep.subr.bf16.mxu0 %v1175
    %2000 = vmatpush2.bf16.msra.mxu0 %v1174
    %2001 = vmatprep.subr.bf16.mxu0 %v1167
    %2002 = vmatpush2.bf16.msra.mxu0 %v1166
    %2003 = vmatprep.subr.bf16.mxu0 %v1159
    %2004 = vmatpush2.bf16.msra.mxu0 %v1158
    %2005 = vmatprep.mubr.bf16.mxu0 %v1849
    %2006 = vmatmul.mubr.bf16.gmra.mxu0 %v1848
    %v2007 = vpop.f32.mrf.mxu0
    %v2008 = vadd.f32 0.0, %v2007
    %v2009 = vpop.f32.mrf.mxu0
    %v2010 = vadd.f32 0.0, %v2009
    %v2011 = vpop.f32.mrf.mxu0
    %v2012 = vpop.f32.mrf.mxu0
    %2013 = vdwg.mxu0
    %v2014 = vadd.f32 %v1840, %v1885
    %v2015 = vadd.f32 %v1841, %v1887
    %v2016 = vadd.f32 %v1842, %v1926
    %v2017 = vadd.f32 %v1843, %v1928
    %v2018 = vadd.f32 %v1844, %v1967
    %v2019 = vadd.f32 %v1845, %v1969
    %v2020 = vadd.f32 %v1846, %v2008
    %v2021 = vadd.f32 %v1847, %v2010
    %v2022 = vxor.u32 %v2014, 2147483648
    %v2023 = vxor.u32 %v2015, 2147483648
    %v2024 = vxor.u32 %v2016, 2147483648
    %v2025 = vxor.u32 %v2017, 2147483648
    %v2026 = vxor.u32 %v2018, 2147483648
    %v2027 = vxor.u32 %v2019, 2147483648
    %v2028 = vxor.u32 %v2020, 2147483648
    %v2029 = vxor.u32 %v2021, 2147483648
    %v2030 = vmul.f32 %v2022, 1.442695
    %v2031 = vpow.pop %v2030
    %v2032 = vmul.f32 %v2023, 1.442695
    %v2033 = vpow.pop %v2032
    %v2034 = vmul.f32 %v2024, 1.442695
    %v2035 = vpow.pop %v2034
    %v2036 = vmul.f32 %v2025, 1.442695
    %v2037 = vpow.pop %v2036
    %v2038 = vmul.f32 %v2026, 1.442695
    %v2039 = vpow.pop %v2038
    %v2040 = vmul.f32 %v2027, 1.442695
    %v2041 = vpow.pop %v2040
    %v2042 = vmul.f32 %v2028, 1.442695
    %v2043 = vpow.pop %v2042
    %v2044 = vmul.f32 %v2029, 1.442695
    %v2045 = vpow.pop %v2044
    %v2046 = vadd.f32 %v2031, 1.0
    %v2047 = vadd.f32 %v2033, 1.0
    %v2048 = vadd.f32 %v2035, 1.0
    %v2049 = vadd.f32 %v2037, 1.0
    %v2050 = vadd.f32 %v2039, 1.0
    %v2051 = vadd.f32 %v2041, 1.0
    %v2052 = vadd.f32 %v2043, 1.0
    %v2053 = vadd.f32 %v2045, 1.0
    %v2054 = vrcp.pop %v2046
    %v2055 = vmul.f32 1.0, %v2054
    %v2056 = vrcp.pop %v2047
    %v2057 = vmul.f32 1.0, %v2056
    %v2058 = vrcp.pop %v2048
    %v2059 = vmul.f32 1.0, %v2058
    %v2060 = vrcp.pop %v2049
    %v2061 = vmul.f32 1.0, %v2060
    %v2062 = vrcp.pop %v2050
    %v2063 = vmul.f32 1.0, %v2062
    %v2064 = vrcp.pop %v2051
    %v2065 = vmul.f32 1.0, %v2064
    %v2066 = vrcp.pop %v2052
    %v2067 = vmul.f32 1.0, %v2066
    %v2068 = vrcp.pop %v2053
    %v2069 = vmul.f32 1.0, %v2068
    %v2070 = vmul.f32 %v2063, 2.0
    %v2071 = vmul.f32 %v2065, 2.0
    %v2072 = vsub.f32 %v2070, 1.0
    %v2073 = vsub.f32 %v2071, 1.0
    %v2074 = vmul.f32 %v2059, %v1838
    %v2075 = vmul.f32 %v2061, %v1839
    %v2076 = vmul.f32 %v2055, %v2072
    %v2077 = vmul.f32 %v2057, %v2073
    %v2078 = vadd.f32 %v2074, %v2076
    %v2079 = vadd.f32 %v2075, %v2077
    %v2080 = vtanh.pop %v2078
    %v2081 = vtanh.pop %v2079
    %v2082 = vmul.f32 %v2067, %v2080
    %v2083 = vmul.f32 %v2069, %v2081
    %vm2084 = vcmp.lt.s32.totalorder %v560, 96
    %vm2085 = vcmp.lt.s32.totalorder %v561, 96
    %vm2086 = vmand %vm1578, %vm2084
    %vm2087 = vmand %vm1579, %vm2085
    %v2088 = vsel %vm2086, %v2082, %v1836
    %v2089 = vsel %vm2087, %v2083, %v1837
    %v2090 = vsel %vm2086, %v2078, %v1838
    %v2091 = vsel %vm2087, %v2079, %v1839
    %v2092 = vld [vmem:[#allocation2 + $0xc0] sm:$0xff]
    %v2093 = vld [vmem:[#allocation2 + $0xc8] sm:$0xff]
    %v2094 = vld [vmem:[#allocation2 + $0xd0] sm:$0xff]
    %v2095 = vld [vmem:[#allocation2 + $0xd8] sm:$0xff]
    %v2096 = vld [vmem:[#allocation2 + $0xe0] sm:$0xff]
    %v2097 = vld [vmem:[#allocation2 + $0xe8] sm:$0xff]
    %v2098 = vld [vmem:[#allocation2 + $0xf0] sm:$0xff]
    %v2099 = vld [vmem:[#allocation2 + $0xf8] sm:$0xff]
    %v2100 = vpack.c.bf16 %v2088, %v2088
    %v2101 = vpack.c.bf16 %v2089, %v2089
    %2102 = vmatprep.subr.bf16.mxu0 %v1145
    %2103 = vmatpush1.bf16.msra.mxu0 %v1144
    %2104 = vmatprep.subr.bf16.mxu0 %v1137
    %2105 = vmatpush1.bf16.msra.mxu0 %v1136
    %2106 = vmatprep.subr.bf16.mxu0 %v1129
    %2107 = vmatpush1.bf16.msra.mxu0 %v1128
    %2108 = vmatprep.subr.bf16.mxu0 %v1121
    %2109 = vmatpush1.bf16.msra.mxu0 %v1120
    %2110 = vmatprep.subr.bf16.mxu0 %v1113
    %2111 = vmatpush1.bf16.msra.mxu0 %v1112
    %2112 = vmatprep.subr.bf16.mxu0 %v1105
    %2113 = vmatpush1.bf16.msra.mxu0 %v1104
    %2114 = vmatprep.subr.bf16.mxu0 %v1097
    %2115 = vmatpush1.bf16.msra.mxu0 %v1096
    %2116 = vmatprep.subr.bf16.mxu0 %v1089
    %2117 = vmatpush1.bf16.msra.mxu0 %v1088
    %2118 = vmatprep.subr.bf16.mxu0 %v1209
    %2119 = vmatpush2.bf16.msra.mxu0 %v1208
    %2120 = vmatprep.subr.bf16.mxu0 %v1201
    %2121 = vmatpush2.bf16.msra.mxu0 %v1200
    %2122 = vmatprep.subr.bf16.mxu0 %v1193
    %2123 = vmatpush2.bf16.msra.mxu0 %v1192
    %2124 = vmatprep.subr.bf16.mxu0 %v1185
    %2125 = vmatpush2.bf16.msra.mxu0 %v1184
    %2126 = vmatprep.subr.bf16.mxu0 %v1177
    %2127 = vmatpush2.bf16.msra.mxu0 %v1176
    %2128 = vmatprep.subr.bf16.mxu0 %v1169
    %2129 = vmatpush2.bf16.msra.mxu0 %v1168
    %2130 = vmatprep.subr.bf16.mxu0 %v1161
    %2131 = vmatpush2.bf16.msra.mxu0 %v1160
    %2132 = vmatprep.subr.bf16.mxu0 %v1153
    %2133 = vmatpush2.bf16.msra.mxu0 %v1152
    %2134 = vmatprep.mubr.bf16.mxu0 %v2101
    %2135 = vmatmul.mubr.bf16.gmra.mxu0 %v2100
    %v2136 = vpop.f32.mrf.mxu0
    %v2137 = vadd.f32 0.0, %v2136
    %v2138 = vpop.f32.mrf.mxu0
    %v2139 = vadd.f32 0.0, %v2138
    %v2140 = vpop.f32.mrf.mxu0
    %v2141 = vpop.f32.mrf.mxu0
    %2142 = vdwg.mxu0
    %2143 = vmatprep.subr.bf16.mxu0 %v1147
    %2144 = vmatpush1.bf16.msra.mxu0 %v1146
    %2145 = vmatprep.subr.bf16.mxu0 %v1139
    %2146 = vmatpush1.bf16.msra.mxu0 %v1138
    %2147 = vmatprep.subr.bf16.mxu0 %v1131
    %2148 = vmatpush1.bf16.msra.mxu0 %v1130
    %2149 = vmatprep.subr.bf16.mxu0 %v1123
    %2150 = vmatpush1.bf16.msra.mxu0 %v1122
    %2151 = vmatprep.subr.bf16.mxu0 %v1115
    %2152 = vmatpush1.bf16.msra.mxu0 %v1114
    %2153 = vmatprep.subr.bf16.mxu0 %v1107
    %2154 = vmatpush1.bf16.msra.mxu0 %v1106
    %2155 = vmatprep.subr.bf16.mxu0 %v1099
    %2156 = vmatpush1.bf16.msra.mxu0 %v1098
    %2157 = vmatprep.subr.bf16.mxu0 %v1091
    %2158 = vmatpush1.bf16.msra.mxu0 %v1090
    %2159 = vmatprep.subr.bf16.mxu0 %v1211
    %2160 = vmatpush2.bf16.msra.mxu0 %v1210
    %2161 = vmatprep.subr.bf16.mxu0 %v1203
    %2162 = vmatpush2.bf16.msra.mxu0 %v1202
    %2163 = vmatprep.subr.bf16.mxu0 %v1195
    %2164 = vmatpush2.bf16.msra.mxu0 %v1194
    %2165 = vmatprep.subr.bf16.mxu0 %v1187
    %2166 = vmatpush2.bf16.msra.mxu0 %v1186
    %2167 = vmatprep.subr.bf16.mxu0 %v1179
    %2168 = vmatpush2.bf16.msra.mxu0 %v1178
    %2169 = vmatprep.subr.bf16.mxu0 %v1171
    %2170 = vmatpush2.bf16.msra.mxu0 %v1170
    %2171 = vmatprep.subr.bf16.mxu0 %v1163
    %2172 = vmatpush2.bf16.msra.mxu0 %v1162
    %2173 = vmatprep.subr.bf16.mxu0 %v1155
    %2174 = vmatpush2.bf16.msra.mxu0 %v1154
    %2175 = vmatprep.mubr.bf16.mxu0 %v2101
    %2176 = vmatmul.mubr.bf16.gmra.mxu0 %v2100
    %v2177 = vpop.f32.mrf.mxu0
    %v2178 = vadd.f32 0.0, %v2177
    %v2179 = vpop.f32.mrf.mxu0
    %v2180 = vadd.f32 0.0, %v2179
    %v2181 = vpop.f32.mrf.mxu0
    %v2182 = vpop.f32.mrf.mxu0
    %2183 = vdwg.mxu0
    %2184 = vmatprep.subr.bf16.mxu0 %v1149
    %2185 = vmatpush1.bf16.msra.mxu0 %v1148
    %2186 = vmatprep.subr.bf16.mxu0 %v1141
    %2187 = vmatpush1.bf16.msra.mxu0 %v1140
    %2188 = vmatprep.subr.bf16.mxu0 %v1133
    %2189 = vmatpush1.bf16.msra.mxu0 %v1132
    %2190 = vmatprep.subr.bf16.mxu0 %v1125
    %2191 = vmatpush1.bf16.msra.mxu0 %v1124
    %2192 = vmatprep.subr.bf16.mxu0 %v1117
    %2193 = vmatpush1.bf16.msra.mxu0 %v1116
    %2194 = vmatprep.subr.bf16.mxu0 %v1109
    %2195 = vmatpush1.bf16.msra.mxu0 %v1108
    %2196 = vmatprep.subr.bf16.mxu0 %v1101
    %2197 = vmatpush1.bf16.msra.mxu0 %v1100
    %2198 = vmatprep.subr.bf16.mxu0 %v1093
    %2199 = vmatpush1.bf16.msra.mxu0 %v1092
    %2200 = vmatprep.subr.bf16.mxu0 %v1213
    %2201 = vmatpush2.bf16.msra.mxu0 %v1212
    %2202 = vmatprep.subr.bf16.mxu0 %v1205
    %2203 = vmatpush2.bf16.msra.mxu0 %v1204
    %2204 = vmatprep.subr.bf16.mxu0 %v1197
    %2205 = vmatpush2.bf16.msra.mxu0 %v1196
    %2206 = vmatprep.subr.bf16.mxu0 %v1189
    %2207 = vmatpush2.bf16.msra.mxu0 %v1188
    %2208 = vmatprep.subr.bf16.mxu0 %v1181
    %2209 = vmatpush2.bf16.msra.mxu0 %v1180
    %2210 = vmatprep.subr.bf16.mxu0 %v1173
    %2211 = vmatpush2.bf16.msra.mxu0 %v1172
    %2212 = vmatprep.subr.bf16.mxu0 %v1165
    %2213 = vmatpush2.bf16.msra.mxu0 %v1164
    %2214 = vmatprep.subr.bf16.mxu0 %v1157
    %2215 = vmatpush2.bf16.msra.mxu0 %v1156
    %2216 = vmatprep.mubr.bf16.mxu0 %v2101
    %2217 = vmatmul.mubr.bf16.gmra.mxu0 %v2100
    %v2218 = vpop.f32.mrf.mxu0
    %v2219 = vadd.f32 0.0, %v2218
    %v2220 = vpop.f32.mrf.mxu0
    %v2221 = vadd.f32 0.0, %v2220
    %v2222 = vpop.f32.mrf.mxu0
    %v2223 = vpop.f32.mrf.mxu0
    %2224 = vdwg.mxu0
    %2225 = vmatprep.subr.bf16.mxu0 %v1151
    %2226 = vmatpush1.bf16.msra.mxu0 %v1150
    %2227 = vmatprep.subr.bf16.mxu0 %v1143
    %2228 = vmatpush1.bf16.msra.mxu0 %v1142
    %2229 = vmatprep.subr.bf16.mxu0 %v1135
    %2230 = vmatpush1.bf16.msra.mxu0 %v1134
    %2231 = vmatprep.subr.bf16.mxu0 %v1127
    %2232 = vmatpush1.bf16.msra.mxu0 %v1126
    %2233 = vmatprep.subr.bf16.mxu0 %v1119
    %2234 = vmatpush1.bf16.msra.mxu0 %v1118
    %2235 = vmatprep.subr.bf16.mxu0 %v1111
    %2236 = vmatpush1.bf16.msra.mxu0 %v1110
    %2237 = vmatprep.subr.bf16.mxu0 %v1103
    %2238 = vmatpush1.bf16.msra.mxu0 %v1102
    %2239 = vmatprep.subr.bf16.mxu0 %v1095
    %2240 = vmatpush1.bf16.msra.mxu0 %v1094
    %2241 = vmatprep.subr.bf16.mxu0 %v1215
    %2242 = vmatpush2.bf16.msra.mxu0 %v1214
    %2243 = vmatprep.subr.bf16.mxu0 %v1207
    %2244 = vmatpush2.bf16.msra.mxu0 %v1206
    %2245 = vmatprep.subr.bf16.mxu0 %v1199
    %2246 = vmatpush2.bf16.msra.mxu0 %v1198
    %2247 = vmatprep.subr.bf16.mxu0 %v1191
    %2248 = vmatpush2.bf16.msra.mxu0 %v1190
    %2249 = vmatprep.subr.bf16.mxu0 %v1183
    %2250 = vmatpush2.bf16.msra.mxu0 %v1182
    %2251 = vmatprep.subr.bf16.mxu0 %v1175
    %2252 = vmatpush2.bf16.msra.mxu0 %v1174
    %2253 = vmatprep.subr.bf16.mxu0 %v1167
    %2254 = vmatpush2.bf16.msra.mxu0 %v1166
    %2255 = vmatprep.subr.bf16.mxu0 %v1159
    %2256 = vmatpush2.bf16.msra.mxu0 %v1158
    %2257 = vmatprep.mubr.bf16.mxu0 %v2101
    %2258 = vmatmul.mubr.bf16.gmra.mxu0 %v2100
    %v2259 = vpop.f32.mrf.mxu0
    %v2260 = vadd.f32 0.0, %v2259
    %v2261 = vpop.f32.mrf.mxu0
    %v2262 = vadd.f32 0.0, %v2261
    %v2263 = vpop.f32.mrf.mxu0
    %v2264 = vpop.f32.mrf.mxu0
    %2265 = vdwg.mxu0
    %v2266 = vadd.f32 %v2092, %v2137
    %v2267 = vadd.f32 %v2093, %v2139
    %v2268 = vadd.f32 %v2094, %v2178
    %v2269 = vadd.f32 %v2095, %v2180
    %v2270 = vadd.f32 %v2096, %v2219
    %v2271 = vadd.f32 %v2097, %v2221
    %v2272 = vadd.f32 %v2098, %v2260
    %v2273 = vadd.f32 %v2099, %v2262
    %v2274 = vxor.u32 %v2266, 2147483648
    %v2275 = vxor.u32 %v2267, 2147483648
    %v2276 = vxor.u32 %v2268, 2147483648
    %v2277 = vxor.u32 %v2269, 2147483648
    %v2278 = vxor.u32 %v2270, 2147483648
    %v2279 = vxor.u32 %v2271, 2147483648
    %v2280 = vxor.u32 %v2272, 2147483648
    %v2281 = vxor.u32 %v2273, 2147483648
    %v2282 = vmul.f32 %v2274, 1.442695
    %v2283 = vpow.pop %v2282
    %v2284 = vmul.f32 %v2275, 1.442695
    %v2285 = vpow.pop %v2284
    %v2286 = vmul.f32 %v2276, 1.442695
    %v2287 = vpow.pop %v2286
    %v2288 = vmul.f32 %v2277, 1.442695
    %v2289 = vpow.pop %v2288
    %v2290 = vmul.f32 %v2278, 1.442695
    %v2291 = vpow.pop %v2290
    %v2292 = vmul.f32 %v2279, 1.442695
    %v2293 = vpow.pop %v2292
    %v2294 = vmul.f32 %v2280, 1.442695
    %v2295 = vpow.pop %v2294
    %v2296 = vmul.f32 %v2281, 1.442695
    %v2297 = vpow.pop %v2296
    %v2298 = vadd.f32 %v2283, 1.0
    %v2299 = vadd.f32 %v2285, 1.0
    %v2300 = vadd.f32 %v2287, 1.0
    %v2301 = vadd.f32 %v2289, 1.0
    %v2302 = vadd.f32 %v2291, 1.0
    %v2303 = vadd.f32 %v2293, 1.0
    %v2304 = vadd.f32 %v2295, 1.0
    %v2305 = vadd.f32 %v2297, 1.0
    %v2306 = vrcp.pop %v2298
    %v2307 = vmul.f32 1.0, %v2306
    %v2308 = vrcp.pop %v2299
    %v2309 = vmul.f32 1.0, %v2308
    %v2310 = vrcp.pop %v2300
    %v2311 = vmul.f32 1.0, %v2310
    %v2312 = vrcp.pop %v2301
    %v2313 = vmul.f32 1.0, %v2312
    %v2314 = vrcp.pop %v2302
    %v2315 = vmul.f32 1.0, %v2314
    %v2316 = vrcp.pop %v2303
    %v2317 = vmul.f32 1.0, %v2316
    %v2318 = vrcp.pop %v2304
    %v2319 = vmul.f32 1.0, %v2318
    %v2320 = vrcp.pop %v2305
    %v2321 = vmul.f32 1.0, %v2320
    %v2322 = vmul.f32 %v2315, 2.0
    %v2323 = vmul.f32 %v2317, 2.0
    %v2324 = vsub.f32 %v2322, 1.0
    %v2325 = vsub.f32 %v2323, 1.0
    %v2326 = vmul.f32 %v2311, %v2090
    %v2327 = vmul.f32 %v2313, %v2091
    %v2328 = vmul.f32 %v2307, %v2324
    %v2329 = vmul.f32 %v2309, %v2325
    %v2330 = vadd.f32 %v2326, %v2328
    %v2331 = vadd.f32 %v2327, %v2329
    %v2332 = vtanh.pop %v2330
    %v2333 = vtanh.pop %v2331
    %v2334 = vmul.f32 %v2319, %v2332
    %v2335 = vmul.f32 %v2321, %v2333
    %vm2336 = vcmp.lt.s32.totalorder %v560, 128
    %vm2337 = vcmp.lt.s32.totalorder %v561, 128
    %vm2338 = vmand %vm1578, %vm2336
    %vm2339 = vmand %vm1579, %vm2337
    %v2340 = vsel %vm2338, %v2334, %v2088
    %v2341 = vsel %vm2339, %v2335, %v2089
    %v2342 = vsel %vm2338, %v2330, %v2090
    %v2343 = vsel %vm2339, %v2331, %v2091
    %v2344 = vld [vmem:[#allocation2 + $0x100] sm:$0xff]
    %v2345 = vld [vmem:[#allocation2 + $0x108] sm:$0xff]
    %v2346 = vld [vmem:[#allocation2 + $0x110] sm:$0xff]
    %v2347 = vld [vmem:[#allocation2 + $0x118] sm:$0xff]
    %v2348 = vld [vmem:[#allocation2 + $0x120] sm:$0xff]
    %v2349 = vld [vmem:[#allocation2 + $0x128] sm:$0xff]
    %v2350 = vld [vmem:[#allocation2 + $0x130] sm:$0xff]
    %v2351 = vld [vmem:[#allocation2 + $0x138] sm:$0xff]
    %v2352 = vpack.c.bf16 %v2340, %v2340
    %v2353 = vpack.c.bf16 %v2341, %v2341
    %2354 = vmatprep.subr.bf16.mxu0 %v1145
    %2355 = vmatpush1.bf16.msra.mxu0 %v1144
    %2356 = vmatprep.subr.bf16.mxu0 %v1137
    %2357 = vmatpush1.bf16.msra.mxu0 %v1136
    %2358 = vmatprep.subr.bf16.mxu0 %v1129
    %2359 = vmatpush1.bf16.msra.mxu0 %v1128
    %2360 = vmatprep.subr.bf16.mxu0 %v1121
    %2361 = vmatpush1.bf16.msra.mxu0 %v1120
    %2362 = vmatprep.subr.bf16.mxu0 %v1113
    %2363 = vmatpush1.bf16.msra.mxu0 %v1112
    %2364 = vmatprep.subr.bf16.mxu0 %v1105
    %2365 = vmatpush1.bf16.msra.mxu0 %v1104
    %2366 = vmatprep.subr.bf16.mxu0 %v1097
    %2367 = vmatpush1.bf16.msra.mxu0 %v1096
    %2368 = vmatprep.subr.bf16.mxu0 %v1089
    %2369 = vmatpush1.bf16.msra.mxu0 %v1088
    %2370 = vmatprep.subr.bf16.mxu0 %v1209
    %2371 = vmatpush2.bf16.msra.mxu0 %v1208
    %2372 = vmatprep.subr.bf16.mxu0 %v1201
    %2373 = vmatpush2.bf16.msra.mxu0 %v1200
    %2374 = vmatprep.subr.bf16.mxu0 %v1193
    %2375 = vmatpush2.bf16.msra.mxu0 %v1192
    %2376 = vmatprep.subr.bf16.mxu0 %v1185
    %2377 = vmatpush2.bf16.msra.mxu0 %v1184
    %2378 = vmatprep.subr.bf16.mxu0 %v1177
    %2379 = vmatpush2.bf16.msra.mxu0 %v1176
    %2380 = vmatprep.subr.bf16.mxu0 %v1169
    %2381 = vmatpush2.bf16.msra.mxu0 %v1168
    %2382 = vmatprep.subr.bf16.mxu0 %v1161
    %2383 = vmatpush2.bf16.msra.mxu0 %v1160
    %2384 = vmatprep.subr.bf16.mxu0 %v1153
    %2385 = vmatpush2.bf16.msra.mxu0 %v1152
    %2386 = vmatprep.mubr.bf16.mxu0 %v2353
    %2387 = vmatmul.mubr.bf16.gmra.mxu0 %v2352
    %v2388 = vpop.f32.mrf.mxu0
    %v2389 = vadd.f32 0.0, %v2388
    %v2390 = vpop.f32.mrf.mxu0
    %v2391 = vadd.f32 0.0, %v2390
    %v2392 = vpop.f32.mrf.mxu0
    %v2393 = vpop.f32.mrf.mxu0
    %2394 = vdwg.mxu0
    %2395 = vmatprep.subr.bf16.mxu0 %v1147
    %2396 = vmatpush1.bf16.msra.mxu0 %v1146
    %2397 = vmatprep.subr.bf16.mxu0 %v1139
    %2398 = vmatpush1.bf16.msra.mxu0 %v1138
    %2399 = vmatprep.subr.bf16.mxu0 %v1131
    %2400 = vmatpush1.bf16.msra.mxu0 %v1130
    %2401 = vmatprep.subr.bf16.mxu0 %v1123
    %2402 = vmatpush1.bf16.msra.mxu0 %v1122
    %2403 = vmatprep.subr.bf16.mxu0 %v1115
    %2404 = vmatpush1.bf16.msra.mxu0 %v1114
    %2405 = vmatprep.subr.bf16.mxu0 %v1107
    %2406 = vmatpush1.bf16.msra.mxu0 %v1106
    %2407 = vmatprep.subr.bf16.mxu0 %v1099
    %2408 = vmatpush1.bf16.msra.mxu0 %v1098
    %2409 = vmatprep.subr.bf16.mxu0 %v1091
    %2410 = vmatpush1.bf16.msra.mxu0 %v1090
    %2411 = vmatprep.subr.bf16.mxu0 %v1211
    %2412 = vmatpush2.bf16.msra.mxu0 %v1210
    %2413 = vmatprep.subr.bf16.mxu0 %v1203
    %2414 = vmatpush2.bf16.msra.mxu0 %v1202
    %2415 = vmatprep.subr.bf16.mxu0 %v1195
    %2416 = vmatpush2.bf16.msra.mxu0 %v1194
    %2417 = vmatprep.subr.bf16.mxu0 %v1187
    %2418 = vmatpush2.bf16.msra.mxu0 %v1186
    %2419 = vmatprep.subr.bf16.mxu0 %v1179
    %2420 = vmatpush2.bf16.msra.mxu0 %v1178
    %2421 = vmatprep.subr.bf16.mxu0 %v1171
    %2422 = vmatpush2.bf16.msra.mxu0 %v1170
    %2423 = vmatprep.subr.bf16.mxu0 %v1163
    %2424 = vmatpush2.bf16.msra.mxu0 %v1162
    %2425 = vmatprep.subr.bf16.mxu0 %v1155
    %2426 = vmatpush2.bf16.msra.mxu0 %v1154
    %2427 = vmatprep.mubr.bf16.mxu0 %v2353
    %2428 = vmatmul.mubr.bf16.gmra.mxu0 %v2352
    %v2429 = vpop.f32.mrf.mxu0
    %v2430 = vadd.f32 0.0, %v2429
    %v2431 = vpop.f32.mrf.mxu0
    %v2432 = vadd.f32 0.0, %v2431
    %v2433 = vpop.f32.mrf.mxu0
    %v2434 = vpop.f32.mrf.mxu0
    %2435 = vdwg.mxu0
    %2436 = vmatprep.subr.bf16.mxu0 %v1149
    %2437 = vmatpush1.bf16.msra.mxu0 %v1148
    %2438 = vmatprep.subr.bf16.mxu0 %v1141
    %2439 = vmatpush1.bf16.msra.mxu0 %v1140
    %2440 = vmatprep.subr.bf16.mxu0 %v1133
    %2441 = vmatpush1.bf16.msra.mxu0 %v1132
    %2442 = vmatprep.subr.bf16.mxu0 %v1125
    %2443 = vmatpush1.bf16.msra.mxu0 %v1124
    %2444 = vmatprep.subr.bf16.mxu0 %v1117
    %2445 = vmatpush1.bf16.msra.mxu0 %v1116
    %2446 = vmatprep.subr.bf16.mxu0 %v1109
    %2447 = vmatpush1.bf16.msra.mxu0 %v1108
    %2448 = vmatprep.subr.bf16.mxu0 %v1101
    %2449 = vmatpush1.bf16.msra.mxu0 %v1100
    %2450 = vmatprep.subr.bf16.mxu0 %v1093
    %2451 = vmatpush1.bf16.msra.mxu0 %v1092
    %2452 = vmatprep.subr.bf16.mxu0 %v1213
    %2453 = vmatpush2.bf16.msra.mxu0 %v1212
    %2454 = vmatprep.subr.bf16.mxu0 %v1205
    %2455 = vmatpush2.bf16.msra.mxu0 %v1204
    %2456 = vmatprep.subr.bf16.mxu0 %v1197
    %2457 = vmatpush2.bf16.msra.mxu0 %v1196
    %2458 = vmatprep.subr.bf16.mxu0 %v1189
    %2459 = vmatpush2.bf16.msra.mxu0 %v1188
    %2460 = vmatprep.subr.bf16.mxu0 %v1181
    %2461 = vmatpush2.bf16.msra.mxu0 %v1180
    %2462 = vmatprep.subr.bf16.mxu0 %v1173
    %2463 = vmatpush2.bf16.msra.mxu0 %v1172
    %2464 = vmatprep.subr.bf16.mxu0 %v1165
    %2465 = vmatpush2.bf16.msra.mxu0 %v1164
    %2466 = vmatprep.subr.bf16.mxu0 %v1157
    %2467 = vmatpush2.bf16.msra.mxu0 %v1156
    %2468 = vmatprep.mubr.bf16.mxu0 %v2353
    %2469 = vmatmul.mubr.bf16.gmra.mxu0 %v2352
    %v2470 = vpop.f32.mrf.mxu0
    %v2471 = vadd.f32 0.0, %v2470
    %v2472 = vpop.f32.mrf.mxu0
    %v2473 = vadd.f32 0.0, %v2472
    %v2474 = vpop.f32.mrf.mxu0
    %v2475 = vpop.f32.mrf.mxu0
    %2476 = vdwg.mxu0
    %2477 = vmatprep.subr.bf16.mxu0 %v1151
    %2478 = vmatpush1.bf16.msra.mxu0 %v1150
    %2479 = vmatprep.subr.bf16.mxu0 %v1143
    %2480 = vmatpush1.bf16.msra.mxu0 %v1142
    %2481 = vmatprep.subr.bf16.mxu0 %v1135
    %2482 = vmatpush1.bf16.msra.mxu0 %v1134
    %2483 = vmatprep.subr.bf16.mxu0 %v1127
    %2484 = vmatpush1.bf16.msra.mxu0 %v1126
    %2485 = vmatprep.subr.bf16.mxu0 %v1119
    %2486 = vmatpush1.bf16.msra.mxu0 %v1118
    %2487 = vmatprep.subr.bf16.mxu0 %v1111
    %2488 = vmatpush1.bf16.msra.mxu0 %v1110
    %2489 = vmatprep.subr.bf16.mxu0 %v1103
    %2490 = vmatpush1.bf16.msra.mxu0 %v1102
    %2491 = vmatprep.subr.bf16.mxu0 %v1095
    %2492 = vmatpush1.bf16.msra.mxu0 %v1094
    %2493 = vmatprep.subr.bf16.mxu0 %v1215
    %2494 = vmatpush2.bf16.msra.mxu0 %v1214
    %2495 = vmatprep.subr.bf16.mxu0 %v1207
    %2496 = vmatpush2.bf16.msra.mxu0 %v1206
    %2497 = vmatprep.subr.bf16.mxu0 %v1199
    %2498 = vmatpush2.bf16.msra.mxu0 %v1198
    %2499 = vmatprep.subr.bf16.mxu0 %v1191
    %2500 = vmatpush2.bf16.msra.mxu0 %v1190
    %2501 = vmatprep.subr.bf16.mxu0 %v1183
    %2502 = vmatpush2.bf16.msra.mxu0 %v1182
    %2503 = vmatprep.subr.bf16.mxu0 %v1175
    %2504 = vmatpush2.bf16.msra.mxu0 %v1174
    %2505 = vmatprep.subr.bf16.mxu0 %v1167
    %2506 = vmatpush2.bf16.msra.mxu0 %v1166
    %2507 = vmatprep.subr.bf16.mxu0 %v1159
    %2508 = vmatpush2.bf16.msra.mxu0 %v1158
    %2509 = vmatprep.mubr.bf16.mxu0 %v2353
    %2510 = vmatmul.mubr.bf16.gmra.mxu0 %v2352
    %v2511 = vpop.f32.mrf.mxu0
    %v2512 = vadd.f32 0.0, %v2511
    %v2513 = vpop.f32.mrf.mxu0
    %v2514 = vadd.f32 0.0, %v2513
    %v2515 = vpop.f32.mrf.mxu0
    %v2516 = vpop.f32.mrf.mxu0
    %2517 = vdwg.mxu0
    %v2518 = vadd.f32 %v2344, %v2389
    %v2519 = vadd.f32 %v2345, %v2391
    %v2520 = vadd.f32 %v2346, %v2430
    %v2521 = vadd.f32 %v2347, %v2432
    %v2522 = vadd.f32 %v2348, %v2471
    %v2523 = vadd.f32 %v2349, %v2473
    %v2524 = vadd.f32 %v2350, %v2512
    %v2525 = vadd.f32 %v2351, %v2514
    %v2526 = vxor.u32 %v2518, 2147483648
    %v2527 = vxor.u32 %v2519, 2147483648
    %v2528 = vxor.u32 %v2520, 2147483648
    %v2529 = vxor.u32 %v2521, 2147483648
    %v2530 = vxor.u32 %v2522, 2147483648
    %v2531 = vxor.u32 %v2523, 2147483648
    %v2532 = vxor.u32 %v2524, 2147483648
    %v2533 = vxor.u32 %v2525, 2147483648
    %v2534 = vmul.f32 %v2526, 1.442695
    %v2535 = vpow.pop %v2534
    %v2536 = vmul.f32 %v2527, 1.442695
    %v2537 = vpow.pop %v2536
    %v2538 = vmul.f32 %v2528, 1.442695
    %v2539 = vpow.pop %v2538
    %v2540 = vmul.f32 %v2529, 1.442695
    %v2541 = vpow.pop %v2540
    %v2542 = vmul.f32 %v2530, 1.442695
    %v2543 = vpow.pop %v2542
    %v2544 = vmul.f32 %v2531, 1.442695
    %v2545 = vpow.pop %v2544
    %v2546 = vmul.f32 %v2532, 1.442695
    %v2547 = vpow.pop %v2546
    %v2548 = vmul.f32 %v2533, 1.442695
    %v2549 = vpow.pop %v2548
    %v2550 = vadd.f32 %v2535, 1.0
    %v2551 = vadd.f32 %v2537, 1.0
    %v2552 = vadd.f32 %v2539, 1.0
    %v2553 = vadd.f32 %v2541, 1.0
    %v2554 = vadd.f32 %v2543, 1.0
    %v2555 = vadd.f32 %v2545, 1.0
    %v2556 = vadd.f32 %v2547, 1.0
    %v2557 = vadd.f32 %v2549, 1.0
    %v2558 = vrcp.pop %v2550
    %v2559 = vmul.f32 1.0, %v2558
    %v2560 = vrcp.pop %v2551
    %v2561 = vmul.f32 1.0, %v2560
    %v2562 = vrcp.pop %v2552
    %v2563 = vmul.f32 1.0, %v2562
    %v2564 = vrcp.pop %v2553
    %v2565 = vmul.f32 1.0, %v2564
    %v2566 = vrcp.pop %v2554
    %v2567 = vmul.f32 1.0, %v2566
    %v2568 = vrcp.pop %v2555
    %v2569 = vmul.f32 1.0, %v2568
    %v2570 = vrcp.pop %v2556
    %v2571 = vmul.f32 1.0, %v2570
    %v2572 = vrcp.pop %v2557
    %v2573 = vmul.f32 1.0, %v2572
    %v2574 = vmul.f32 %v2567, 2.0
    %v2575 = vmul.f32 %v2569, 2.0
    %v2576 = vsub.f32 %v2574, 1.0
    %v2577 = vsub.f32 %v2575, 1.0
    %v2578 = vmul.f32 %v2563, %v2342
    %v2579 = vmul.f32 %v2565, %v2343
    %v2580 = vmul.f32 %v2559, %v2576
    %v2581 = vmul.f32 %v2561, %v2577
    %v2582 = vadd.f32 %v2578, %v2580
    %v2583 = vadd.f32 %v2579, %v2581
    %v2584 = vtanh.pop %v2582
    %v2585 = vtanh.pop %v2583
    %v2586 = vmul.f32 %v2571, %v2584
    %v2587 = vmul.f32 %v2573, %v2585
    %vm2588 = vcmp.lt.s32.totalorder %v560, 160
    %vm2589 = vcmp.lt.s32.totalorder %v561, 160
    %vm2590 = vmand %vm1578, %vm2588
    %vm2591 = vmand %vm1579, %vm2589
    %v2592 = vsel %vm2590, %v2586, %v2340
    %v2593 = vsel %vm2591, %v2587, %v2341
    %v2594 = vsel %vm2590, %v2582, %v2342
    %v2595 = vsel %vm2591, %v2583, %v2343
    %v2596 = vld [vmem:[#allocation2 + $0x140] sm:$0xff]
    %v2597 = vld [vmem:[#allocation2 + $0x148] sm:$0xff]
    %v2598 = vld [vmem:[#allocation2 + $0x150] sm:$0xff]
    %v2599 = vld [vmem:[#allocation2 + $0x158] sm:$0xff]
    %v2600 = vld [vmem:[#allocation2 + $0x160] sm:$0xff]
    %v2601 = vld [vmem:[#allocation2 + $0x168] sm:$0xff]
    %v2602 = vld [vmem:[#allocation2 + $0x170] sm:$0xff]
    %v2603 = vld [vmem:[#allocation2 + $0x178] sm:$0xff]
    %v2604 = vpack.c.bf16 %v2592, %v2592
    %v2605 = vpack.c.bf16 %v2593, %v2593
    %2606 = vmatprep.subr.bf16.mxu0 %v1145
    %2607 = vmatpush1.bf16.msra.mxu0 %v1144
    %2608 = vmatprep.subr.bf16.mxu0 %v1137
    %2609 = vmatpush1.bf16.msra.mxu0 %v1136
    %2610 = vmatprep.subr.bf16.mxu0 %v1129
    %2611 = vmatpush1.bf16.msra.mxu0 %v1128
    %2612 = vmatprep.subr.bf16.mxu0 %v1121
    %2613 = vmatpush1.bf16.msra.mxu0 %v1120
    %2614 = vmatprep.subr.bf16.mxu0 %v1113
    %2615 = vmatpush1.bf16.msra.mxu0 %v1112
    %2616 = vmatprep.subr.bf16.mxu0 %v1105
    %2617 = vmatpush1.bf16.msra.mxu0 %v1104
    %2618 = vmatprep.subr.bf16.mxu0 %v1097
    %2619 = vmatpush1.bf16.msra.mxu0 %v1096
    %2620 = vmatprep.subr.bf16.mxu0 %v1089
    %2621 = vmatpush1.bf16.msra.mxu0 %v1088
    %2622 = vmatprep.subr.bf16.mxu0 %v1209
    %2623 = vmatpush2.bf16.msra.mxu0 %v1208
    %2624 = vmatprep.subr.bf16.mxu0 %v1201
    %2625 = vmatpush2.bf16.msra.mxu0 %v1200
    %2626 = vmatprep.subr.bf16.mxu0 %v1193
    %2627 = vmatpush2.bf16.msra.mxu0 %v1192
    %2628 = vmatprep.subr.bf16.mxu0 %v1185
    %2629 = vmatpush2.bf16.msra.mxu0 %v1184
    %2630 = vmatprep.subr.bf16.mxu0 %v1177
    %2631 = vmatpush2.bf16.msra.mxu0 %v1176
    %2632 = vmatprep.subr.bf16.mxu0 %v1169
    %2633 = vmatpush2.bf16.msra.mxu0 %v1168
    %2634 = vmatprep.subr.bf16.mxu0 %v1161
    %2635 = vmatpush2.bf16.msra.mxu0 %v1160
    %2636 = vmatprep.subr.bf16.mxu0 %v1153
    %2637 = vmatpush2.bf16.msra.mxu0 %v1152
    %2638 = vmatprep.mubr.bf16.mxu0 %v2605
    %2639 = vmatmul.mubr.bf16.gmra.mxu0 %v2604
    %v2640 = vpop.f32.mrf.mxu0
    %v2641 = vadd.f32 0.0, %v2640
    %v2642 = vpop.f32.mrf.mxu0
    %v2643 = vadd.f32 0.0, %v2642
    %v2644 = vpop.f32.mrf.mxu0
    %v2645 = vpop.f32.mrf.mxu0
    %2646 = vdwg.mxu0
    %2647 = vmatprep.subr.bf16.mxu0 %v1147
    %2648 = vmatpush1.bf16.msra.mxu0 %v1146
    %2649 = vmatprep.subr.bf16.mxu0 %v1139
    %2650 = vmatpush1.bf16.msra.mxu0 %v1138
    %2651 = vmatprep.subr.bf16.mxu0 %v1131
    %2652 = vmatpush1.bf16.msra.mxu0 %v1130
    %2653 = vmatprep.subr.bf16.mxu0 %v1123
    %2654 = vmatpush1.bf16.msra.mxu0 %v1122
    %2655 = vmatprep.subr.bf16.mxu0 %v1115
    %2656 = vmatpush1.bf16.msra.mxu0 %v1114
    %2657 = vmatprep.subr.bf16.mxu0 %v1107
    %2658 = vmatpush1.bf16.msra.mxu0 %v1106
    %2659 = vmatprep.subr.bf16.mxu0 %v1099
    %2660 = vmatpush1.bf16.msra.mxu0 %v1098
    %2661 = vmatprep.subr.bf16.mxu0 %v1091
    %2662 = vmatpush1.bf16.msra.mxu0 %v1090
    %2663 = vmatprep.subr.bf16.mxu0 %v1211
    %2664 = vmatpush2.bf16.msra.mxu0 %v1210
    %2665 = vmatprep.subr.bf16.mxu0 %v1203
    %2666 = vmatpush2.bf16.msra.mxu0 %v1202
    %2667 = vmatprep.subr.bf16.mxu0 %v1195
    %2668 = vmatpush2.bf16.msra.mxu0 %v1194
    %2669 = vmatprep.subr.bf16.mxu0 %v1187
    %2670 = vmatpush2.bf16.msra.mxu0 %v1186
    %2671 = vmatprep.subr.bf16.mxu0 %v1179
    %2672 = vmatpush2.bf16.msra.mxu0 %v1178
    %2673 = vmatprep.subr.bf16.mxu0 %v1171
    %2674 = vmatpush2.bf16.msra.mxu0 %v1170
    %2675 = vmatprep.subr.bf16.mxu0 %v1163
    %2676 = vmatpush2.bf16.msra.mxu0 %v1162
    %2677 = vmatprep.subr.bf16.mxu0 %v1155
    %2678 = vmatpush2.bf16.msra.mxu0 %v1154
    %2679 = vmatprep.mubr.bf16.mxu0 %v2605
    %2680 = vmatmul.mubr.bf16.gmra.mxu0 %v2604
    %v2681 = vpop.f32.mrf.mxu0
    %v2682 = vadd.f32 0.0, %v2681
    %v2683 = vpop.f32.mrf.mxu0
    %v2684 = vadd.f32 0.0, %v2683
    %v2685 = vpop.f32.mrf.mxu0
    %v2686 = vpop.f32.mrf.mxu0
    %2687 = vdwg.mxu0
    %2688 = vmatprep.subr.bf16.mxu0 %v1149
    %2689 = vmatpush1.bf16.msra.mxu0 %v1148
    %2690 = vmatprep.subr.bf16.mxu0 %v1141
    %2691 = vmatpush1.bf16.msra.mxu0 %v1140
    %2692 = vmatprep.subr.bf16.mxu0 %v1133
    %2693 = vmatpush1.bf16.msra.mxu0 %v1132
    %2694 = vmatprep.subr.bf16.mxu0 %v1125
    %2695 = vmatpush1.bf16.msra.mxu0 %v1124
    %2696 = vmatprep.subr.bf16.mxu0 %v1117
    %2697 = vmatpush1.bf16.msra.mxu0 %v1116
    %2698 = vmatprep.subr.bf16.mxu0 %v1109
    %2699 = vmatpush1.bf16.msra.mxu0 %v1108
    %2700 = vmatprep.subr.bf16.mxu0 %v1101
    %2701 = vmatpush1.bf16.msra.mxu0 %v1100
    %2702 = vmatprep.subr.bf16.mxu0 %v1093
    %2703 = vmatpush1.bf16.msra.mxu0 %v1092
    %2704 = vmatprep.subr.bf16.mxu0 %v1213
    %2705 = vmatpush2.bf16.msra.mxu0 %v1212
    %2706 = vmatprep.subr.bf16.mxu0 %v1205
    %2707 = vmatpush2.bf16.msra.mxu0 %v1204
    %2708 = vmatprep.subr.bf16.mxu0 %v1197
    %2709 = vmatpush2.bf16.msra.mxu0 %v1196
    %2710 = vmatprep.subr.bf16.mxu0 %v1189
    %2711 = vmatpush2.bf16.msra.mxu0 %v1188
    %2712 = vmatprep.subr.bf16.mxu0 %v1181
    %2713 = vmatpush2.bf16.msra.mxu0 %v1180
    %2714 = vmatprep.subr.bf16.mxu0 %v1173
    %2715 = vmatpush2.bf16.msra.mxu0 %v1172
    %2716 = vmatprep.subr.bf16.mxu0 %v1165
    %2717 = vmatpush2.bf16.msra.mxu0 %v1164
    %2718 = vmatprep.subr.bf16.mxu0 %v1157
    %2719 = vmatpush2.bf16.msra.mxu0 %v1156
    %2720 = vmatprep.mubr.bf16.mxu0 %v2605
    %2721 = vmatmul.mubr.bf16.gmra.mxu0 %v2604
    %v2722 = vpop.f32.mrf.mxu0
    %v2723 = vadd.f32 0.0, %v2722
    %v2724 = vpop.f32.mrf.mxu0
    %v2725 = vadd.f32 0.0, %v2724
    %v2726 = vpop.f32.mrf.mxu0
    %v2727 = vpop.f32.mrf.mxu0
    %2728 = vdwg.mxu0
    %2729 = vmatprep.subr.bf16.mxu0 %v1151
    %2730 = vmatpush1.bf16.msra.mxu0 %v1150
    %2731 = vmatprep.subr.bf16.mxu0 %v1143
    %2732 = vmatpush1.bf16.msra.mxu0 %v1142
    %2733 = vmatprep.subr.bf16.mxu0 %v1135
    %2734 = vmatpush1.bf16.msra.mxu0 %v1134
    %2735 = vmatprep.subr.bf16.mxu0 %v1127
    %2736 = vmatpush1.bf16.msra.mxu0 %v1126
    %2737 = vmatprep.subr.bf16.mxu0 %v1119
    %2738 = vmatpush1.bf16.msra.mxu0 %v1118
    %2739 = vmatprep.subr.bf16.mxu0 %v1111
    %2740 = vmatpush1.bf16.msra.mxu0 %v1110
    %2741 = vmatprep.subr.bf16.mxu0 %v1103
    %2742 = vmatpush1.bf16.msra.mxu0 %v1102
    %2743 = vmatprep.subr.bf16.mxu0 %v1095
    %2744 = vmatpush1.bf16.msra.mxu0 %v1094
    %2745 = vmatprep.subr.bf16.mxu0 %v1215
    %2746 = vmatpush2.bf16.msra.mxu0 %v1214
    %2747 = vmatprep.subr.bf16.mxu0 %v1207
    %2748 = vmatpush2.bf16.msra.mxu0 %v1206
    %2749 = vmatprep.subr.bf16.mxu0 %v1199
    %2750 = vmatpush2.bf16.msra.mxu0 %v1198
    %2751 = vmatprep.subr.bf16.mxu0 %v1191
    %2752 = vmatpush2.bf16.msra.mxu0 %v1190
    %2753 = vmatprep.subr.bf16.mxu0 %v1183
    %2754 = vmatpush2.bf16.msra.mxu0 %v1182
    %2755 = vmatprep.subr.bf16.mxu0 %v1175
    %2756 = vmatpush2.bf16.msra.mxu0 %v1174
    %2757 = vmatprep.subr.bf16.mxu0 %v1167
    %2758 = vmatpush2.bf16.msra.mxu0 %v1166
    %2759 = vmatprep.subr.bf16.mxu0 %v1159
    %2760 = vmatpush2.bf16.msra.mxu0 %v1158
    %2761 = vmatprep.mubr.bf16.mxu0 %v2605
    %2762 = vmatmul.mubr.bf16.gmra.mxu0 %v2604
    %v2763 = vpop.f32.mrf.mxu0
    %v2764 = vadd.f32 0.0, %v2763
    %v2765 = vpop.f32.mrf.mxu0
    %v2766 = vadd.f32 0.0, %v2765
    %v2767 = vpop.f32.mrf.mxu0
    %v2768 = vpop.f32.mrf.mxu0
    %2769 = vdwg.mxu0
    %v2770 = vadd.f32 %v2596, %v2641
    %v2771 = vadd.f32 %v2597, %v2643
    %v2772 = vadd.f32 %v2598, %v2682
    %v2773 = vadd.f32 %v2599, %v2684
    %v2774 = vadd.f32 %v2600, %v2723
    %v2775 = vadd.f32 %v2601, %v2725
    %v2776 = vadd.f32 %v2602, %v2764
    %v2777 = vadd.f32 %v2603, %v2766
    %v2778 = vxor.u32 %v2770, 2147483648
    %v2779 = vxor.u32 %v2771, 2147483648
    %v2780 = vxor.u32 %v2772, 2147483648
    %v2781 = vxor.u32 %v2773, 2147483648
    %v2782 = vxor.u32 %v2774, 2147483648
    %v2783 = vxor.u32 %v2775, 2147483648
    %v2784 = vxor.u32 %v2776, 2147483648
    %v2785 = vxor.u32 %v2777, 2147483648
    %v2786 = vmul.f32 %v2778, 1.442695
    %v2787 = vpow.pop %v2786
    %v2788 = vmul.f32 %v2779, 1.442695
    %v2789 = vpow.pop %v2788
    %v2790 = vmul.f32 %v2780, 1.442695
    %v2791 = vpow.pop %v2790
    %v2792 = vmul.f32 %v2781, 1.442695
    %v2793 = vpow.pop %v2792
    %v2794 = vmul.f32 %v2782, 1.442695
    %v2795 = vpow.pop %v2794
    %v2796 = vmul.f32 %v2783, 1.442695
    %v2797 = vpow.pop %v2796
    %v2798 = vmul.f32 %v2784, 1.442695
    %v2799 = vpow.pop %v2798
    %v2800 = vmul.f32 %v2785, 1.442695
    %v2801 = vpow.pop %v2800
    %v2802 = vadd.f32 %v2787, 1.0
    %v2803 = vadd.f32 %v2789, 1.0
    %v2804 = vadd.f32 %v2791, 1.0
    %v2805 = vadd.f32 %v2793, 1.0
    %v2806 = vadd.f32 %v2795, 1.0
    %v2807 = vadd.f32 %v2797, 1.0
    %v2808 = vadd.f32 %v2799, 1.0
    %v2809 = vadd.f32 %v2801, 1.0
    %v2810 = vrcp.pop %v2802
    %v2811 = vmul.f32 1.0, %v2810
    %v2812 = vrcp.pop %v2803
    %v2813 = vmul.f32 1.0, %v2812
    %v2814 = vrcp.pop %v2804
    %v2815 = vmul.f32 1.0, %v2814
    %v2816 = vrcp.pop %v2805
    %v2817 = vmul.f32 1.0, %v2816
    %v2818 = vrcp.pop %v2806
    %v2819 = vmul.f32 1.0, %v2818
    %v2820 = vrcp.pop %v2807
    %v2821 = vmul.f32 1.0, %v2820
    %v2822 = vrcp.pop %v2808
    %v2823 = vmul.f32 1.0, %v2822
    %v2824 = vrcp.pop %v2809
    %v2825 = vmul.f32 1.0, %v2824
    %v2826 = vmul.f32 %v2819, 2.0
    %v2827 = vmul.f32 %v2821, 2.0
    %v2828 = vsub.f32 %v2826, 1.0
    %v2829 = vsub.f32 %v2827, 1.0
    %v2830 = vmul.f32 %v2815, %v2594
    %v2831 = vmul.f32 %v2817, %v2595
    %v2832 = vmul.f32 %v2811, %v2828
    %v2833 = vmul.f32 %v2813, %v2829
    %v2834 = vadd.f32 %v2830, %v2832
    %v2835 = vadd.f32 %v2831, %v2833
    %v2836 = vtanh.pop %v2834
    %v2837 = vtanh.pop %v2835
    %v2838 = vmul.f32 %v2823, %v2836
    %v2839 = vmul.f32 %v2825, %v2837
    %v2840 = vsel %vm2590, %v2838, %v2340
    %v2841 = vsel %vm2591, %v2839, %v2341
    %v2842 = vsel %vm2590, %v2834, %v2342
    %v2843 = vsel %vm2591, %v2835, %v2343
    %v2844 = vld [vmem:[#allocation2 + $0x180] sm:$0xff]
    %v2845 = vld [vmem:[#allocation2 + $0x188] sm:$0xff]
    %v2846 = vld [vmem:[#allocation2 + $0x190] sm:$0xff]
    %v2847 = vld [vmem:[#allocation2 + $0x198] sm:$0xff]
    %v2848 = vld [vmem:[#allocation2 + $0x1a0] sm:$0xff]
    %v2849 = vld [vmem:[#allocation2 + $0x1a8] sm:$0xff]
    %v2850 = vld [vmem:[#allocation2 + $0x1b0] sm:$0xff]
    %v2851 = vld [vmem:[#allocation2 + $0x1b8] sm:$0xff]
    %v2852 = vpack.c.bf16 %v2840, %v2840
    %v2853 = vpack.c.bf16 %v2841, %v2841
    %2854 = vmatprep.subr.bf16.mxu0 %v1145
    %2855 = vmatpush1.bf16.msra.mxu0 %v1144
    %2856 = vmatprep.subr.bf16.mxu0 %v1137
    %2857 = vmatpush1.bf16.msra.mxu0 %v1136
    %2858 = vmatprep.subr.bf16.mxu0 %v1129
    %2859 = vmatpush1.bf16.msra.mxu0 %v1128
    %2860 = vmatprep.subr.bf16.mxu0 %v1121
    %2861 = vmatpush1.bf16.msra.mxu0 %v1120
    %2862 = vmatprep.subr.bf16.mxu0 %v1113
    %2863 = vmatpush1.bf16.msra.mxu0 %v1112
    %2864 = vmatprep.subr.bf16.mxu0 %v1105
    %2865 = vmatpush1.bf16.msra.mxu0 %v1104
    %2866 = vmatprep.subr.bf16.mxu0 %v1097
    %2867 = vmatpush1.bf16.msra.mxu0 %v1096
    %2868 = vmatprep.subr.bf16.mxu0 %v1089
    %2869 = vmatpush1.bf16.msra.mxu0 %v1088
    %2870 = vmatprep.subr.bf16.mxu0 %v1209
    %2871 = vmatpush2.bf16.msra.mxu0 %v1208
    %2872 = vmatprep.subr.bf16.mxu0 %v1201
    %2873 = vmatpush2.bf16.msra.mxu0 %v1200
    %2874 = vmatprep.subr.bf16.mxu0 %v1193
    %2875 = vmatpush2.bf16.msra.mxu0 %v1192
    %2876 = vmatprep.subr.bf16.mxu0 %v1185
    %2877 = vmatpush2.bf16.msra.mxu0 %v1184
    %2878 = vmatprep.subr.bf16.mxu0 %v1177
    %2879 = vmatpush2.bf16.msra.mxu0 %v1176
    %2880 = vmatprep.subr.bf16.mxu0 %v1169
    %2881 = vmatpush2.bf16.msra.mxu0 %v1168
    %2882 = vmatprep.subr.bf16.mxu0 %v1161
    %2883 = vmatpush2.bf16.msra.mxu0 %v1160
    %2884 = vmatprep.subr.bf16.mxu0 %v1153
    %2885 = vmatpush2.bf16.msra.mxu0 %v1152
    %2886 = vmatprep.mubr.bf16.mxu0 %v2853
    %2887 = vmatmul.mubr.bf16.gmra.mxu0 %v2852
    %v2888 = vpop.f32.mrf.mxu0
    %v2889 = vadd.f32 0.0, %v2888
    %v2890 = vpop.f32.mrf.mxu0
    %v2891 = vadd.f32 0.0, %v2890
    %v2892 = vpop.f32.mrf.mxu0
    %v2893 = vpop.f32.mrf.mxu0
    %2894 = vdwg.mxu0
    %2895 = vmatprep.subr.bf16.mxu0 %v1147
    %2896 = vmatpush1.bf16.msra.mxu0 %v1146
    %2897 = vmatprep.subr.bf16.mxu0 %v1139
    %2898 = vmatpush1.bf16.msra.mxu0 %v1138
    %2899 = vmatprep.subr.bf16.mxu0 %v1131
    %2900 = vmatpush1.bf16.msra.mxu0 %v1130
    %2901 = vmatprep.subr.bf16.mxu0 %v1123
    %2902 = vmatpush1.bf16.msra.mxu0 %v1122
    %2903 = vmatprep.subr.bf16.mxu0 %v1115
    %2904 = vmatpush1.bf16.msra.mxu0 %v1114
    %2905 = vmatprep.subr.bf16.mxu0 %v1107
    %2906 = vmatpush1.bf16.msra.mxu0 %v1106
    %2907 = vmatprep.subr.bf16.mxu0 %v1099
    %2908 = vmatpush1.bf16.msra.mxu0 %v1098
    %2909 = vmatprep.subr.bf16.mxu0 %v1091
    %2910 = vmatpush1.bf16.msra.mxu0 %v1090
    %2911 = vmatprep.subr.bf16.mxu0 %v1211
    %2912 = vmatpush2.bf16.msra.mxu0 %v1210
    %2913 = vmatprep.subr.bf16.mxu0 %v1203
    %2914 = vmatpush2.bf16.msra.mxu0 %v1202
    %2915 = vmatprep.subr.bf16.mxu0 %v1195
    %2916 = vmatpush2.bf16.msra.mxu0 %v1194
    %2917 = vmatprep.subr.bf16.mxu0 %v1187
    %2918 = vmatpush2.bf16.msra.mxu0 %v1186
    %2919 = vmatprep.subr.bf16.mxu0 %v1179
    %2920 = vmatpush2.bf16.msra.mxu0 %v1178
    %2921 = vmatprep.subr.bf16.mxu0 %v1171
    %2922 = vmatpush2.bf16.msra.mxu0 %v1170
    %2923 = vmatprep.subr.bf16.mxu0 %v1163
    %2924 = vmatpush2.bf16.msra.mxu0 %v1162
    %2925 = vmatprep.subr.bf16.mxu0 %v1155
    %2926 = vmatpush2.bf16.msra.mxu0 %v1154
    %2927 = vmatprep.mubr.bf16.mxu0 %v2853
    %2928 = vmatmul.mubr.bf16.gmra.mxu0 %v2852
    %v2929 = vpop.f32.mrf.mxu0
    %v2930 = vadd.f32 0.0, %v2929
    %v2931 = vpop.f32.mrf.mxu0
    %v2932 = vadd.f32 0.0, %v2931
    %v2933 = vpop.f32.mrf.mxu0
    %v2934 = vpop.f32.mrf.mxu0
    %2935 = vdwg.mxu0
    %2936 = vmatprep.subr.bf16.mxu0 %v1149
    %2937 = vmatpush1.bf16.msra.mxu0 %v1148
    %2938 = vmatprep.subr.bf16.mxu0 %v1141
    %2939 = vmatpush1.bf16.msra.mxu0 %v1140
    %2940 = vmatprep.subr.bf16.mxu0 %v1133
    %2941 = vmatpush1.bf16.msra.mxu0 %v1132
    %2942 = vmatprep.subr.bf16.mxu0 %v1125
    %2943 = vmatpush1.bf16.msra.mxu0 %v1124
    %2944 = vmatprep.subr.bf16.mxu0 %v1117
    %2945 = vmatpush1.bf16.msra.mxu0 %v1116
    %2946 = vmatprep.subr.bf16.mxu0 %v1109
    %2947 = vmatpush1.bf16.msra.mxu0 %v1108
    %2948 = vmatprep.subr.bf16.mxu0 %v1101
    %2949 = vmatpush1.bf16.msra.mxu0 %v1100
    %2950 = vmatprep.subr.bf16.mxu0 %v1093
    %2951 = vmatpush1.bf16.msra.mxu0 %v1092
    %2952 = vmatprep.subr.bf16.mxu0 %v1213
    %2953 = vmatpush2.bf16.msra.mxu0 %v1212
    %2954 = vmatprep.subr.bf16.mxu0 %v1205
    %2955 = vmatpush2.bf16.msra.mxu0 %v1204
    %2956 = vmatprep.subr.bf16.mxu0 %v1197
    %2957 = vmatpush2.bf16.msra.mxu0 %v1196
    %2958 = vmatprep.subr.bf16.mxu0 %v1189
    %2959 = vmatpush2.bf16.msra.mxu0 %v1188
    %2960 = vmatprep.subr.bf16.mxu0 %v1181
    %2961 = vmatpush2.bf16.msra.mxu0 %v1180
    %2962 = vmatprep.subr.bf16.mxu0 %v1173
    %2963 = vmatpush2.bf16.msra.mxu0 %v1172
    %2964 = vmatprep.subr.bf16.mxu0 %v1165
    %2965 = vmatpush2.bf16.msra.mxu0 %v1164
    %2966 = vmatprep.subr.bf16.mxu0 %v1157
    %2967 = vmatpush2.bf16.msra.mxu0 %v1156
    %2968 = vmatprep.mubr.bf16.mxu0 %v2853
    %2969 = vmatmul.mubr.bf16.gmra.mxu0 %v2852
    %v2970 = vpop.f32.mrf.mxu0
    %v2971 = vadd.f32 0.0, %v2970
    %v2972 = vpop.f32.mrf.mxu0
    %v2973 = vadd.f32 0.0, %v2972
    %v2974 = vpop.f32.mrf.mxu0
    %v2975 = vpop.f32.mrf.mxu0
    %2976 = vdwg.mxu0
    %2977 = vmatprep.subr.bf16.mxu0 %v1151
    %2978 = vmatpush1.bf16.msra.mxu0 %v1150
    %2979 = vmatprep.subr.bf16.mxu0 %v1143
    %2980 = vmatpush1.bf16.msra.mxu0 %v1142
    %2981 = vmatprep.subr.bf16.mxu0 %v1135
    %2982 = vmatpush1.bf16.msra.mxu0 %v1134
    %2983 = vmatprep.subr.bf16.mxu0 %v1127
    %2984 = vmatpush1.bf16.msra.mxu0 %v1126
    %2985 = vmatprep.subr.bf16.mxu0 %v1119
    %2986 = vmatpush1.bf16.msra.mxu0 %v1118
    %2987 = vmatprep.subr.bf16.mxu0 %v1111
    %2988 = vmatpush1.bf16.msra.mxu0 %v1110
    %2989 = vmatprep.subr.bf16.mxu0 %v1103
    %2990 = vmatpush1.bf16.msra.mxu0 %v1102
    %2991 = vmatprep.subr.bf16.mxu0 %v1095
    %2992 = vmatpush1.bf16.msra.mxu0 %v1094
    %2993 = vmatprep.subr.bf16.mxu0 %v1215
    %2994 = vmatpush2.bf16.msra.mxu0 %v1214
    %2995 = vmatprep.subr.bf16.mxu0 %v1207
    %2996 = vmatpush2.bf16.msra.mxu0 %v1206
    %2997 = vmatprep.subr.bf16.mxu0 %v1199
    %2998 = vmatpush2.bf16.msra.mxu0 %v1198
    %2999 = vmatprep.subr.bf16.mxu0 %v1191
    %3000 = vmatpush2.bf16.msra.mxu0 %v1190
    %3001 = vmatprep.subr.bf16.mxu0 %v1183
    %3002 = vmatpush2.bf16.msra.mxu0 %v1182
    %3003 = vmatprep.subr.bf16.mxu0 %v1175
    %3004 = vmatpush2.bf16.msra.mxu0 %v1174
    %3005 = vmatprep.subr.bf16.mxu0 %v1167
    %3006 = vmatpush2.bf16.msra.mxu0 %v1166
    %3007 = vmatprep.subr.bf16.mxu0 %v1159
    %3008 = vmatpush2.bf16.msra.mxu0 %v1158
    %3009 = vmatprep.mubr.bf16.mxu0 %v2853
    %3010 = vmatmul.mubr.bf16.gmra.mxu0 %v2852
    %v3011 = vpop.f32.mrf.mxu0
    %v3012 = vadd.f32 0.0, %v3011
    %v3013 = vpop.f32.mrf.mxu0
    %v3014 = vadd.f32 0.0, %v3013
    %v3015 = vpop.f32.mrf.mxu0
    %v3016 = vpop.f32.mrf.mxu0
    %3017 = vdwg.mxu0
    %v3018 = vadd.f32 %v2844, %v2889
    %v3019 = vadd.f32 %v2845, %v2891
    %v3020 = vadd.f32 %v2846, %v2930
    %v3021 = vadd.f32 %v2847, %v2932
    %v3022 = vadd.f32 %v2848, %v2971
    %v3023 = vadd.f32 %v2849, %v2973
    %v3024 = vadd.f32 %v2850, %v3012
    %v3025 = vadd.f32 %v2851, %v3014
    %v3026 = vxor.u32 %v3018, 2147483648
    %v3027 = vxor.u32 %v3019, 2147483648
    %v3028 = vxor.u32 %v3020, 2147483648
    %v3029 = vxor.u32 %v3021, 2147483648
    %v3030 = vxor.u32 %v3022, 2147483648
    %v3031 = vxor.u32 %v3023, 2147483648
    %v3032 = vxor.u32 %v3024, 2147483648
    %v3033 = vxor.u32 %v3025, 2147483648
    %v3034 = vmul.f32 %v3026, 1.442695
    %v3035 = vpow.pop %v3034
    %v3036 = vmul.f32 %v3027, 1.442695
    %v3037 = vpow.pop %v3036
    %v3038 = vmul.f32 %v3028, 1.442695
    %v3039 = vpow.pop %v3038
    %v3040 = vmul.f32 %v3029, 1.442695
    %v3041 = vpow.pop %v3040
    %v3042 = vmul.f32 %v3030, 1.442695
    %v3043 = vpow.pop %v3042
    %v3044 = vmul.f32 %v3031, 1.442695
    %v3045 = vpow.pop %v3044
    %v3046 = vmul.f32 %v3032, 1.442695
    %v3047 = vpow.pop %v3046
    %v3048 = vmul.f32 %v3033, 1.442695
    %v3049 = vpow.pop %v3048
    %v3050 = vadd.f32 %v3035, 1.0
    %v3051 = vadd.f32 %v3037, 1.0
    %v3052 = vadd.f32 %v3039, 1.0
    %v3053 = vadd.f32 %v3041, 1.0
    %v3054 = vadd.f32 %v3043, 1.0
    %v3055 = vadd.f32 %v3045, 1.0
    %v3056 = vadd.f32 %v3047, 1.0
    %v3057 = vadd.f32 %v3049, 1.0
    %v3058 = vrcp.pop %v3050
    %v3059 = vmul.f32 1.0, %v3058
    %v3060 = vrcp.pop %v3051
    %v3061 = vmul.f32 1.0, %v3060
    %v3062 = vrcp.pop %v3052
    %v3063 = vmul.f32 1.0, %v3062
    %v3064 = vrcp.pop %v3053
    %v3065 = vmul.f32 1.0, %v3064
    %v3066 = vrcp.pop %v3054
    %v3067 = vmul.f32 1.0, %v3066
    %v3068 = vrcp.pop %v3055
    %v3069 = vmul.f32 1.0, %v3068
    %v3070 = vrcp.pop %v3056
    %v3071 = vmul.f32 1.0, %v3070
    %v3072 = vrcp.pop %v3057
    %v3073 = vmul.f32 1.0, %v3072
    %v3074 = vmul.f32 %v3067, 2.0
    %v3075 = vmul.f32 %v3069, 2.0
    %v3076 = vsub.f32 %v3074, 1.0
    %v3077 = vsub.f32 %v3075, 1.0
    %v3078 = vmul.f32 %v3063, %v2842
    %v3079 = vmul.f32 %v3065, %v2843
    %v3080 = vmul.f32 %v3059, %v3076
    %v3081 = vmul.f32 %v3061, %v3077
    %v3082 = vadd.f32 %v3078, %v3080
    %v3083 = vadd.f32 %v3079, %v3081
    %v3084 = vtanh.pop %v3082
    %v3085 = vtanh.pop %v3083
    %v3086 = vmul.f32 %v3071, %v3084
    %v3087 = vmul.f32 %v3073, %v3085
    %v3088 = vsel %vm2590, %v3086, %v2340
    %v3089 = vsel %vm2591, %v3087, %v2341
    %v3090 = vsel %vm2590, %v3082, %v2342
    %v3091 = vsel %vm2591, %v3083, %v2343
    %v3092 = vld [vmem:[#allocation2 + $0x1c0] sm:$0xff]
    %v3093 = vld [vmem:[#allocation2 + $0x1c8] sm:$0xff]
    %v3094 = vld [vmem:[#allocation2 + $0x1d0] sm:$0xff]
    %v3095 = vld [vmem:[#allocation2 + $0x1d8] sm:$0xff]
    %v3096 = vld [vmem:[#allocation2 + $0x1e0] sm:$0xff]
    %v3097 = vld [vmem:[#allocation2 + $0x1e8] sm:$0xff]
    %v3098 = vld [vmem:[#allocation2 + $0x1f0] sm:$0xff]
    %v3099 = vld [vmem:[#allocation2 + $0x1f8] sm:$0xff]
    %v3100 = vpack.c.bf16 %v3088, %v3088
    %v3101 = vpack.c.bf16 %v3089, %v3089
    %3102 = vmatprep.subr.bf16.mxu0 %v1145
    %3103 = vmatpush1.bf16.msra.mxu0 %v1144
    %3104 = vmatprep.subr.bf16.mxu0 %v1137
    %3105 = vmatpush1.bf16.msra.mxu0 %v1136
    %3106 = vmatprep.subr.bf16.mxu0 %v1129
    %3107 = vmatpush1.bf16.msra.mxu0 %v1128
    %3108 = vmatprep.subr.bf16.mxu0 %v1121
    %3109 = vmatpush1.bf16.msra.mxu0 %v1120
    %3110 = vmatprep.subr.bf16.mxu0 %v1113
    %3111 = vmatpush1.bf16.msra.mxu0 %v1112
    %3112 = vmatprep.subr.bf16.mxu0 %v1105
    %3113 = vmatpush1.bf16.msra.mxu0 %v1104
    %3114 = vmatprep.subr.bf16.mxu0 %v1097
    %3115 = vmatpush1.bf16.msra.mxu0 %v1096
    %3116 = vmatprep.subr.bf16.mxu0 %v1089
    %3117 = vmatpush1.bf16.msra.mxu0 %v1088
    %3118 = vmatprep.subr.bf16.mxu0 %v1209
    %3119 = vmatpush2.bf16.msra.mxu0 %v1208
    %3120 = vmatprep.subr.bf16.mxu0 %v1201
    %3121 = vmatpush2.bf16.msra.mxu0 %v1200
    %3122 = vmatprep.subr.bf16.mxu0 %v1193
    %3123 = vmatpush2.bf16.msra.mxu0 %v1192
    %3124 = vmatprep.subr.bf16.mxu0 %v1185
    %3125 = vmatpush2.bf16.msra.mxu0 %v1184
    %3126 = vmatprep.subr.bf16.mxu0 %v1177
    %3127 = vmatpush2.bf16.msra.mxu0 %v1176
    %3128 = vmatprep.subr.bf16.mxu0 %v1169
    %3129 = vmatpush2.bf16.msra.mxu0 %v1168
    %3130 = vmatprep.subr.bf16.mxu0 %v1161
    %3131 = vmatpush2.bf16.msra.mxu0 %v1160
    %3132 = vmatprep.subr.bf16.mxu0 %v1153
    %3133 = vmatpush2.bf16.msra.mxu0 %v1152
    %3134 = vmatprep.mubr.bf16.mxu0 %v3101
    %3135 = vmatmul.mubr.bf16.gmra.mxu0 %v3100
    %v3136 = vpop.f32.mrf.mxu0
    %v3137 = vadd.f32 0.0, %v3136
    %v3138 = vpop.f32.mrf.mxu0
    %v3139 = vadd.f32 0.0, %v3138
    %v3140 = vpop.f32.mrf.mxu0
    %v3141 = vpop.f32.mrf.mxu0
    %3142 = vdwg.mxu0
    %3143 = vmatprep.subr.bf16.mxu0 %v1147
    %3144 = vmatpush1.bf16.msra.mxu0 %v1146
    %3145 = vmatprep.subr.bf16.mxu0 %v1139
    %3146 = vmatpush1.bf16.msra.mxu0 %v1138
    %3147 = vmatprep.subr.bf16.mxu0 %v1131
    %3148 = vmatpush1.bf16.msra.mxu0 %v1130
    %3149 = vmatprep.subr.bf16.mxu0 %v1123
    %3150 = vmatpush1.bf16.msra.mxu0 %v1122
    %3151 = vmatprep.subr.bf16.mxu0 %v1115
    %3152 = vmatpush1.bf16.msra.mxu0 %v1114
    %3153 = vmatprep.subr.bf16.mxu0 %v1107
    %3154 = vmatpush1.bf16.msra.mxu0 %v1106
    %3155 = vmatprep.subr.bf16.mxu0 %v1099
    %3156 = vmatpush1.bf16.msra.mxu0 %v1098
    %3157 = vmatprep.subr.bf16.mxu0 %v1091
    %3158 = vmatpush1.bf16.msra.mxu0 %v1090
    %3159 = vmatprep.subr.bf16.mxu0 %v1211
    %3160 = vmatpush2.bf16.msra.mxu0 %v1210
    %3161 = vmatprep.subr.bf16.mxu0 %v1203
    %3162 = vmatpush2.bf16.msra.mxu0 %v1202
    %3163 = vmatprep.subr.bf16.mxu0 %v1195
    %3164 = vmatpush2.bf16.msra.mxu0 %v1194
    %3165 = vmatprep.subr.bf16.mxu0 %v1187
    %3166 = vmatpush2.bf16.msra.mxu0 %v1186
    %3167 = vmatprep.subr.bf16.mxu0 %v1179
    %3168 = vmatpush2.bf16.msra.mxu0 %v1178
    %3169 = vmatprep.subr.bf16.mxu0 %v1171
    %3170 = vmatpush2.bf16.msra.mxu0 %v1170
    %3171 = vmatprep.subr.bf16.mxu0 %v1163
    %3172 = vmatpush2.bf16.msra.mxu0 %v1162
    %3173 = vmatprep.subr.bf16.mxu0 %v1155
    %3174 = vmatpush2.bf16.msra.mxu0 %v1154
    %3175 = vmatprep.mubr.bf16.mxu0 %v3101
    %3176 = vmatmul.mubr.bf16.gmra.mxu0 %v3100
    %v3177 = vpop.f32.mrf.mxu0
    %v3178 = vadd.f32 0.0, %v3177
    %v3179 = vpop.f32.mrf.mxu0
    %v3180 = vadd.f32 0.0, %v3179
    %v3181 = vpop.f32.mrf.mxu0
    %v3182 = vpop.f32.mrf.mxu0
    %3183 = vdwg.mxu0
    %3184 = vmatprep.subr.bf16.mxu0 %v1149
    %3185 = vmatpush1.bf16.msra.mxu0 %v1148
    %3186 = vmatprep.subr.bf16.mxu0 %v1141
    %3187 = vmatpush1.bf16.msra.mxu0 %v1140
    %3188 = vmatprep.subr.bf16.mxu0 %v1133
    %3189 = vmatpush1.bf16.msra.mxu0 %v1132
    %3190 = vmatprep.subr.bf16.mxu0 %v1125
    %3191 = vmatpush1.bf16.msra.mxu0 %v1124
    %3192 = vmatprep.subr.bf16.mxu0 %v1117
    %3193 = vmatpush1.bf16.msra.mxu0 %v1116
    %3194 = vmatprep.subr.bf16.mxu0 %v1109
    %3195 = vmatpush1.bf16.msra.mxu0 %v1108
    %3196 = vmatprep.subr.bf16.mxu0 %v1101
    %3197 = vmatpush1.bf16.msra.mxu0 %v1100
    %3198 = vmatprep.subr.bf16.mxu0 %v1093
    %3199 = vmatpush1.bf16.msra.mxu0 %v1092
    %3200 = vmatprep.subr.bf16.mxu0 %v1213
    %3201 = vmatpush2.bf16.msra.mxu0 %v1212
    %3202 = vmatprep.subr.bf16.mxu0 %v1205
    %3203 = vmatpush2.bf16.msra.mxu0 %v1204
    %3204 = vmatprep.subr.bf16.mxu0 %v1197
    %3205 = vmatpush2.bf16.msra.mxu0 %v1196
    %3206 = vmatprep.subr.bf16.mxu0 %v1189
    %3207 = vmatpush2.bf16.msra.mxu0 %v1188
    %3208 = vmatprep.subr.bf16.mxu0 %v1181
    %3209 = vmatpush2.bf16.msra.mxu0 %v1180
    %3210 = vmatprep.subr.bf16.mxu0 %v1173
    %3211 = vmatpush2.bf16.msra.mxu0 %v1172
    %3212 = vmatprep.subr.bf16.mxu0 %v1165
    %3213 = vmatpush2.bf16.msra.mxu0 %v1164
    %3214 = vmatprep.subr.bf16.mxu0 %v1157
    %3215 = vmatpush2.bf16.msra.mxu0 %v1156
    %3216 = vmatprep.mubr.bf16.mxu0 %v3101
    %3217 = vmatmul.mubr.bf16.gmra.mxu0 %v3100
    %v3218 = vpop.f32.mrf.mxu0
    %v3219 = vadd.f32 0.0, %v3218
    %v3220 = vpop.f32.mrf.mxu0
    %v3221 = vadd.f32 0.0, %v3220
    %v3222 = vpop.f32.mrf.mxu0
    %v3223 = vpop.f32.mrf.mxu0
    %3224 = vdwg.mxu0
    %3225 = vmatprep.subr.bf16.mxu0 %v1151
    %3226 = vmatpush1.bf16.msra.mxu0 %v1150
    %3227 = vmatprep.subr.bf16.mxu0 %v1143
    %3228 = vmatpush1.bf16.msra.mxu0 %v1142
    %3229 = vmatprep.subr.bf16.mxu0 %v1135
    %3230 = vmatpush1.bf16.msra.mxu0 %v1134
    %3231 = vmatprep.subr.bf16.mxu0 %v1127
    %3232 = vmatpush1.bf16.msra.mxu0 %v1126
    %3233 = vmatprep.subr.bf16.mxu0 %v1119
    %3234 = vmatpush1.bf16.msra.mxu0 %v1118
    %3235 = vmatprep.subr.bf16.mxu0 %v1111
    %3236 = vmatpush1.bf16.msra.mxu0 %v1110
    %3237 = vmatprep.subr.bf16.mxu0 %v1103
    %3238 = vmatpush1.bf16.msra.mxu0 %v1102
    %3239 = vmatprep.subr.bf16.mxu0 %v1095
    %3240 = vmatpush1.bf16.msra.mxu0 %v1094
    %3241 = vmatprep.subr.bf16.mxu0 %v1215
    %3242 = vmatpush2.bf16.msra.mxu0 %v1214
    %3243 = vmatprep.subr.bf16.mxu0 %v1207
    %3244 = vmatpush2.bf16.msra.mxu0 %v1206
    %3245 = vmatprep.subr.bf16.mxu0 %v1199
    %3246 = vmatpush2.bf16.msra.mxu0 %v1198
    %3247 = vmatprep.subr.bf16.mxu0 %v1191
    %3248 = vmatpush2.bf16.msra.mxu0 %v1190
    %3249 = vmatprep.subr.bf16.mxu0 %v1183
    %3250 = vmatpush2.bf16.msra.mxu0 %v1182
    %3251 = vmatprep.subr.bf16.mxu0 %v1175
    %3252 = vmatpush2.bf16.msra.mxu0 %v1174
    %3253 = vmatprep.subr.bf16.mxu0 %v1167
    %3254 = vmatpush2.bf16.msra.mxu0 %v1166
    %3255 = vmatprep.subr.bf16.mxu0 %v1159
    %3256 = vmatpush2.bf16.msra.mxu0 %v1158
    %3257 = vmatprep.mubr.bf16.mxu0 %v3101
    %3258 = vmatmul.mubr.bf16.gmra.mxu0 %v3100
    %v3259 = vpop.f32.mrf.mxu0
    %v3260 = vadd.f32 0.0, %v3259
    %v3261 = vpop.f32.mrf.mxu0
    %v3262 = vadd.f32 0.0, %v3261
    %v3263 = vpop.f32.mrf.mxu0
    %v3264 = vpop.f32.mrf.mxu0
    %3265 = vdwg.mxu0
    %v3266 = vadd.f32 %v3092, %v3137
    %v3267 = vadd.f32 %v3093, %v3139
    %v3268 = vadd.f32 %v3094, %v3178
    %v3269 = vadd.f32 %v3095, %v3180
    %v3270 = vadd.f32 %v3096, %v3219
    %v3271 = vadd.f32 %v3097, %v3221
    %v3272 = vadd.f32 %v3098, %v3260
    %v3273 = vadd.f32 %v3099, %v3262
    %v3274 = vxor.u32 %v3266, 2147483648
    %v3275 = vxor.u32 %v3267, 2147483648
    %v3276 = vxor.u32 %v3268, 2147483648
    %v3277 = vxor.u32 %v3269, 2147483648
    %v3278 = vxor.u32 %v3270, 2147483648
    %v3279 = vxor.u32 %v3271, 2147483648
    %v3280 = vxor.u32 %v3272, 2147483648
    %v3281 = vxor.u32 %v3273, 2147483648
    %v3282 = vmul.f32 %v3274, 1.442695
    %v3283 = vpow.pop %v3282
    %v3284 = vmul.f32 %v3275, 1.442695
    %v3285 = vpow.pop %v3284
    %v3286 = vmul.f32 %v3276, 1.442695
    %v3287 = vpow.pop %v3286
    %v3288 = vmul.f32 %v3277, 1.442695
    %v3289 = vpow.pop %v3288
    %v3290 = vmul.f32 %v3278, 1.442695
    %v3291 = vpow.pop %v3290
    %v3292 = vmul.f32 %v3279, 1.442695
    %v3293 = vpow.pop %v3292
    %v3294 = vmul.f32 %v3280, 1.442695
    %v3295 = vpow.pop %v3294
    %v3296 = vmul.f32 %v3281, 1.442695
    %v3297 = vpow.pop %v3296
    %v3298 = vadd.f32 %v3283, 1.0
    %v3299 = vadd.f32 %v3285, 1.0
    %v3300 = vadd.f32 %v3287, 1.0
    %v3301 = vadd.f32 %v3289, 1.0
    %v3302 = vadd.f32 %v3291, 1.0
    %v3303 = vadd.f32 %v3293, 1.0
    %v3304 = vadd.f32 %v3295, 1.0
    %v3305 = vadd.f32 %v3297, 1.0
    %v3306 = vrcp.pop %v3298
    %v3307 = vmul.f32 1.0, %v3306
    %v3308 = vrcp.pop %v3299
    %v3309 = vmul.f32 1.0, %v3308
    %v3310 = vrcp.pop %v3300
    %v3311 = vmul.f32 1.0, %v3310
    %v3312 = vrcp.pop %v3301
    %v3313 = vmul.f32 1.0, %v3312
    %v3314 = vrcp.pop %v3302
    %v3315 = vmul.f32 1.0, %v3314
    %v3316 = vrcp.pop %v3303
    %v3317 = vmul.f32 1.0, %v3316
    %v3318 = vrcp.pop %v3304
    %v3319 = vmul.f32 1.0, %v3318
    %v3320 = vrcp.pop %v3305
    %v3321 = vmul.f32 1.0, %v3320
    %v3322 = vmul.f32 %v3315, 2.0
    %v3323 = vmul.f32 %v3317, 2.0
    %v3324 = vsub.f32 %v3322, 1.0
    %v3325 = vsub.f32 %v3323, 1.0
    %v3326 = vmul.f32 %v3311, %v3090
    %v3327 = vmul.f32 %v3313, %v3091
    %v3328 = vmul.f32 %v3307, %v3324
    %v3329 = vmul.f32 %v3309, %v3325
    %v3330 = vadd.f32 %v3326, %v3328
    %v3331 = vadd.f32 %v3327, %v3329
    %v3332 = vtanh.pop %v3330
    %v3333 = vtanh.pop %v3331
    %v3334 = vmul.f32 %v3319, %v3332
    %v3335 = vmul.f32 %v3321, %v3333
    %v3336 = vsel %vm2590, %v3334, %v2340
    %v3337 = vsel %vm2591, %v3335, %v2341
    %v3338 = vsel %vm2590, %v3330, %v2342
    %v3339 = vsel %vm2591, %v3331, %v2343
    %v3340 = vpack.c.bf16 %v3336, %v3336
    %v3341 = vpack.c.bf16 %v3337, %v3337
    %3342 = vmatprep.subr.bf16.mxu0 %v1145
    %3343 = vmatpush1.bf16.msra.mxu0 %v1144
    %3344 = vmatprep.subr.bf16.mxu0 %v1137
    %3345 = vmatpush1.bf16.msra.mxu0 %v1136
    %3346 = vmatprep.subr.bf16.mxu0 %v1129
    %3347 = vmatpush1.bf16.msra.mxu0 %v1128
    %3348 = vmatprep.subr.bf16.mxu0 %v1121
    %3349 = vmatpush1.bf16.msra.mxu0 %v1120
    %3350 = vmatprep.subr.bf16.mxu0 %v1113
    %3351 = vmatpush1.bf16.msra.mxu0 %v1112
    %3352 = vmatprep.subr.bf16.mxu0 %v1105
    %3353 = vmatpush1.bf16.msra.mxu0 %v1104
    %3354 = vmatprep.subr.bf16.mxu0 %v1097
    %3355 = vmatpush1.bf16.msra.mxu0 %v1096
    %3356 = vmatprep.subr.bf16.mxu0 %v1089
    %3357 = vmatpush1.bf16.msra.mxu0 %v1088
    %3358 = vmatprep.subr.bf16.mxu0 %v1209
    %3359 = vmatpush2.bf16.msra.mxu0 %v1208
    %3360 = vmatprep.subr.bf16.mxu0 %v1201
    %3361 = vmatpush2.bf16.msra.mxu0 %v1200
    %3362 = vmatprep.subr.bf16.mxu0 %v1193
    %3363 = vmatpush2.bf16.msra.mxu0 %v1192
    %3364 = vmatprep.subr.bf16.mxu0 %v1185
    %3365 = vmatpush2.bf16.msra.mxu0 %v1184
    %3366 = vmatprep.subr.bf16.mxu0 %v1177
    %3367 = vmatpush2.bf16.msra.mxu0 %v1176
    %3368 = vmatprep.subr.bf16.mxu0 %v1169
    %3369 = vmatpush2.bf16.msra.mxu0 %v1168
    %3370 = vmatprep.subr.bf16.mxu0 %v1161
    %3371 = vmatpush2.bf16.msra.mxu0 %v1160
    %3372 = vmatprep.subr.bf16.mxu0 %v1153
    %3373 = vmatpush2.bf16.msra.mxu0 %v1152
    %3374 = vmatprep.mubr.bf16.mxu0 %v3341
    %3375 = vmatmul.mubr.bf16.gmra.mxu0 %v3340
    %v3376 = vpop.f32.mrf.mxu0
    %v3377 = vadd.f32 0.0, %v3376
    %v3378 = vpop.f32.mrf.mxu0
    %v3379 = vadd.f32 0.0, %v3378
    %v3380 = vpop.f32.mrf.mxu0
    %v3381 = vpop.f32.mrf.mxu0
    %3382 = vdwg.mxu0
    %3383 = vmatprep.subr.bf16.mxu0 %v1147
    %3384 = vmatpush1.bf16.msra.mxu0 %v1146
    %3385 = vmatprep.subr.bf16.mxu0 %v1139
    %3386 = vmatpush1.bf16.msra.mxu0 %v1138
    %3387 = vmatprep.subr.bf16.mxu0 %v1131
    %3388 = vmatpush1.bf16.msra.mxu0 %v1130
    %3389 = vmatprep.subr.bf16.mxu0 %v1123
    %3390 = vmatpush1.bf16.msra.mxu0 %v1122
    %3391 = vmatprep.subr.bf16.mxu0 %v1115
    %3392 = vmatpush1.bf16.msra.mxu0 %v1114
    %3393 = vmatprep.subr.bf16.mxu0 %v1107
    %3394 = vmatpush1.bf16.msra.mxu0 %v1106
    %3395 = vmatprep.subr.bf16.mxu0 %v1099
    %3396 = vmatpush1.bf16.msra.mxu0 %v1098
    %3397 = vmatprep.subr.bf16.mxu0 %v1091
    %3398 = vmatpush1.bf16.msra.mxu0 %v1090
    %3399 = vmatprep.subr.bf16.mxu0 %v1211
    %3400 = vmatpush2.bf16.msra.mxu0 %v1210
    %3401 = vmatprep.subr.bf16.mxu0 %v1203
    %3402 = vmatpush2.bf16.msra.mxu0 %v1202
    %3403 = vmatprep.subr.bf16.mxu0 %v1195
    %3404 = vmatpush2.bf16.msra.mxu0 %v1194
    %3405 = vmatprep.subr.bf16.mxu0 %v1187
    %3406 = vmatpush2.bf16.msra.mxu0 %v1186
    %3407 = vmatprep.subr.bf16.mxu0 %v1179
    %3408 = vmatpush2.bf16.msra.mxu0 %v1178
    %3409 = vmatprep.subr.bf16.mxu0 %v1171
    %3410 = vmatpush2.bf16.msra.mxu0 %v1170
    %3411 = vmatprep.subr.bf16.mxu0 %v1163
    %3412 = vmatpush2.bf16.msra.mxu0 %v1162
    %3413 = vmatprep.subr.bf16.mxu0 %v1155
    %3414 = vmatpush2.bf16.msra.mxu0 %v1154
    %3415 = vmatprep.mubr.bf16.mxu0 %v3341
    %3416 = vmatmul.mubr.bf16.gmra.mxu0 %v3340
    %v3417 = vpop.f32.mrf.mxu0
    %v3418 = vadd.f32 0.0, %v3417
    %v3419 = vpop.f32.mrf.mxu0
    %v3420 = vadd.f32 0.0, %v3419
    %v3421 = vpop.f32.mrf.mxu0
    %v3422 = vpop.f32.mrf.mxu0
    %3423 = vdwg.mxu0
    %3424 = vmatprep.subr.bf16.mxu0 %v1149
    %3425 = vmatpush1.bf16.msra.mxu0 %v1148
    %3426 = vmatprep.subr.bf16.mxu0 %v1141
    %3427 = vmatpush1.bf16.msra.mxu0 %v1140
    %3428 = vmatprep.subr.bf16.mxu0 %v1133
    %3429 = vmatpush1.bf16.msra.mxu0 %v1132
    %3430 = vmatprep.subr.bf16.mxu0 %v1125
    %3431 = vmatpush1.bf16.msra.mxu0 %v1124
    %3432 = vmatprep.subr.bf16.mxu0 %v1117
    %3433 = vmatpush1.bf16.msra.mxu0 %v1116
    %3434 = vmatprep.subr.bf16.mxu0 %v1109
    %3435 = vmatpush1.bf16.msra.mxu0 %v1108
    %3436 = vmatprep.subr.bf16.mxu0 %v1101
    %3437 = vmatpush1.bf16.msra.mxu0 %v1100
    %3438 = vmatprep.subr.bf16.mxu0 %v1093
    %3439 = vmatpush1.bf16.msra.mxu0 %v1092
    %3440 = vmatprep.subr.bf16.mxu0 %v1213
    %3441 = vmatpush2.bf16.msra.mxu0 %v1212
    %3442 = vmatprep.subr.bf16.mxu0 %v1205
    %3443 = vmatpush2.bf16.msra.mxu0 %v1204
    %3444 = vmatprep.subr.bf16.mxu0 %v1197
    %3445 = vmatpush2.bf16.msra.mxu0 %v1196
    %3446 = vmatprep.subr.bf16.mxu0 %v1189
    %3447 = vmatpush2.bf16.msra.mxu0 %v1188
    %3448 = vmatprep.subr.bf16.mxu0 %v1181
    %3449 = vmatpush2.bf16.msra.mxu0 %v1180
    %3450 = vmatprep.subr.bf16.mxu0 %v1173
    %3451 = vmatpush2.bf16.msra.mxu0 %v1172
    %3452 = vmatprep.subr.bf16.mxu0 %v1165
    %3453 = vmatpush2.bf16.msra.mxu0 %v1164
    %3454 = vmatprep.subr.bf16.mxu0 %v1157
    %3455 = vmatpush2.bf16.msra.mxu0 %v1156
    %3456 = vmatprep.mubr.bf16.mxu0 %v3341
    %3457 = vmatmul.mubr.bf16.gmra.mxu0 %v3340
    %v3458 = vpop.f32.mrf.mxu0
    %v3459 = vadd.f32 0.0, %v3458
    %v3460 = vpop.f32.mrf.mxu0
    %v3461 = vadd.f32 0.0, %v3460
    %v3462 = vpop.f32.mrf.mxu0
    %v3463 = vpop.f32.mrf.mxu0
    %3464 = vdwg.mxu0
    %3465 = vmatprep.subr.bf16.mxu0 %v1151
    %3466 = vmatpush1.bf16.msra.mxu0 %v1150
    %3467 = vmatprep.subr.bf16.mxu0 %v1143
    %3468 = vmatpush1.bf16.msra.mxu0 %v1142
    %3469 = vmatprep.subr.bf16.mxu0 %v1135
    %3470 = vmatpush1.bf16.msra.mxu0 %v1134
    %3471 = vmatprep.subr.bf16.mxu0 %v1127
    %3472 = vmatpush1.bf16.msra.mxu0 %v1126
    %3473 = vmatprep.subr.bf16.mxu0 %v1119
    %3474 = vmatpush1.bf16.msra.mxu0 %v1118
    %3475 = vmatprep.subr.bf16.mxu0 %v1111
    %3476 = vmatpush1.bf16.msra.mxu0 %v1110
    %3477 = vmatprep.subr.bf16.mxu0 %v1103
    %3478 = vmatpush1.bf16.msra.mxu0 %v1102
    %3479 = vmatprep.subr.bf16.mxu0 %v1095
    %3480 = vmatpush1.bf16.msra.mxu0 %v1094
    %3481 = vmatprep.subr.bf16.mxu0 %v1215
    %3482 = vmatpush2.bf16.msra.mxu0 %v1214
    %3483 = vmatprep.subr.bf16.mxu0 %v1207
    %3484 = vmatpush2.bf16.msra.mxu0 %v1206
    %3485 = vmatprep.subr.bf16.mxu0 %v1199
    %3486 = vmatpush2.bf16.msra.mxu0 %v1198
    %3487 = vmatprep.subr.bf16.mxu0 %v1191
    %3488 = vmatpush2.bf16.msra.mxu0 %v1190
    %3489 = vmatprep.subr.bf16.mxu0 %v1183
    %3490 = vmatpush2.bf16.msra.mxu0 %v1182
    %3491 = vmatprep.subr.bf16.mxu0 %v1175
    %3492 = vmatpush2.bf16.msra.mxu0 %v1174
    %3493 = vmatprep.subr.bf16.mxu0 %v1167
    %3494 = vmatpush2.bf16.msra.mxu0 %v1166
    %3495 = vmatprep.subr.bf16.mxu0 %v1159
    %3496 = vmatpush2.bf16.msra.mxu0 %v1158
    %3497 = vmatprep.mubr.bf16.mxu0 %v3341
    %3498 = vmatmul.mubr.bf16.gmra.mxu0 %v3340
    %v3499 = vpop.f32.mrf.mxu0
    %v3500 = vadd.f32 0.0, %v3499
    %v3501 = vpop.f32.mrf.mxu0
    %v3502 = vadd.f32 0.0, %v3501
    %v3503 = vpop.f32.mrf.mxu0
    %v3504 = vpop.f32.mrf.mxu0
    %3505 = vdwg.mxu0
    %v3506 = vadd.f32 %v3092, %v3377
    %v3507 = vadd.f32 %v3093, %v3379
    %v3508 = vadd.f32 %v3094, %v3418
    %v3509 = vadd.f32 %v3095, %v3420
    %v3510 = vadd.f32 %v3096, %v3459
    %v3511 = vadd.f32 %v3097, %v3461
    %v3512 = vadd.f32 %v3098, %v3500
    %v3513 = vadd.f32 %v3099, %v3502
    %v3514 = vxor.u32 %v3506, 2147483648
    %v3515 = vxor.u32 %v3507, 2147483648
    %v3516 = vxor.u32 %v3508, 2147483648
    %v3517 = vxor.u32 %v3509, 2147483648
    %v3518 = vxor.u32 %v3510, 2147483648
    %v3519 = vxor.u32 %v3511, 2147483648
    %v3520 = vxor.u32 %v3512, 2147483648
    %v3521 = vxor.u32 %v3513, 2147483648
    %v3522 = vmul.f32 %v3514, 1.442695
    %v3523 = vpow.pop %v3522
    %v3524 = vmul.f32 %v3515, 1.442695
    %v3525 = vpow.pop %v3524
    %v3526 = vmul.f32 %v3516, 1.442695
    %v3527 = vpow.pop %v3526
    %v3528 = vmul.f32 %v3517, 1.442695
    %v3529 = vpow.pop %v3528
    %v3530 = vmul.f32 %v3518, 1.442695
    %v3531 = vpow.pop %v3530
    %v3532 = vmul.f32 %v3519, 1.442695
    %v3533 = vpow.pop %v3532
    %v3534 = vmul.f32 %v3520, 1.442695
    %v3535 = vpow.pop %v3534
    %v3536 = vmul.f32 %v3521, 1.442695
    %v3537 = vpow.pop %v3536
    %v3538 = vadd.f32 %v3523, 1.0
    %v3539 = vadd.f32 %v3525, 1.0
    %v3540 = vadd.f32 %v3527, 1.0
    %v3541 = vadd.f32 %v3529, 1.0
    %v3542 = vadd.f32 %v3531, 1.0
    %v3543 = vadd.f32 %v3533, 1.0
    %v3544 = vadd.f32 %v3535, 1.0
    %v3545 = vadd.f32 %v3537, 1.0
    %v3546 = vrcp.pop %v3538
    %v3547 = vmul.f32 1.0, %v3546
    %v3548 = vrcp.pop %v3539
    %v3549 = vmul.f32 1.0, %v3548
    %v3550 = vrcp.pop %v3540
    %v3551 = vmul.f32 1.0, %v3550
    %v3552 = vrcp.pop %v3541
    %v3553 = vmul.f32 1.0, %v3552
    %v3554 = vrcp.pop %v3542
    %v3555 = vmul.f32 1.0, %v3554
    %v3556 = vrcp.pop %v3543
    %v3557 = vmul.f32 1.0, %v3556
    %v3558 = vrcp.pop %v3544
    %v3559 = vmul.f32 1.0, %v3558
    %v3560 = vrcp.pop %v3545
    %v3561 = vmul.f32 1.0, %v3560
    %v3562 = vmul.f32 %v3555, 2.0
    %v3563 = vmul.f32 %v3557, 2.0
    %v3564 = vsub.f32 %v3562, 1.0
    %v3565 = vsub.f32 %v3563, 1.0
    %v3566 = vmul.f32 %v3551, %v3338
    %v3567 = vmul.f32 %v3553, %v3339
    %v3568 = vmul.f32 %v3547, %v3564
    %v3569 = vmul.f32 %v3549, %v3565
    %v3570 = vadd.f32 %v3566, %v3568
    %v3571 = vadd.f32 %v3567, %v3569
    %v3572 = vtanh.pop %v3570
    %v3573 = vtanh.pop %v3571
    %v3574 = vmul.f32 %v3559, %v3572
    %v3575 = vmul.f32 %v3561, %v3573
    %vm3576 = vcmp.ge.s32.totalorder %v560, 32
    %vm3577 = vcmp.ge.s32.totalorder %v561, 32
    %vm3578 = vmand %vm3576, %vm2588
    %vm3579 = vmand %vm3577, %vm2589
    %v3580 = vsel %vm3578, %v3574, %v3336
    %v3581 = vsel %vm3579, %v3575, %v3337
    %v3582 = vsel %vm3578, %v3570, %v3338
    %v3583 = vsel %vm3579, %v3571, %v3339
    %v3584 = vpack.c.bf16 %v3580, %v3580
    %v3585 = vpack.c.bf16 %v3581, %v3581
    %3586 = vmatprep.subr.bf16.mxu0 %v1145
    %3587 = vmatpush1.bf16.msra.mxu0 %v1144
    %3588 = vmatprep.subr.bf16.mxu0 %v1137
    %3589 = vmatpush1.bf16.msra.mxu0 %v1136
    %3590 = vmatprep.subr.bf16.mxu0 %v1129
    %3591 = vmatpush1.bf16.msra.mxu0 %v1128
    %3592 = vmatprep.subr.bf16.mxu0 %v1121
    %3593 = vmatpush1.bf16.msra.mxu0 %v1120
    %3594 = vmatprep.subr.bf16.mxu0 %v1113
    %3595 = vmatpush1.bf16.msra.mxu0 %v1112
    %3596 = vmatprep.subr.bf16.mxu0 %v1105
    %3597 = vmatpush1.bf16.msra.mxu0 %v1104
    %3598 = vmatprep.subr.bf16.mxu0 %v1097
    %3599 = vmatpush1.bf16.msra.mxu0 %v1096
    %3600 = vmatprep.subr.bf16.mxu0 %v1089
    %3601 = vmatpush1.bf16.msra.mxu0 %v1088
    %3602 = vmatprep.subr.bf16.mxu0 %v1209
    %3603 = vmatpush2.bf16.msra.mxu0 %v1208
    %3604 = vmatprep.subr.bf16.mxu0 %v1201
    %3605 = vmatpush2.bf16.msra.mxu0 %v1200
    %3606 = vmatprep.subr.bf16.mxu0 %v1193
    %3607 = vmatpush2.bf16.msra.mxu0 %v1192
    %3608 = vmatprep.subr.bf16.mxu0 %v1185
    %3609 = vmatpush2.bf16.msra.mxu0 %v1184
    %3610 = vmatprep.subr.bf16.mxu0 %v1177
    %3611 = vmatpush2.bf16.msra.mxu0 %v1176
    %3612 = vmatprep.subr.bf16.mxu0 %v1169
    %3613 = vmatpush2.bf16.msra.mxu0 %v1168
    %3614 = vmatprep.subr.bf16.mxu0 %v1161
    %3615 = vmatpush2.bf16.msra.mxu0 %v1160
    %3616 = vmatprep.subr.bf16.mxu0 %v1153
    %3617 = vmatpush2.bf16.msra.mxu0 %v1152
    %3618 = vmatprep.mubr.bf16.mxu0 %v3585
    %3619 = vmatmul.mubr.bf16.gmra.mxu0 %v3584
    %v3620 = vpop.f32.mrf.mxu0
    %v3621 = vadd.f32 0.0, %v3620
    %v3622 = vpop.f32.mrf.mxu0
    %v3623 = vadd.f32 0.0, %v3622
    %v3624 = vpop.f32.mrf.mxu0
    %v3625 = vpop.f32.mrf.mxu0
    %3626 = vdwg.mxu0
    %3627 = vmatprep.subr.bf16.mxu0 %v1147
    %3628 = vmatpush1.bf16.msra.mxu0 %v1146
    %3629 = vmatprep.subr.bf16.mxu0 %v1139
    %3630 = vmatpush1.bf16.msra.mxu0 %v1138
    %3631 = vmatprep.subr.bf16.mxu0 %v1131
    %3632 = vmatpush1.bf16.msra.mxu0 %v1130
    %3633 = vmatprep.subr.bf16.mxu0 %v1123
    %3634 = vmatpush1.bf16.msra.mxu0 %v1122
    %3635 = vmatprep.subr.bf16.mxu0 %v1115
    %3636 = vmatpush1.bf16.msra.mxu0 %v1114
    %3637 = vmatprep.subr.bf16.mxu0 %v1107
    %3638 = vmatpush1.bf16.msra.mxu0 %v1106
    %3639 = vmatprep.subr.bf16.mxu0 %v1099
    %3640 = vmatpush1.bf16.msra.mxu0 %v1098
    %3641 = vmatprep.subr.bf16.mxu0 %v1091
    %3642 = vmatpush1.bf16.msra.mxu0 %v1090
    %3643 = vmatprep.subr.bf16.mxu0 %v1211
    %3644 = vmatpush2.bf16.msra.mxu0 %v1210
    %3645 = vmatprep.subr.bf16.mxu0 %v1203
    %3646 = vmatpush2.bf16.msra.mxu0 %v1202
    %3647 = vmatprep.subr.bf16.mxu0 %v1195
    %3648 = vmatpush2.bf16.msra.mxu0 %v1194
    %3649 = vmatprep.subr.bf16.mxu0 %v1187
    %3650 = vmatpush2.bf16.msra.mxu0 %v1186
    %3651 = vmatprep.subr.bf16.mxu0 %v1179
    %3652 = vmatpush2.bf16.msra.mxu0 %v1178
    %3653 = vmatprep.subr.bf16.mxu0 %v1171
    %3654 = vmatpush2.bf16.msra.mxu0 %v1170
    %3655 = vmatprep.subr.bf16.mxu0 %v1163
    %3656 = vmatpush2.bf16.msra.mxu0 %v1162
    %3657 = vmatprep.subr.bf16.mxu0 %v1155
    %3658 = vmatpush2.bf16.msra.mxu0 %v1154
    %3659 = vmatprep.mubr.bf16.mxu0 %v3585
    %3660 = vmatmul.mubr.bf16.gmra.mxu0 %v3584
    %v3661 = vpop.f32.mrf.mxu0
    %v3662 = vadd.f32 0.0, %v3661
    %v3663 = vpop.f32.mrf.mxu0
    %v3664 = vadd.f32 0.0, %v3663
    %v3665 = vpop.f32.mrf.mxu0
    %v3666 = vpop.f32.mrf.mxu0
    %3667 = vdwg.mxu0
    %3668 = vmatprep.subr.bf16.mxu0 %v1149
    %3669 = vmatpush1.bf16.msra.mxu0 %v1148
    %3670 = vmatprep.subr.bf16.mxu0 %v1141
    %3671 = vmatpush1.bf16.msra.mxu0 %v1140
    %3672 = vmatprep.subr.bf16.mxu0 %v1133
    %3673 = vmatpush1.bf16.msra.mxu0 %v1132
    %3674 = vmatprep.subr.bf16.mxu0 %v1125
    %3675 = vmatpush1.bf16.msra.mxu0 %v1124
    %3676 = vmatprep.subr.bf16.mxu0 %v1117
    %3677 = vmatpush1.bf16.msra.mxu0 %v1116
    %3678 = vmatprep.subr.bf16.mxu0 %v1109
    %3679 = vmatpush1.bf16.msra.mxu0 %v1108
    %3680 = vmatprep.subr.bf16.mxu0 %v1101
    %3681 = vmatpush1.bf16.msra.mxu0 %v1100
    %3682 = vmatprep.subr.bf16.mxu0 %v1093
    %3683 = vmatpush1.bf16.msra.mxu0 %v1092
    %3684 = vmatprep.subr.bf16.mxu0 %v1213
    %3685 = vmatpush2.bf16.msra.mxu0 %v1212
    %3686 = vmatprep.subr.bf16.mxu0 %v1205
    %3687 = vmatpush2.bf16.msra.mxu0 %v1204
    %3688 = vmatprep.subr.bf16.mxu0 %v1197
    %3689 = vmatpush2.bf16.msra.mxu0 %v1196
    %3690 = vmatprep.subr.bf16.mxu0 %v1189
    %3691 = vmatpush2.bf16.msra.mxu0 %v1188
    %3692 = vmatprep.subr.bf16.mxu0 %v1181
    %3693 = vmatpush2.bf16.msra.mxu0 %v1180
    %3694 = vmatprep.subr.bf16.mxu0 %v1173
    %3695 = vmatpush2.bf16.msra.mxu0 %v1172
    %3696 = vmatprep.subr.bf16.mxu0 %v1165
    %3697 = vmatpush2.bf16.msra.mxu0 %v1164
    %3698 = vmatprep.subr.bf16.mxu0 %v1157
    %3699 = vmatpush2.bf16.msra.mxu0 %v1156
    %3700 = vmatprep.mubr.bf16.mxu0 %v3585
    %3701 = vmatmul.mubr.bf16.gmra.mxu0 %v3584
    %v3702 = vpop.f32.mrf.mxu0
    %v3703 = vadd.f32 0.0, %v3702
    %v3704 = vpop.f32.mrf.mxu0
    %v3705 = vadd.f32 0.0, %v3704
    %v3706 = vpop.f32.mrf.mxu0
    %v3707 = vpop.f32.mrf.mxu0
    %3708 = vdwg.mxu0
    %3709 = vmatprep.subr.bf16.mxu0 %v1151
    %3710 = vmatpush1.bf16.msra.mxu0 %v1150
    %3711 = vmatprep.subr.bf16.mxu0 %v1143
    %3712 = vmatpush1.bf16.msra.mxu0 %v1142
    %3713 = vmatprep.subr.bf16.mxu0 %v1135
    %3714 = vmatpush1.bf16.msra.mxu0 %v1134
    %3715 = vmatprep.subr.bf16.mxu0 %v1127
    %3716 = vmatpush1.bf16.msra.mxu0 %v1126
    %3717 = vmatprep.subr.bf16.mxu0 %v1119
    %3718 = vmatpush1.bf16.msra.mxu0 %v1118
    %3719 = vmatprep.subr.bf16.mxu0 %v1111
    %3720 = vmatpush1.bf16.msra.mxu0 %v1110
    %3721 = vmatprep.subr.bf16.mxu0 %v1103
    %3722 = vmatpush1.bf16.msra.mxu0 %v1102
    %3723 = vmatprep.subr.bf16.mxu0 %v1095
    %3724 = vmatpush1.bf16.msra.mxu0 %v1094
    %3725 = vmatprep.subr.bf16.mxu0 %v1215
    %3726 = vmatpush2.bf16.msra.mxu0 %v1214
    %3727 = vmatprep.subr.bf16.mxu0 %v1207
    %3728 = vmatpush2.bf16.msra.mxu0 %v1206
    %3729 = vmatprep.subr.bf16.mxu0 %v1199
    %3730 = vmatpush2.bf16.msra.mxu0 %v1198
    %3731 = vmatprep.subr.bf16.mxu0 %v1191
    %3732 = vmatpush2.bf16.msra.mxu0 %v1190
    %3733 = vmatprep.subr.bf16.mxu0 %v1183
    %3734 = vmatpush2.bf16.msra.mxu0 %v1182
    %3735 = vmatprep.subr.bf16.mxu0 %v1175
    %3736 = vmatpush2.bf16.msra.mxu0 %v1174
    %3737 = vmatprep.subr.bf16.mxu0 %v1167
    %3738 = vmatpush2.bf16.msra.mxu0 %v1166
    %3739 = vmatprep.subr.bf16.mxu0 %v1159
    %3740 = vmatpush2.bf16.msra.mxu0 %v1158
    %3741 = vmatprep.mubr.bf16.mxu0 %v3585
    %3742 = vmatmul.mubr.bf16.gmra.mxu0 %v3584
    %v3743 = vpop.f32.mrf.mxu0
    %v3744 = vadd.f32 0.0, %v3743
    %v3745 = vpop.f32.mrf.mxu0
    %v3746 = vadd.f32 0.0, %v3745
    %v3747 = vpop.f32.mrf.mxu0
    %v3748 = vpop.f32.mrf.mxu0
    %3749 = vdwg.mxu0
    %v3750 = vadd.f32 %v3092, %v3621
    %v3751 = vadd.f32 %v3093, %v3623
    %v3752 = vadd.f32 %v3094, %v3662
    %v3753 = vadd.f32 %v3095, %v3664
    %v3754 = vadd.f32 %v3096, %v3703
    %v3755 = vadd.f32 %v3097, %v3705
    %v3756 = vadd.f32 %v3098, %v3744
    %v3757 = vadd.f32 %v3099, %v3746
    %v3758 = vxor.u32 %v3750, 2147483648
    %v3759 = vxor.u32 %v3751, 2147483648
    %v3760 = vxor.u32 %v3752, 2147483648
    %v3761 = vxor.u32 %v3753, 2147483648
    %v3762 = vxor.u32 %v3754, 2147483648
    %v3763 = vxor.u32 %v3755, 2147483648
    %v3764 = vxor.u32 %v3756, 2147483648
    %v3765 = vxor.u32 %v3757, 2147483648
    %v3766 = vmul.f32 %v3758, 1.442695
    %v3767 = vpow.pop %v3766
    %v3768 = vmul.f32 %v3759, 1.442695
    %v3769 = vpow.pop %v3768
    %v3770 = vmul.f32 %v3760, 1.442695
    %v3771 = vpow.pop %v3770
    %v3772 = vmul.f32 %v3761, 1.442695
    %v3773 = vpow.pop %v3772
    %v3774 = vmul.f32 %v3762, 1.442695
    %v3775 = vpow.pop %v3774
    %v3776 = vmul.f32 %v3763, 1.442695
    %v3777 = vpow.pop %v3776
    %v3778 = vmul.f32 %v3764, 1.442695
    %v3779 = vpow.pop %v3778
    %v3780 = vmul.f32 %v3765, 1.442695
    %v3781 = vpow.pop %v3780
    %v3782 = vadd.f32 %v3767, 1.0
    %v3783 = vadd.f32 %v3769, 1.0
    %v3784 = vadd.f32 %v3771, 1.0
    %v3785 = vadd.f32 %v3773, 1.0
    %v3786 = vadd.f32 %v3775, 1.0
    %v3787 = vadd.f32 %v3777, 1.0
    %v3788 = vadd.f32 %v3779, 1.0
    %v3789 = vadd.f32 %v3781, 1.0
    %v3790 = vrcp.pop %v3782
    %v3791 = vmul.f32 1.0, %v3790
    %v3792 = vrcp.pop %v3783
    %v3793 = vmul.f32 1.0, %v3792
    %v3794 = vrcp.pop %v3784
    %v3795 = vmul.f32 1.0, %v3794
    %v3796 = vrcp.pop %v3785
    %v3797 = vmul.f32 1.0, %v3796
    %v3798 = vrcp.pop %v3786
    %v3799 = vmul.f32 1.0, %v3798
    %v3800 = vrcp.pop %v3787
    %v3801 = vmul.f32 1.0, %v3800
    %v3802 = vrcp.pop %v3788
    %v3803 = vmul.f32 1.0, %v3802
    %v3804 = vrcp.pop %v3789
    %v3805 = vmul.f32 1.0, %v3804
    %v3806 = vmul.f32 %v3799, 2.0
    %v3807 = vmul.f32 %v3801, 2.0
    %v3808 = vsub.f32 %v3806, 1.0
    %v3809 = vsub.f32 %v3807, 1.0
    %v3810 = vmul.f32 %v3795, %v3582
    %v3811 = vmul.f32 %v3797, %v3583
    %v3812 = vmul.f32 %v3791, %v3808
    %v3813 = vmul.f32 %v3793, %v3809
    %v3814 = vadd.f32 %v3810, %v3812
    %v3815 = vadd.f32 %v3811, %v3813
    %v3816 = vtanh.pop %v3814
    %v3817 = vtanh.pop %v3815
    %v3818 = vmul.f32 %v3803, %v3816
    %v3819 = vmul.f32 %v3805, %v3817
    %vm3820 = vcmp.ge.s32.totalorder %v560, 64
    %vm3821 = vcmp.ge.s32.totalorder %v561, 64
    %vm3822 = vmand %vm3820, %vm2588
    %vm3823 = vmand %vm3821, %vm2589
    %v3824 = vsel %vm3822, %v3818, %v3580
    %v3825 = vsel %vm3823, %v3819, %v3581
    %v3826 = vsel %vm3822, %v3814, %v3582
    %v3827 = vsel %vm3823, %v3815, %v3583
    %v3828 = vpack.c.bf16 %v3824, %v3824
    %v3829 = vpack.c.bf16 %v3825, %v3825
    %3830 = vmatprep.subr.bf16.mxu0 %v1145
    %3831 = vmatpush1.bf16.msra.mxu0 %v1144
    %3832 = vmatprep.subr.bf16.mxu0 %v1137
    %3833 = vmatpush1.bf16.msra.mxu0 %v1136
    %3834 = vmatprep.subr.bf16.mxu0 %v1129
    %3835 = vmatpush1.bf16.msra.mxu0 %v1128
    %3836 = vmatprep.subr.bf16.mxu0 %v1121
    %3837 = vmatpush1.bf16.msra.mxu0 %v1120
    %3838 = vmatprep.subr.bf16.mxu0 %v1113
    %3839 = vmatpush1.bf16.msra.mxu0 %v1112
    %3840 = vmatprep.subr.bf16.mxu0 %v1105
    %3841 = vmatpush1.bf16.msra.mxu0 %v1104
    %3842 = vmatprep.subr.bf16.mxu0 %v1097
    %3843 = vmatpush1.bf16.msra.mxu0 %v1096
    %3844 = vmatprep.subr.bf16.mxu0 %v1089
    %3845 = vmatpush1.bf16.msra.mxu0 %v1088
    %3846 = vmatprep.subr.bf16.mxu0 %v1209
    %3847 = vmatpush2.bf16.msra.mxu0 %v1208
    %3848 = vmatprep.subr.bf16.mxu0 %v1201
    %3849 = vmatpush2.bf16.msra.mxu0 %v1200
    %3850 = vmatprep.subr.bf16.mxu0 %v1193
    %3851 = vmatpush2.bf16.msra.mxu0 %v1192
    %3852 = vmatprep.subr.bf16.mxu0 %v1185
    %3853 = vmatpush2.bf16.msra.mxu0 %v1184
    %3854 = vmatprep.subr.bf16.mxu0 %v1177
    %3855 = vmatpush2.bf16.msra.mxu0 %v1176
    %3856 = vmatprep.subr.bf16.mxu0 %v1169
    %3857 = vmatpush2.bf16.msra.mxu0 %v1168
    %3858 = vmatprep.subr.bf16.mxu0 %v1161
    %3859 = vmatpush2.bf16.msra.mxu0 %v1160
    %3860 = vmatprep.subr.bf16.mxu0 %v1153
    %3861 = vmatpush2.bf16.msra.mxu0 %v1152
    %3862 = vmatprep.mubr.bf16.mxu0 %v3829
    %3863 = vmatmul.mubr.bf16.gmra.mxu0 %v3828
    %v3864 = vpop.f32.mrf.mxu0
    %v3865 = vadd.f32 0.0, %v3864
    %v3866 = vpop.f32.mrf.mxu0
    %v3867 = vadd.f32 0.0, %v3866
    %v3868 = vpop.f32.mrf.mxu0
    %v3869 = vpop.f32.mrf.mxu0
    %3870 = vdwg.mxu0
    %3871 = vmatprep.subr.bf16.mxu0 %v1147
    %3872 = vmatpush1.bf16.msra.mxu0 %v1146
    %3873 = vmatprep.subr.bf16.mxu0 %v1139
    %3874 = vmatpush1.bf16.msra.mxu0 %v1138
    %3875 = vmatprep.subr.bf16.mxu0 %v1131
    %3876 = vmatpush1.bf16.msra.mxu0 %v1130
    %3877 = vmatprep.subr.bf16.mxu0 %v1123
    %3878 = vmatpush1.bf16.msra.mxu0 %v1122
    %3879 = vmatprep.subr.bf16.mxu0 %v1115
    %3880 = vmatpush1.bf16.msra.mxu0 %v1114
    %3881 = vmatprep.subr.bf16.mxu0 %v1107
    %3882 = vmatpush1.bf16.msra.mxu0 %v1106
    %3883 = vmatprep.subr.bf16.mxu0 %v1099
    %3884 = vmatpush1.bf16.msra.mxu0 %v1098
    %3885 = vmatprep.subr.bf16.mxu0 %v1091
    %3886 = vmatpush1.bf16.msra.mxu0 %v1090
    %3887 = vmatprep.subr.bf16.mxu0 %v1211
    %3888 = vmatpush2.bf16.msra.mxu0 %v1210
    %3889 = vmatprep.subr.bf16.mxu0 %v1203
    %3890 = vmatpush2.bf16.msra.mxu0 %v1202
    %3891 = vmatprep.subr.bf16.mxu0 %v1195
    %3892 = vmatpush2.bf16.msra.mxu0 %v1194
    %3893 = vmatprep.subr.bf16.mxu0 %v1187
    %3894 = vmatpush2.bf16.msra.mxu0 %v1186
    %3895 = vmatprep.subr.bf16.mxu0 %v1179
    %3896 = vmatpush2.bf16.msra.mxu0 %v1178
    %3897 = vmatprep.subr.bf16.mxu0 %v1171
    %3898 = vmatpush2.bf16.msra.mxu0 %v1170
    %3899 = vmatprep.subr.bf16.mxu0 %v1163
    %3900 = vmatpush2.bf16.msra.mxu0 %v1162
    %3901 = vmatprep.subr.bf16.mxu0 %v1155
    %3902 = vmatpush2.bf16.msra.mxu0 %v1154
    %3903 = vmatprep.mubr.bf16.mxu0 %v3829
    %3904 = vmatmul.mubr.bf16.gmra.mxu0 %v3828
    %v3905 = vpop.f32.mrf.mxu0
    %v3906 = vadd.f32 0.0, %v3905
    %v3907 = vpop.f32.mrf.mxu0
    %v3908 = vadd.f32 0.0, %v3907
    %v3909 = vpop.f32.mrf.mxu0
    %v3910 = vpop.f32.mrf.mxu0
    %3911 = vdwg.mxu0
    %3912 = vmatprep.subr.bf16.mxu0 %v1149
    %3913 = vmatpush1.bf16.msra.mxu0 %v1148
    %3914 = vmatprep.subr.bf16.mxu0 %v1141
    %3915 = vmatpush1.bf16.msra.mxu0 %v1140
    %3916 = vmatprep.subr.bf16.mxu0 %v1133
    %3917 = vmatpush1.bf16.msra.mxu0 %v1132
    %3918 = vmatprep.subr.bf16.mxu0 %v1125
    %3919 = vmatpush1.bf16.msra.mxu0 %v1124
    %3920 = vmatprep.subr.bf16.mxu0 %v1117
    %3921 = vmatpush1.bf16.msra.mxu0 %v1116
    %3922 = vmatprep.subr.bf16.mxu0 %v1109
    %3923 = vmatpush1.bf16.msra.mxu0 %v1108
    %3924 = vmatprep.subr.bf16.mxu0 %v1101
    %3925 = vmatpush1.bf16.msra.mxu0 %v1100
    %3926 = vmatprep.subr.bf16.mxu0 %v1093
    %3927 = vmatpush1.bf16.msra.mxu0 %v1092
    %3928 = vmatprep.subr.bf16.mxu0 %v1213
    %3929 = vmatpush2.bf16.msra.mxu0 %v1212
    %3930 = vmatprep.subr.bf16.mxu0 %v1205
    %3931 = vmatpush2.bf16.msra.mxu0 %v1204
    %3932 = vmatprep.subr.bf16.mxu0 %v1197
    %3933 = vmatpush2.bf16.msra.mxu0 %v1196
    %3934 = vmatprep.subr.bf16.mxu0 %v1189
    %3935 = vmatpush2.bf16.msra.mxu0 %v1188
    %3936 = vmatprep.subr.bf16.mxu0 %v1181
    %3937 = vmatpush2.bf16.msra.mxu0 %v1180
    %3938 = vmatprep.subr.bf16.mxu0 %v1173
    %3939 = vmatpush2.bf16.msra.mxu0 %v1172
    %3940 = vmatprep.subr.bf16.mxu0 %v1165
    %3941 = vmatpush2.bf16.msra.mxu0 %v1164
    %3942 = vmatprep.subr.bf16.mxu0 %v1157
    %3943 = vmatpush2.bf16.msra.mxu0 %v1156
    %3944 = vmatprep.mubr.bf16.mxu0 %v3829
    %3945 = vmatmul.mubr.bf16.gmra.mxu0 %v3828
    %v3946 = vpop.f32.mrf.mxu0
    %v3947 = vadd.f32 0.0, %v3946
    %v3948 = vpop.f32.mrf.mxu0
    %v3949 = vadd.f32 0.0, %v3948
    %v3950 = vpop.f32.mrf.mxu0
    %v3951 = vpop.f32.mrf.mxu0
    %3952 = vdwg.mxu0
    %3953 = vmatprep.subr.bf16.mxu0 %v1151
    %3954 = vmatpush1.bf16.msra.mxu0 %v1150
    %3955 = vmatprep.subr.bf16.mxu0 %v1143
    %3956 = vmatpush1.bf16.msra.mxu0 %v1142
    %3957 = vmatprep.subr.bf16.mxu0 %v1135
    %3958 = vmatpush1.bf16.msra.mxu0 %v1134
    %3959 = vmatprep.subr.bf16.mxu0 %v1127
    %3960 = vmatpush1.bf16.msra.mxu0 %v1126
    %3961 = vmatprep.subr.bf16.mxu0 %v1119
    %3962 = vmatpush1.bf16.msra.mxu0 %v1118
    %3963 = vmatprep.subr.bf16.mxu0 %v1111
    %3964 = vmatpush1.bf16.msra.mxu0 %v1110
    %3965 = vmatprep.subr.bf16.mxu0 %v1103
    %3966 = vmatpush1.bf16.msra.mxu0 %v1102
    %3967 = vmatprep.subr.bf16.mxu0 %v1095
    %3968 = vmatpush1.bf16.msra.mxu0 %v1094
    %3969 = vmatprep.subr.bf16.mxu0 %v1215
    %3970 = vmatpush2.bf16.msra.mxu0 %v1214
    %3971 = vmatprep.subr.bf16.mxu0 %v1207
    %3972 = vmatpush2.bf16.msra.mxu0 %v1206
    %3973 = vmatprep.subr.bf16.mxu0 %v1199
    %3974 = vmatpush2.bf16.msra.mxu0 %v1198
    %3975 = vmatprep.subr.bf16.mxu0 %v1191
    %3976 = vmatpush2.bf16.msra.mxu0 %v1190
    %3977 = vmatprep.subr.bf16.mxu0 %v1183
    %3978 = vmatpush2.bf16.msra.mxu0 %v1182
    %3979 = vmatprep.subr.bf16.mxu0 %v1175
    %3980 = vmatpush2.bf16.msra.mxu0 %v1174
    %3981 = vmatprep.subr.bf16.mxu0 %v1167
    %3982 = vmatpush2.bf16.msra.mxu0 %v1166
    %3983 = vmatprep.subr.bf16.mxu0 %v1159
    %3984 = vmatpush2.bf16.msra.mxu0 %v1158
    %3985 = vmatprep.mubr.bf16.mxu0 %v3829
    %3986 = vmatmul.mubr.bf16.gmra.mxu0 %v3828
    %v3987 = vpop.f32.mrf.mxu0
    %v3988 = vadd.f32 0.0, %v3987
    %v3989 = vpop.f32.mrf.mxu0
    %v3990 = vadd.f32 0.0, %v3989
    %v3991 = vpop.f32.mrf.mxu0
    %v3992 = vpop.f32.mrf.mxu0
    %3993 = vdwg.mxu0
    %v3994 = vadd.f32 %v3092, %v3865
    %v3995 = vadd.f32 %v3093, %v3867
    %v3996 = vadd.f32 %v3094, %v3906
    %v3997 = vadd.f32 %v3095, %v3908
    %v3998 = vadd.f32 %v3096, %v3947
    %v3999 = vadd.f32 %v3097, %v3949
    %v4000 = vadd.f32 %v3098, %v3988
    %v4001 = vadd.f32 %v3099, %v3990
    %v4002 = vxor.u32 %v3994, 2147483648
    %v4003 = vxor.u32 %v3995, 2147483648
    %v4004 = vxor.u32 %v3996, 2147483648
    %v4005 = vxor.u32 %v3997, 2147483648
    %v4006 = vxor.u32 %v3998, 2147483648
    %v4007 = vxor.u32 %v3999, 2147483648
    %v4008 = vxor.u32 %v4000, 2147483648
    %v4009 = vxor.u32 %v4001, 2147483648
    %v4010 = vmul.f32 %v4002, 1.442695
    %v4011 = vpow.pop %v4010
    %v4012 = vmul.f32 %v4003, 1.442695
    %v4013 = vpow.pop %v4012
    %v4014 = vmul.f32 %v4004, 1.442695
    %v4015 = vpow.pop %v4014
    %v4016 = vmul.f32 %v4005, 1.442695
    %v4017 = vpow.pop %v4016
    %v4018 = vmul.f32 %v4006, 1.442695
    %v4019 = vpow.pop %v4018
    %v4020 = vmul.f32 %v4007, 1.442695
    %v4021 = vpow.pop %v4020
    %v4022 = vmul.f32 %v4008, 1.442695
    %v4023 = vpow.pop %v4022
    %v4024 = vmul.f32 %v4009, 1.442695
    %v4025 = vpow.pop %v4024
    %v4026 = vadd.f32 %v4011, 1.0
    %v4027 = vadd.f32 %v4013, 1.0
    %v4028 = vadd.f32 %v4015, 1.0
    %v4029 = vadd.f32 %v4017, 1.0
    %v4030 = vadd.f32 %v4019, 1.0
    %v4031 = vadd.f32 %v4021, 1.0
    %v4032 = vadd.f32 %v4023, 1.0
    %v4033 = vadd.f32 %v4025, 1.0
    %v4034 = vrcp.pop %v4026
    %v4035 = vmul.f32 1.0, %v4034
    %v4036 = vrcp.pop %v4027
    %v4037 = vmul.f32 1.0, %v4036
    %v4038 = vrcp.pop %v4028
    %v4039 = vmul.f32 1.0, %v4038
    %v4040 = vrcp.pop %v4029
    %v4041 = vmul.f32 1.0, %v4040
    %v4042 = vrcp.pop %v4030
    %v4043 = vmul.f32 1.0, %v4042
    %v4044 = vrcp.pop %v4031
    %v4045 = vmul.f32 1.0, %v4044
    %v4046 = vrcp.pop %v4032
    %v4047 = vmul.f32 1.0, %v4046
    %v4048 = vrcp.pop %v4033
    %v4049 = vmul.f32 1.0, %v4048
    %v4050 = vmul.f32 %v4043, 2.0
    %v4051 = vmul.f32 %v4045, 2.0
    %v4052 = vsub.f32 %v4050, 1.0
    %v4053 = vsub.f32 %v4051, 1.0
    %v4054 = vmul.f32 %v4039, %v3826
    %v4055 = vmul.f32 %v4041, %v3827
    %v4056 = vmul.f32 %v4035, %v4052
    %v4057 = vmul.f32 %v4037, %v4053
    %v4058 = vadd.f32 %v4054, %v4056
    %v4059 = vadd.f32 %v4055, %v4057
    %v4060 = vtanh.pop %v4058
    %v4061 = vtanh.pop %v4059
    %v4062 = vmul.f32 %v4047, %v4060
    %v4063 = vmul.f32 %v4049, %v4061
    %vm4064 = vcmp.ge.s32.totalorder %v560, 96
    %vm4065 = vcmp.ge.s32.totalorder %v561, 96
    %vm4066 = vmand %vm4064, %vm2588
    %vm4067 = vmand %vm4065, %vm2589
    %v4068 = vsel %vm4066, %v4062, %v3824
    %v4069 = vsel %vm4067, %v4063, %v3825
    %v4070 = vsel %vm4066, %v4058, %v3826
    %v4071 = vsel %vm4067, %v4059, %v3827
    %v4072 = vpack.c.bf16 %v4068, %v4068
    %v4073 = vpack.c.bf16 %v4069, %v4069
    %4074 = vmatprep.subr.bf16.mxu0 %v1145
    %4075 = vmatpush1.bf16.msra.mxu0 %v1144
    %4076 = vmatprep.subr.bf16.mxu0 %v1137
    %4077 = vmatpush1.bf16.msra.mxu0 %v1136
    %4078 = vmatprep.subr.bf16.mxu0 %v1129
    %4079 = vmatpush1.bf16.msra.mxu0 %v1128
    %4080 = vmatprep.subr.bf16.mxu0 %v1121
    %4081 = vmatpush1.bf16.msra.mxu0 %v1120
    %4082 = vmatprep.subr.bf16.mxu0 %v1113
    %4083 = vmatpush1.bf16.msra.mxu0 %v1112
    %4084 = vmatprep.subr.bf16.mxu0 %v1105
    %4085 = vmatpush1.bf16.msra.mxu0 %v1104
    %4086 = vmatprep.subr.bf16.mxu0 %v1097
    %4087 = vmatpush1.bf16.msra.mxu0 %v1096
    %4088 = vmatprep.subr.bf16.mxu0 %v1089
    %4089 = vmatpush1.bf16.msra.mxu0 %v1088
    %4090 = vmatprep.subr.bf16.mxu0 %v1209
    %4091 = vmatpush2.bf16.msra.mxu0 %v1208
    %4092 = vmatprep.subr.bf16.mxu0 %v1201
    %4093 = vmatpush2.bf16.msra.mxu0 %v1200
    %4094 = vmatprep.subr.bf16.mxu0 %v1193
    %4095 = vmatpush2.bf16.msra.mxu0 %v1192
    %4096 = vmatprep.subr.bf16.mxu0 %v1185
    %4097 = vmatpush2.bf16.msra.mxu0 %v1184
    %4098 = vmatprep.subr.bf16.mxu0 %v1177
    %4099 = vmatpush2.bf16.msra.mxu0 %v1176
    %4100 = vmatprep.subr.bf16.mxu0 %v1169
    %4101 = vmatpush2.bf16.msra.mxu0 %v1168
    %4102 = vmatprep.subr.bf16.mxu0 %v1161
    %4103 = vmatpush2.bf16.msra.mxu0 %v1160
    %4104 = vmatprep.subr.bf16.mxu0 %v1153
    %4105 = vmatpush2.bf16.msra.mxu0 %v1152
    %4106 = vmatprep.mubr.bf16.mxu0 %v4073
    %4107 = vmatmul.mubr.bf16.gmra.mxu0 %v4072
    %v4108 = vpop.f32.mrf.mxu0
    %v4109 = vadd.f32 0.0, %v4108
    %v4110 = vpop.f32.mrf.mxu0
    %v4111 = vadd.f32 0.0, %v4110
    %v4112 = vpop.f32.mrf.mxu0
    %v4113 = vpop.f32.mrf.mxu0
    %4114 = vdwg.mxu0
    %4115 = vmatprep.subr.bf16.mxu0 %v1147
    %4116 = vmatpush1.bf16.msra.mxu0 %v1146
    %4117 = vmatprep.subr.bf16.mxu0 %v1139
    %4118 = vmatpush1.bf16.msra.mxu0 %v1138
    %4119 = vmatprep.subr.bf16.mxu0 %v1131
    %4120 = vmatpush1.bf16.msra.mxu0 %v1130
    %4121 = vmatprep.subr.bf16.mxu0 %v1123
    %4122 = vmatpush1.bf16.msra.mxu0 %v1122
    %4123 = vmatprep.subr.bf16.mxu0 %v1115
    %4124 = vmatpush1.bf16.msra.mxu0 %v1114
    %4125 = vmatprep.subr.bf16.mxu0 %v1107
    %4126 = vmatpush1.bf16.msra.mxu0 %v1106
    %4127 = vmatprep.subr.bf16.mxu0 %v1099
    %4128 = vmatpush1.bf16.msra.mxu0 %v1098
    %4129 = vmatprep.subr.bf16.mxu0 %v1091
    %4130 = vmatpush1.bf16.msra.mxu0 %v1090
    %4131 = vmatprep.subr.bf16.mxu0 %v1211
    %4132 = vmatpush2.bf16.msra.mxu0 %v1210
    %4133 = vmatprep.subr.bf16.mxu0 %v1203
    %4134 = vmatpush2.bf16.msra.mxu0 %v1202
    %4135 = vmatprep.subr.bf16.mxu0 %v1195
    %4136 = vmatpush2.bf16.msra.mxu0 %v1194
    %4137 = vmatprep.subr.bf16.mxu0 %v1187
    %4138 = vmatpush2.bf16.msra.mxu0 %v1186
    %4139 = vmatprep.subr.bf16.mxu0 %v1179
    %4140 = vmatpush2.bf16.msra.mxu0 %v1178
    %4141 = vmatprep.subr.bf16.mxu0 %v1171
    %4142 = vmatpush2.bf16.msra.mxu0 %v1170
    %4143 = vmatprep.subr.bf16.mxu0 %v1163
    %4144 = vmatpush2.bf16.msra.mxu0 %v1162
    %4145 = vmatprep.subr.bf16.mxu0 %v1155
    %4146 = vmatpush2.bf16.msra.mxu0 %v1154
    %4147 = vmatprep.mubr.bf16.mxu0 %v4073
    %4148 = vmatmul.mubr.bf16.gmra.mxu0 %v4072
    %v4149 = vpop.f32.mrf.mxu0
    %v4150 = vadd.f32 0.0, %v4149
    %v4151 = vpop.f32.mrf.mxu0
    %v4152 = vadd.f32 0.0, %v4151
    %v4153 = vpop.f32.mrf.mxu0
    %v4154 = vpop.f32.mrf.mxu0
    %4155 = vdwg.mxu0
    %4156 = vmatprep.subr.bf16.mxu0 %v1149
    %4157 = vmatpush1.bf16.msra.mxu0 %v1148
    %4158 = vmatprep.subr.bf16.mxu0 %v1141
    %4159 = vmatpush1.bf16.msra.mxu0 %v1140
    %4160 = vmatprep.subr.bf16.mxu0 %v1133
    %4161 = vmatpush1.bf16.msra.mxu0 %v1132
    %4162 = vmatprep.subr.bf16.mxu0 %v1125
    %4163 = vmatpush1.bf16.msra.mxu0 %v1124
    %4164 = vmatprep.subr.bf16.mxu0 %v1117
    %4165 = vmatpush1.bf16.msra.mxu0 %v1116
    %4166 = vmatprep.subr.bf16.mxu0 %v1109
    %4167 = vmatpush1.bf16.msra.mxu0 %v1108
    %4168 = vmatprep.subr.bf16.mxu0 %v1101
    %4169 = vmatpush1.bf16.msra.mxu0 %v1100
    %4170 = vmatprep.subr.bf16.mxu0 %v1093
    %4171 = vmatpush1.bf16.msra.mxu0 %v1092
    %4172 = vmatprep.subr.bf16.mxu0 %v1213
    %4173 = vmatpush2.bf16.msra.mxu0 %v1212
    %4174 = vmatprep.subr.bf16.mxu0 %v1205
    %4175 = vmatpush2.bf16.msra.mxu0 %v1204
    %4176 = vmatprep.subr.bf16.mxu0 %v1197
    %4177 = vmatpush2.bf16.msra.mxu0 %v1196
    %4178 = vmatprep.subr.bf16.mxu0 %v1189
    %4179 = vmatpush2.bf16.msra.mxu0 %v1188
    %4180 = vmatprep.subr.bf16.mxu0 %v1181
    %4181 = vmatpush2.bf16.msra.mxu0 %v1180
    %4182 = vmatprep.subr.bf16.mxu0 %v1173
    %4183 = vmatpush2.bf16.msra.mxu0 %v1172
    %4184 = vmatprep.subr.bf16.mxu0 %v1165
    %4185 = vmatpush2.bf16.msra.mxu0 %v1164
    %4186 = vmatprep.subr.bf16.mxu0 %v1157
    %4187 = vmatpush2.bf16.msra.mxu0 %v1156
    %4188 = vmatprep.mubr.bf16.mxu0 %v4073
    %4189 = vmatmul.mubr.bf16.gmra.mxu0 %v4072
    %v4190 = vpop.f32.mrf.mxu0
    %v4191 = vadd.f32 0.0, %v4190
    %v4192 = vpop.f32.mrf.mxu0
    %v4193 = vadd.f32 0.0, %v4192
    %v4194 = vpop.f32.mrf.mxu0
    %v4195 = vpop.f32.mrf.mxu0
    %4196 = vdwg.mxu0
    %4197 = vmatprep.subr.bf16.mxu0 %v1151
    %4198 = vmatpush1.bf16.msra.mxu0 %v1150
    %4199 = vmatprep.subr.bf16.mxu0 %v1143
    %4200 = vmatpush1.bf16.msra.mxu0 %v1142
    %4201 = vmatprep.subr.bf16.mxu0 %v1135
    %4202 = vmatpush1.bf16.msra.mxu0 %v1134
    %4203 = vmatprep.subr.bf16.mxu0 %v1127
    %4204 = vmatpush1.bf16.msra.mxu0 %v1126
    %4205 = vmatprep.subr.bf16.mxu0 %v1119
    %4206 = vmatpush1.bf16.msra.mxu0 %v1118
    %4207 = vmatprep.subr.bf16.mxu0 %v1111
    %4208 = vmatpush1.bf16.msra.mxu0 %v1110
    %4209 = vmatprep.subr.bf16.mxu0 %v1103
    %4210 = vmatpush1.bf16.msra.mxu0 %v1102
    %4211 = vmatprep.subr.bf16.mxu0 %v1095
    %4212 = vmatpush1.bf16.msra.mxu0 %v1094
    %4213 = vmatprep.subr.bf16.mxu0 %v1215
    %4214 = vmatpush2.bf16.msra.mxu0 %v1214
    %4215 = vmatprep.subr.bf16.mxu0 %v1207
    %4216 = vmatpush2.bf16.msra.mxu0 %v1206
    %4217 = vmatprep.subr.bf16.mxu0 %v1199
    %4218 = vmatpush2.bf16.msra.mxu0 %v1198
    %4219 = vmatprep.subr.bf16.mxu0 %v1191
    %4220 = vmatpush2.bf16.msra.mxu0 %v1190
    %4221 = vmatprep.subr.bf16.mxu0 %v1183
    %4222 = vmatpush2.bf16.msra.mxu0 %v1182
    %4223 = vmatprep.subr.bf16.mxu0 %v1175
    %4224 = vmatpush2.bf16.msra.mxu0 %v1174
    %4225 = vmatprep.subr.bf16.mxu0 %v1167
    %4226 = vmatpush2.bf16.msra.mxu0 %v1166
    %4227 = vmatprep.subr.bf16.mxu0 %v1159
    %4228 = vmatpush2.bf16.msra.mxu0 %v1158
    %4229 = vmatprep.mubr.bf16.mxu0 %v4073
    %4230 = vmatmul.mubr.bf16.gmra.mxu0 %v4072
    %v4231 = vpop.f32.mrf.mxu0
    %v4232 = vadd.f32 0.0, %v4231
    %v4233 = vpop.f32.mrf.mxu0
    %v4234 = vadd.f32 0.0, %v4233
    %v4235 = vpop.f32.mrf.mxu0
    %v4236 = vpop.f32.mrf.mxu0
    %4237 = vdwg.mxu0
    %v4238 = vadd.f32 %v3092, %v4109
    %v4239 = vadd.f32 %v3093, %v4111
    %v4240 = vadd.f32 %v3094, %v4150
    %v4241 = vadd.f32 %v3095, %v4152
    %v4242 = vadd.f32 %v3096, %v4191
    %v4243 = vadd.f32 %v3097, %v4193
    %v4244 = vadd.f32 %v3098, %v4232
    %v4245 = vadd.f32 %v3099, %v4234
    %v4246 = vxor.u32 %v4238, 2147483648
    %v4247 = vxor.u32 %v4239, 2147483648
    %v4248 = vxor.u32 %v4240, 2147483648
    %v4249 = vxor.u32 %v4241, 2147483648
    %v4250 = vxor.u32 %v4242, 2147483648
    %v4251 = vxor.u32 %v4243, 2147483648
    %v4252 = vxor.u32 %v4244, 2147483648
    %v4253 = vxor.u32 %v4245, 2147483648
    %v4254 = vmul.f32 %v4246, 1.442695
    %v4255 = vpow.pop %v4254
    %v4256 = vmul.f32 %v4247, 1.442695
    %v4257 = vpow.pop %v4256
    %v4258 = vmul.f32 %v4248, 1.442695
    %v4259 = vpow.pop %v4258
    %v4260 = vmul.f32 %v4249, 1.442695
    %v4261 = vpow.pop %v4260
    %v4262 = vmul.f32 %v4250, 1.442695
    %v4263 = vpow.pop %v4262
    %v4264 = vmul.f32 %v4251, 1.442695
    %v4265 = vpow.pop %v4264
    %v4266 = vmul.f32 %v4252, 1.442695
    %v4267 = vpow.pop %v4266
    %v4268 = vmul.f32 %v4253, 1.442695
    %v4269 = vpow.pop %v4268
    %v4270 = vadd.f32 %v4255, 1.0
    %v4271 = vadd.f32 %v4257, 1.0
    %v4272 = vadd.f32 %v4259, 1.0
    %v4273 = vadd.f32 %v4261, 1.0
    %v4274 = vadd.f32 %v4263, 1.0
    %v4275 = vadd.f32 %v4265, 1.0
    %v4276 = vadd.f32 %v4267, 1.0
    %v4277 = vadd.f32 %v4269, 1.0
    %v4278 = vrcp.pop %v4270
    %v4279 = vmul.f32 1.0, %v4278
    %v4280 = vrcp.pop %v4271
    %v4281 = vmul.f32 1.0, %v4280
    %v4282 = vrcp.pop %v4272
    %v4283 = vmul.f32 1.0, %v4282
    %v4284 = vrcp.pop %v4273
    %v4285 = vmul.f32 1.0, %v4284
    %v4286 = vrcp.pop %v4274
    %v4287 = vmul.f32 1.0, %v4286
    %v4288 = vrcp.pop %v4275
    %v4289 = vmul.f32 1.0, %v4288
    %v4290 = vrcp.pop %v4276
    %v4291 = vmul.f32 1.0, %v4290
    %v4292 = vrcp.pop %v4277
    %v4293 = vmul.f32 1.0, %v4292
    %v4294 = vmul.f32 %v4287, 2.0
    %v4295 = vmul.f32 %v4289, 2.0
    %v4296 = vsub.f32 %v4294, 1.0
    %v4297 = vsub.f32 %v4295, 1.0
    %v4298 = vmul.f32 %v4283, %v4070
    %v4299 = vmul.f32 %v4285, %v4071
    %v4300 = vmul.f32 %v4279, %v4296
    %v4301 = vmul.f32 %v4281, %v4297
    %v4302 = vadd.f32 %v4298, %v4300
    %v4303 = vadd.f32 %v4299, %v4301
    %v4304 = vtanh.pop %v4302
    %v4305 = vtanh.pop %v4303
    %v4306 = vmul.f32 %v4291, %v4304
    %v4307 = vmul.f32 %v4293, %v4305
    %vm4308 = vcmp.ge.s32.totalorder %v560, 128
    %vm4309 = vcmp.ge.s32.totalorder %v561, 128
    %vm4310 = vmand %vm4308, %vm2588
    %vm4311 = vmand %vm4309, %vm2589
    %v4312 = vsel %vm4310, %v4306, %v4068
    %v4313 = vsel %vm4311, %v4307, %v4069
    %v4314 = vsel %vm4310, %v4302, %v4070
    %v4315 = vsel %vm4311, %v4303, %v4071
    %4316 = vst [vmem:[#allocation10] sm:$0xff] %v4312
    %4317 = vst [vmem:[#allocation10 + $0x8] sm:$0xff] %v4313
    %4318 = vst [vmem:[#allocation12] sm:$0xff] %v4314
    %4319 = vst [vmem:[#allocation12 + $0x8] sm:$0xff] %v4315
    %v4320 = vld [vmem:[%s6] sm:$0xff]
    %v4321 = vld [vmem:[%s6 + $0x8] sm:$0xff]
    %v4322 = vld [vmem:[%s6 + $0x10] sm:$0xff]
    %v4323 = vld [vmem:[%s6 + $0x18] sm:$0xff]
    %v4324 = vld [vmem:[%s7] sm:$0x1]
    %v4326 = vlaneseq
    %v4327 = vshrl.u32 %v4326, 7
    %v4328 = vsub.s32 0, %v4327
    %v4329 = vrot.slane %v4324, %v4328
    %vm4331 = vcmask 261120
    %v4333 = vsel %vm4331, %v4313, 0
    %4335 = vmatprep.subr.mxu0 0.0
    %4336 = vmatpush1.msra.mxu0 0.0
    %4337 = vmatprep.subr.mxu0 0.0
    %4338 = vmatpush1.msra.mxu0 0.0
    %4339 = vmatprep.subr.mxu0 0.0
    %4340 = vmatpush1.msra.mxu0 0.0
    %4341 = vmatprep.subr.mxu0 0.0
    %4342 = vmatpush1.msra.mxu0 0.0
    %4343 = vmatprep.subr.mxu0 0.0
    %4344 = vmatpush1.msra.mxu0 0.0
    %4345 = vmatprep.subr.mxu0 0.0
    %4346 = vmatpush1.msra.mxu0 0.0
    %4347 = vmatprep.subr.mxu0 0.0
    %4348 = vmatpush1.msra.mxu0 0.0
    %4349 = vmatprep.subr.mxu0 0.0
    %4350 = vmatpush1.msra.mxu0 0.0
    %4351 = vmatprep.subr.mxu0 0.0
    %4352 = vmatpush1.msra.mxu0 0.0
    %4353 = vmatprep.subr.mxu0 0.0
    %4354 = vmatpush1.msra.mxu0 0.0
    %4355 = vmatprep.subr.mxu0 0.0
    %4356 = vmatpush1.msra.mxu0 0.0
    %4357 = vmatprep.subr.mxu0 0.0
    %4358 = vmatpush1.msra.mxu0 0.0
    %4359 = vmatprep.subr.mxu0 0.0
    %4360 = vmatpush1.msra.mxu0 %v4323
    %4361 = vmatprep.subr.mxu0 0.0
    %4362 = vmatpush1.msra.mxu0 %v4322
    %4363 = vmatprep.subr.mxu0 0.0
    %4364 = vmatpush1.msra.mxu0 %v4321
    %4365 = vmatprep.subr.mxu0 0.0
    %4366 = vmatpush1.msra.mxu0 %v4320
    %4367 = vmatprep.subr.mxu0 0.0
    %4368 = vmatpush2.msra.mxu0 0.0
    %4369 = vmatprep.subr.mxu0 0.0
    %4370 = vmatpush2.msra.mxu0 0.0
    %4371 = vmatprep.subr.mxu0 0.0
    %4372 = vmatpush2.msra.mxu0 0.0
    %4373 = vmatprep.subr.mxu0 0.0
    %4374 = vmatpush2.msra.mxu0 0.0
    %4375 = vmatprep.subr.mxu0 0.0
    %4376 = vmatpush2.msra.mxu0 0.0
    %4377 = vmatprep.subr.mxu0 0.0
    %4378 = vmatpush2.msra.mxu0 0.0
    %4379 = vmatprep.subr.mxu0 0.0
    %4380 = vmatpush2.msra.mxu0 0.0
    %4381 = vmatprep.subr.mxu0 0.0
    %4382 = vmatpush2.msra.mxu0 0.0
    %4383 = vmatprep.subr.mxu0 0.0
    %4384 = vmatpush2.msra.mxu0 0.0
    %4385 = vmatprep.subr.mxu0 0.0
    %4386 = vmatpush2.msra.mxu0 0.0
    %4387 = vmatprep.subr.mxu0 0.0
    %4388 = vmatpush2.msra.mxu0 0.0
    %4389 = vmatprep.subr.mxu0 0.0
    %4390 = vmatpush2.msra.mxu0 0.0
    %4391 = vmatprep.subr.mxu0 0.0
    %4392 = vmatpush2.msra.mxu0 0.0
    %4393 = vmatprep.subr.mxu0 0.0
    %4394 = vmatpush2.msra.mxu0 0.0
    %4395 = vmatprep.subr.mxu0 0.0
    %4396 = vmatpush2.msra.mxu0 0.0
    %4397 = vmatprep.subr.mxu0 0.0
    %4398 = vmatpush2.msra.mxu0 0.0
    %4399 = vmatprep.mubr.f32.mxu0 0.0
    %4400 = vmatmul.mubr.f32.gmra.mxu0 %v4333
    %v4401 = vpop.f32.mrf.mxu0
    %v4402 = vadd.f32 %v4329, %v4401
    %v4403 = vpop.f32.mrf.mxu0
    %4404 = vdwg.mxu0
    %4405 = vst.msk [vmem:[#allocation9] sm:$0xff] %vm190, %v4402
    // Predicated region
    $region46: #{tpu_custom_call.1} parent=1 // pred_check
      _
    $region47: #{tpu_custom_call.1} parent=1 // pred_check_branch
      %4407 = sbr.rel (0) target = $region49
    $region48: #{tpu_custom_call.1} parent=1 // pred_region
      %s4409 = ssub.s32 128, 128
      %4410 = vsyncadd [#allocation5], %s4409
      %s4412 = sshll.u32 [#allocation9], 4
      %s4413 = int_to_ptr.vmem [resolvable:$true] %s4412
      %4415 = dma.vmem_to_hbm [thread:$0]  %s4413, 128, %s8, [#allocation5]
    $region49: #{tpu_custom_call.1} parent=1 // pred_fallthru
      _
    // Predicated region
    $region50: #{tpu_custom_call.1} parent=1 // pred_check
      _
    $region51: #{tpu_custom_call.1} parent=1 // pred_check_branch
      %4417 = sbr.rel (0) target = $region53
    $region52: #{tpu_custom_call.1} parent=1 // pred_region
      %s4419 = ssub.s32 256, 256
      %4420 = vsyncadd [#allocation11], %s4419
      %s4422 = sshll.u32 [#allocation10], 4
      %s4423 = int_to_ptr.vmem [resolvable:$true] %s4422
      %4425 = dma.vmem_to_hbm [thread:$0]  %s4423, 256, %s9, [#allocation11]
    $region53: #{tpu_custom_call.1} parent=1 // pred_fallthru
      _
    // Predicated region
    $region54: #{tpu_custom_call.1} parent=1 // pred_check
      _
    $region55: #{tpu_custom_call.1} parent=1 // pred_check_branch
      %4427 = sbr.rel (0) target = $region57
    $region56: #{tpu_custom_call.1} parent=1 // pred_region
      %s4429 = ssub.s32 256, 256
      %4430 = vsyncadd [#allocation11], %s4429
      %s4432 = sshll.u32 [#allocation12], 4
      %s4433 = int_to_ptr.vmem [resolvable:$true] %s4432
      %4435 = dma.vmem_to_hbm [thread:$0]  %s4433, 256, %s10, [#allocation11]
    $region57: #{tpu_custom_call.1} parent=1 // pred_fallthru
      _
    // Predicated region
    $region58: #{tpu_custom_call.1} parent=1 // pred_check
      _
    $region59: #{tpu_custom_call.1} parent=1 // pred_check_branch
      %4437 = sbr.rel (0) target = $region61
    $region60: #{tpu_custom_call.1} parent=1 // pred_region
      %4438 = dma.done [#allocation5], 128
    $region61: #{tpu_custom_call.1} parent=1 // pred_fallthru
      _
    // Predicated region
    $region62: #{tpu_custom_call.1} parent=1 // pred_check
      _
    $region63: #{tpu_custom_call.1} parent=1 // pred_check_branch
      %4440 = sbr.rel (0) target = $region65
    $region64: #{tpu_custom_call.1} parent=1 // pred_region
      %4441 = dma.done [#allocation11], 256
    $region65: #{tpu_custom_call.1} parent=1 // pred_fallthru
      _
    // Predicated region
    $region66: #{tpu_custom_call.1} parent=1 // pred_check
      _
    $region67: #{tpu_custom_call.1} parent=1 // pred_check_branch
      %4443 = sbr.rel (0) target = $region69
    $region68: #{tpu_custom_call.1} parent=1 // pred_region
      %4444 = dma.done [#allocation11], 256
    $region69: #{tpu_custom_call.1} parent=1 // pred_fallthru
      _
    %4445 = vsyncpa [#allocation4], 1
    %4446 = vsyncpa [#allocation7], 1
    %4447 = vsyncpa [#allocation5], 1
    %4448 = vsyncpa [#allocation11], 1

</llo_original>
